<compile_context>
chip_gen: v7x
topology: tpu7x:2x2x1
jax: 0.10.0
libtpu: 0.0.40
codegen_flags: <defaults>
</compile_context>

<pallas_src>
import functools

import jax
import jax.numpy as jnp
from jax.experimental import pallas as pl
from jax.experimental.pallas import tpu as pltpu


def _basic_block_kernel(x_ref, w1_ref, b1_ref, w2_ref, b2_ref, o_ref,
                        xpad_ref, apad_ref, *, D, HWC):
    """Fused BasicBlock forward for one batch element.

    x_ref   : (1, D, HWC)    f32   input (channels-last, H/W/C merged on lanes)
    w1_ref  : (3, HWC, HWC)  bf16  banded conv1 weight (BN1 scale folded in)
    b1_ref  : (1, HWC)       f32   folded BN1 bias (tiled over H*W)
    w2_ref  : (3, HWC, HWC)  bf16  banded conv2 weight (BN2 scale folded in)
    b2_ref  : (1, HWC)       f32   folded BN2 bias (tiled over H*W)
    o_ref   : (1, D, HWC)    f32   output (lane-dense)
    xpad_ref: (D+2, HWC)     bf16  VMEM scratch: depth-zero-padded input
    apad_ref: (D+2, HWC)     bf16  VMEM scratch: depth-zero-padded intermediate
    """
    # Only the two depth-halo rows need zeros (h/w padding lives inside the
    # banded weights).  Written every step: megacore-safe and only 4 small
    # lane-dense stores per step (vs. two full-volume scratch fills before).
    halo = jnp.zeros((1, HWC), xpad_ref.dtype)
    xpad_ref[pl.ds(0, 1), :] = halo
    xpad_ref[pl.ds(D + 1, 1), :] = halo
    apad_ref[pl.ds(0, 1), :] = halo
    apad_ref[pl.ds(D + 1, 1), :] = halo

    x = x_ref[0]                                       # (D, HWC) f32 residual
    xpad_ref[pl.ds(1, D), :] = x.astype(xpad_ref.dtype)

    def conv(pad_ref, w_ref):
        # 3 banded matmuls (one per kd tap); LHS is a contiguous sublane
        # window, K = output width = HWC on the MXU, f32 accumulation held in
        # vregs (the accumulator is only D x HWC f32 -> a handful of vregs).
        acc = jnp.zeros((D, HWC), jnp.float32)
        for kd in range(3):
            acc = acc + jnp.dot(pad_ref[pl.ds(kd, D), :], w_ref[kd],
                                preferred_element_type=jnp.float32)
        return acc

    # conv1 + bn1 (scale folded into w1, bias added here) + ReLU.
    a1 = jnp.maximum(conv(xpad_ref, w1_ref) + b1_ref[...], 0.0)

    # Intermediate stays in VMEM (no HBM round trip), re-padded for conv2.
    apad_ref[pl.ds(1, D), :] = a1.astype(apad_ref.dtype)

    # conv2 + bn2 + attn(=identity) + residual add + final ReLU.
    out = jnp.maximum(conv(apad_ref, w2_ref) + b2_ref[...] + x, 0.0)
    o_ref[0] = out.astype(o_ref.dtype)


def _banded_weight(w, scale, H, W, dtype=jnp.bfloat16):
    """(Cout, Cin, 3, 3, 3) conv weight -> (3, H*W*Cin, H*W*Cout) banded matrices.

    big[kd, hi*W*Cin + wi*Cin + ci, ho*W*Cout + wo*Cout + co] =
        scale[co] * w[co, ci, kd, hi-ho+1, wi-wo+1]   when |hi-ho|<=1, |wi-wo|<=1
        0                                             otherwise
    i.e. the kh/kw taps, the h/w output positions and the h/w zero padding are
    folded into one (H*W*Cin, H*W*Cout) matrix per kd tap, so each MXU call has
    K = H*W*Cin and a lane-dense output of width H*W*Cout.
    """
    Cout, Cin = w.shape[0], w.shape[1]
    wf = w * scale[:, None, None, None, None]                 # fold BN scale
    wr = jnp.transpose(wf, (2, 3, 4, 1, 0))                   # (kd,kh,kw,Cin,Cout)

    # Shift matrices: sh[kh, hi, ho] = 1 iff hi == ho + kh - 1 (in range).
    kk = jnp.arange(3)[:, None, None]
    hh = jnp.arange(H)
    sh = (hh[None, :, None] == hh[None, None, :] + kk - 1).astype(jnp.float32)
    ww = jnp.arange(W)
    sw = (ww[None, :, None] == ww[None, None, :] + kk - 1).astype(jnp.float32)

    big = jnp.einsum('aij,buv,tabce->tiucjve', sh, sw, wr)     # (3,H,W,Ci,H,W,Co)
    return big.reshape(3, H * W * Cin, H * W * Cout).astype(dtype)


def basic_block_forward(x_ncdhw, p, eps=1e-5):
    """BasicBlock.forward, non-tuple path (stride=1, no downsample, attn=id):
       relu(bn2(conv2(relu(bn1(conv1(x))))) + x)."""
    N, C, D, H, W = x_ncdhw.shape
    HWC = H * W * C
    # NCDHW -> (N, D, H*W*C): channels last, H/W/C merged on the lane axis
    # (lane-dense: HWC is a multiple of 128 at the shapes used here).
    x = jnp.transpose(x_ncdhw, (0, 2, 3, 4, 1)).reshape(N, D, HWC)

    s1 = p['g1'] / jnp.sqrt(p['v1'] + eps)
    s2 = p['g2'] / jnp.sqrt(p['v2'] + eps)
    w1 = _banded_weight(p['w1'], s1, H, W)              # BN1 scale folded in
    w2 = _banded_weight(p['w2'], s2, H, W)              # BN2 scale folded in
    b1 = jnp.tile(p['b1'] - p['m1'] * s1, H * W).reshape(1, HWC).astype(jnp.float32)
    b2 = jnp.tile(p['b2'] - p['m2'] * s2, H * W).reshape(1, HWC).astype(jnp.float32)

    kernel = functools.partial(_basic_block_kernel, D=D, HWC=HWC)

    cost = pl.CostEstimate(
        flops=2 * 3 * 2 * N * D * HWC * HWC,            # 2 convs x 3 banded matmuls
        transcendentals=0,
        bytes_accessed=2 * N * D * HWC * 4 + 2 * 3 * HWC * HWC * 2 + 2 * HWC * 4,
    )

    # Explicit VMEM budget (double-buffered operands + scratches) with headroom;
    # never below the 32 MiB default so small shapes compile exactly as before.
    est_vmem = (2 * (2 * 3 * HWC * HWC * 2)             # w1, w2 (bf16, 2 buffers)
                + 2 * (2 * D * HWC * 4)                 # x / out blocks (f32, 2 buffers)
                + 2 * (2 * HWC * 4)                     # b1, b2
                + 2 * ((D + 2) * HWC * 2))              # scratches (bf16)
    vmem_limit = max(2 * est_vmem, 32 * 1024 * 1024)

    out = pl.pallas_call(
        kernel,
        grid=(N,),
        in_specs=[
            pl.BlockSpec((1, D, HWC), lambda n: (n, 0, 0)),
            pl.BlockSpec((3, HWC, HWC), lambda n: (0, 0, 0)),
            pl.BlockSpec((1, HWC), lambda n: (0, 0)),
            pl.BlockSpec((3, HWC, HWC), lambda n: (0, 0, 0)),
            pl.BlockSpec((1, HWC), lambda n: (0, 0)),
        ],
        out_specs=pl.BlockSpec((1, D, HWC), lambda n: (n, 0, 0)),
        out_shape=jax.ShapeDtypeStruct((N, D, HWC), jnp.float32),
        scratch_shapes=[pltpu.VMEM((D + 2, HWC), jnp.bfloat16),
                        pltpu.VMEM((D + 2, HWC), jnp.bfloat16)],
        compiler_params=pltpu.CompilerParams(
            dimension_semantics=("parallel",),
            vmem_limit_bytes=int(vmem_limit)),
        cost_estimate=cost,
    )(x, w1, b1, w2, b2)

    # (N, D, H*W*C) -> NCDHW
    return jnp.transpose(out.reshape(N, D, H, W, C), (0, 4, 1, 2, 3))


# ----------------------- pure-JAX reference (for checking) -----------------
def _ref_conv(x, w):
    return jax.lax.conv_general_dilated(
        x, jnp.transpose(w, (2, 3, 4, 1, 0)), (1, 1, 1), 'SAME',
        dimension_numbers=('NDHWC', 'DHWIO', 'NDHWC'))


def ref_forward(x_ncdhw, p, eps=1e-5):
    x = jnp.transpose(x_ncdhw, (0, 2, 3, 4, 1))

    def bn(y, g, b, m, v):
        return (y - m) / jnp.sqrt(v + eps) * g + b

    out = jax.nn.relu(bn(_ref_conv(x, p['w1']), p['g1'], p['b1'],
                         p['m1'], p['v1']))
    out = bn(_ref_conv(out, p['w2']), p['g2'], p['b2'], p['m2'], p['v2'])
    out = jax.nn.relu(out + x)
    return jnp.transpose(out, (0, 4, 1, 2, 3))


if __name__ == "__main__":
    key = jax.random.PRNGKey(0)
    # in_planes == planes == 8, stride=1, downsample=None (residual adds cleanly).
    # H*W*C = 512 -> lane axis is a multiple of 128.
    N, C, D, H, W = 2, 8, 8, 8, 8
    ks = jax.random.split(key, 11)
    x = jax.random.normal(ks[0], (N, C, D, H, W), jnp.float32)

    params = dict(
        w1=jax.random.normal(ks[1], (C, C, 3, 3, 3), jnp.float32) * 0.1,
        g1=1.0 + 0.1 * jax.random.normal(ks[2], (C,), jnp.float32),
        b1=0.1 * jax.random.normal(ks[3], (C,), jnp.float32),
        m1=0.1 * jax.random.normal(ks[4], (C,), jnp.float32),
        v1=jax.random.uniform(ks[5], (C,), jnp.float32, minval=0.5, maxval=1.5),
        w2=jax.random.normal(ks[6], (C, C, 3, 3, 3), jnp.float32) * 0.1,
        g2=1.0 + 0.1 * jax.random.normal(ks[7], (C,), jnp.float32),
        b2=0.1 * jax.random.normal(ks[8], (C,), jnp.float32),
        m2=0.1 * jax.random.normal(ks[9], (C,), jnp.float32),
        v2=jax.random.uniform(ks[10], (C,), jnp.float32, minval=0.5, maxval=1.5),
    )

    out = jax.block_until_ready(basic_block_forward(x, params))
    assert out.shape == (N, C, D, H, W)

    ref = ref_forward(x, params)
    max_err = float(jnp.abs(out - ref).max())
    # bf16 MXU inputs (f32 accumulation) through two chained convs -> loosened
    # tolerance vs the pure-f32 reference.
    assert jnp.allclose(out, ref, rtol=5e-2, atol=1e-1), max_err

    print("KERNEL_OK")
</pallas_src>

<mosaic_0001>
module attributes {stable_mosaic.version = 11 : i64} {
  func.func @_basic_block_kernel(%arg0: i32, %arg1: memref<1x8x512xf32, #tpu.memory_space<vmem>>, %arg2: memref<3x512x512xbf16, #tpu.memory_space<vmem>>, %arg3: memref<1x512xf32, #tpu.memory_space<vmem>>, %arg4: memref<3x512x512xbf16, #tpu.memory_space<vmem>>, %arg5: memref<1x512xf32, #tpu.memory_space<vmem>>, %arg6: memref<1x8x512xf32, #tpu.memory_space<vmem>>, %arg7: memref<10x512xbf16, #tpu.memory_space<vmem>>, %arg8: memref<10x512xbf16, #tpu.memory_space<vmem>>) attributes {dimension_semantics = [#tpu.dimension_semantics<parallel>], iteration_bounds = array<i64: 2>, scalar_prefetch = 0 : i64, scratch_operands = 2 : i64, tpu.core_type = #tpu.core_type<tc>, window_params = [{transform_indices = @transform_0, window_bounds = array<i64: 1, 8, 512>}, {pipeline_mode = #tpu.pipeline_mode<synchronous>, transform_indices = @transform_1, window_bounds = array<i64: 3, 512, 512>}, {pipeline_mode = #tpu.pipeline_mode<synchronous>, transform_indices = @transform_2, window_bounds = array<i64: 1, 512>}, {pipeline_mode = #tpu.pipeline_mode<synchronous>, transform_indices = @transform_3, window_bounds = array<i64: 3, 512, 512>}, {pipeline_mode = #tpu.pipeline_mode<synchronous>, transform_indices = @transform_4, window_bounds = array<i64: 1, 512>}, {transform_indices = @transform_5, window_bounds = array<i64: 1, 8, 512>}]} {
    %cst = arith.constant 0.000000e+00 : bf16
    %0 = vector.broadcast %cst : bf16 to vector<1x512xbf16>
    %c0 = arith.constant 0 : index
    %c0_0 = arith.constant 0 : index
    %1 = vector.load %arg7[%c0, %c0_0] : memref<10x512xbf16, #tpu.memory_space<vmem>>, vector<1x512xbf16>
    tpu.vector_store %arg7[%c0, %c0_0], %0 {strides = array<i32>} : memref<10x512xbf16, #tpu.memory_space<vmem>>, vector<1x512xbf16>,
    %c9 = arith.constant 9 : index
    %c0_1 = arith.constant 0 : index
    %2 = vector.load %arg7[%c9, %c0_1] : memref<10x512xbf16, #tpu.memory_space<vmem>>, vector<1x512xbf16>
    tpu.vector_store %arg7[%c9, %c0_1], %0 {strides = array<i32>} : memref<10x512xbf16, #tpu.memory_space<vmem>>, vector<1x512xbf16>,
    %c0_2 = arith.constant 0 : index
    %c0_3 = arith.constant 0 : index
    %3 = vector.load %arg8[%c0_2, %c0_3] : memref<10x512xbf16, #tpu.memory_space<vmem>>, vector<1x512xbf16>
    tpu.vector_store %arg8[%c0_2, %c0_3], %0 {strides = array<i32>} : memref<10x512xbf16, #tpu.memory_space<vmem>>, vector<1x512xbf16>,
    %c9_4 = arith.constant 9 : index
    %c0_5 = arith.constant 0 : index
    %4 = vector.load %arg8[%c9_4, %c0_5] : memref<10x512xbf16, #tpu.memory_space<vmem>>, vector<1x512xbf16>
    tpu.vector_store %arg8[%c9_4, %c0_5], %0 {strides = array<i32>} : memref<10x512xbf16, #tpu.memory_space<vmem>>, vector<1x512xbf16>,
    %c0_6 = arith.constant 0 : index
    %c0_7 = arith.constant 0 : index
    %c0_8 = arith.constant 0 : index
    %5 = vector.load %arg1[%c0_6, %c0_7, %c0_8] : memref<1x8x512xf32, #tpu.memory_space<vmem>>, vector<1x8x512xf32>
    %6 = vector.shape_cast %5 : vector<1x8x512xf32> to vector<8x512xf32>
    %7 = arith.truncf %6 : vector<8x512xf32> to vector<8x512xbf16>
    %c1 = arith.constant 1 : index
    %c0_9 = arith.constant 0 : index
    %8 = vector.load %arg7[%c1, %c0_9] : memref<10x512xbf16, #tpu.memory_space<vmem>>, vector<8x512xbf16>
    tpu.vector_store %arg7[%c1, %c0_9], %7 {strides = array<i32>} : memref<10x512xbf16, #tpu.memory_space<vmem>>, vector<8x512xbf16>,
    %cst_10 = arith.constant 0.000000e+00 : f32
    %9 = vector.broadcast %cst_10 : f32 to vector<8x512xf32>
    %c0_11 = arith.constant 0 : index
    %c0_12 = arith.constant 0 : index
    %10 = vector.load %arg7[%c0_11, %c0_12] : memref<10x512xbf16, #tpu.memory_space<vmem>>, vector<8x512xbf16>
    %c0_13 = arith.constant 0 : index
    %c0_14 = arith.constant 0 : index
    %c0_15 = arith.constant 0 : index
    %11 = vector.load %arg2[%c0_13, %c0_14, %c0_15] : memref<3x512x512xbf16, #tpu.memory_space<vmem>>, vector<1x512x512xbf16>
    %12 = vector.shape_cast %11 : vector<1x512x512xbf16> to vector<512x512xbf16>
    %cst_16 = arith.constant dense<0.000000e+00> : vector<8x512xf32>
    %13 = tpu.matmul %10, %12, %cst_16 {dimension_numbers = #tpu.dot_dimension_numbers<[1], [0], [0], [1], [0, 0, 1, 1], [], []>} : vector<8x512xbf16>, vector<512x512xbf16>, vector<8x512xf32> -> vector<8x512xf32>
    %14 = arith.addf %9, %13 : vector<8x512xf32>
    %c1_17 = arith.constant 1 : index
    %c0_18 = arith.constant 0 : index
    %15 = vector.load %arg7[%c1_17, %c0_18] : memref<10x512xbf16, #tpu.memory_space<vmem>>, vector<8x512xbf16>
    %c1_19 = arith.constant 1 : index
    %c0_20 = arith.constant 0 : index
    %c0_21 = arith.constant 0 : index
    %16 = vector.load %arg2[%c1_19, %c0_20, %c0_21] : memref<3x512x512xbf16, #tpu.memory_space<vmem>>, vector<1x512x512xbf16>
    %17 = vector.shape_cast %16 : vector<1x512x512xbf16> to vector<512x512xbf16>
    %cst_22 = arith.constant dense<0.000000e+00> : vector<8x512xf32>
    %18 = tpu.matmul %15, %17, %cst_22 {dimension_numbers = #tpu.dot_dimension_numbers<[1], [0], [0], [1], [0, 0, 1, 1], [], []>} : vector<8x512xbf16>, vector<512x512xbf16>, vector<8x512xf32> -> vector<8x512xf32>
    %19 = arith.addf %14, %18 : vector<8x512xf32>
    %c2 = arith.constant 2 : index
    %c0_23 = arith.constant 0 : index
    %20 = vector.load %arg7[%c2, %c0_23] : memref<10x512xbf16, #tpu.memory_space<vmem>>, vector<8x512xbf16>
    %c2_24 = arith.constant 2 : index
    %c0_25 = arith.constant 0 : index
    %c0_26 = arith.constant 0 : index
    %21 = vector.load %arg2[%c2_24, %c0_25, %c0_26] : memref<3x512x512xbf16, #tpu.memory_space<vmem>>, vector<1x512x512xbf16>
    %22 = vector.shape_cast %21 : vector<1x512x512xbf16> to vector<512x512xbf16>
    %cst_27 = arith.constant dense<0.000000e+00> : vector<8x512xf32>
    %23 = tpu.matmul %20, %22, %cst_27 {dimension_numbers = #tpu.dot_dimension_numbers<[1], [0], [0], [1], [0, 0, 1, 1], [], []>} : vector<8x512xbf16>, vector<512x512xbf16>, vector<8x512xf32> -> vector<8x512xf32>
    %24 = arith.addf %19, %23 : vector<8x512xf32>
    %c0_28 = arith.constant 0 : index
    %c0_29 = arith.constant 0 : index
    %25 = vector.load %arg3[%c0_28, %c0_29] : memref<1x512xf32, #tpu.memory_space<vmem>>, vector<1x512xf32>
    %26 = vector.broadcast %25 : vector<1x512xf32> to vector<8x512xf32>
    %27 = arith.addf %24, %26 : vector<8x512xf32>
    %cst_30 = arith.constant 0.000000e+00 : f32
    %28 = vector.broadcast %cst_30 : f32 to vector<8x512xf32>
    %29 = arith.maximumf %27, %28 : vector<8x512xf32>
    %30 = arith.truncf %29 : vector<8x512xf32> to vector<8x512xbf16>
    %c1_31 = arith.constant 1 : index
    %c0_32 = arith.constant 0 : index
    %31 = vector.load %arg8[%c1_31, %c0_32] : memref<10x512xbf16, #tpu.memory_space<vmem>>, vector<8x512xbf16>
    tpu.vector_store %arg8[%c1_31, %c0_32], %30 {strides = array<i32>} : memref<10x512xbf16, #tpu.memory_space<vmem>>, vector<8x512xbf16>,
    %cst_33 = arith.constant 0.000000e+00 : f32
    %32 = vector.broadcast %cst_33 : f32 to vector<8x512xf32>
    %c0_34 = arith.constant 0 : index
    %c0_35 = arith.constant 0 : index
    %33 = vector.load %arg8[%c0_34, %c0_35] : memref<10x512xbf16, #tpu.memory_space<vmem>>, vector<8x512xbf16>
    %c0_36 = arith.constant 0 : index
    %c0_37 = arith.constant 0 : index
    %c0_38 = arith.constant 0 : index
    %34 = vector.load %arg4[%c0_36, %c0_37, %c0_38] : memref<3x512x512xbf16, #tpu.memory_space<vmem>>, vector<1x512x512xbf16>
    %35 = vector.shape_cast %34 : vector<1x512x512xbf16> to vector<512x512xbf16>
    %cst_39 = arith.constant dense<0.000000e+00> : vector<8x512xf32>
    %36 = tpu.matmul %33, %35, %cst_39 {dimension_numbers = #tpu.dot_dimension_numbers<[1], [0], [0], [1], [0, 0, 1, 1], [], []>} : vector<8x512xbf16>, vector<512x512xbf16>, vector<8x512xf32> -> vector<8x512xf32>
    %37 = arith.addf %32, %36 : vector<8x512xf32>
    %c1_40 = arith.constant 1 : index
    %c0_41 = arith.constant 0 : index
    %38 = vector.load %arg8[%c1_40, %c0_41] : memref<10x512xbf16, #tpu.memory_space<vmem>>, vector<8x512xbf16>
    %c1_42 = arith.constant 1 : index
    %c0_43 = arith.constant 0 : index
    %c0_44 = arith.constant 0 : index
    %39 = vector.load %arg4[%c1_42, %c0_43, %c0_44] : memref<3x512x512xbf16, #tpu.memory_space<vmem>>, vector<1x512x512xbf16>
    %40 = vector.shape_cast %39 : vector<1x512x512xbf16> to vector<512x512xbf16>
    %cst_45 = arith.constant dense<0.000000e+00> : vector<8x512xf32>
    %41 = tpu.matmul %38, %40, %cst_45 {dimension_numbers = #tpu.dot_dimension_numbers<[1], [0], [0], [1], [0, 0, 1, 1], [], []>} : vector<8x512xbf16>, vector<512x512xbf16>, vector<8x512xf32> -> vector<8x512xf32>
    %42 = arith.addf %37, %41 : vector<8x512xf32>
    %c2_46 = arith.constant 2 : index
    %c0_47 = arith.constant 0 : index
    %43 = vector.load %arg8[%c2_46, %c0_47] : memref<10x512xbf16, #tpu.memory_space<vmem>>, vector<8x512xbf16>
    %c2_48 = arith.constant 2 : index
    %c0_49 = arith.constant 0 : index
    %c0_50 = arith.constant 0 : index
    %44 = vector.load %arg4[%c2_48, %c0_49, %c0_50] : memref<3x512x512xbf16, #tpu.memory_space<vmem>>, vector<1x512x512xbf16>
    %45 = vector.shape_cast %44 : vector<1x512x512xbf16> to vector<512x512xbf16>
    %cst_51 = arith.constant dense<0.000000e+00> : vector<8x512xf32>
    %46 = tpu.matmul %43, %45, %cst_51 {dimension_numbers = #tpu.dot_dimension_numbers<[1], [0], [0], [1], [0, 0, 1, 1], [], []>} : vector<8x512xbf16>, vector<512x512xbf16>, vector<8x512xf32> -> vector<8x512xf32>
    %47 = arith.addf %42, %46 : vector<8x512xf32>
    %c0_52 = arith.constant 0 : index
    %c0_53 = arith.constant 0 : index
    %48 = vector.load %arg5[%c0_52, %c0_53] : memref<1x512xf32, #tpu.memory_space<vmem>>, vector<1x512xf32>
    %49 = vector.broadcast %48 : vector<1x512xf32> to vector<8x512xf32>
    %50 = arith.addf %47, %49 : vector<8x512xf32>
    %51 = arith.addf %50, %6 : vector<8x512xf32>
    %cst_54 = arith.constant 0.000000e+00 : f32
    %52 = vector.broadcast %cst_54 : f32 to vector<8x512xf32>
    %53 = arith.maximumf %51, %52 : vector<8x512xf32>
    %c0_55 = arith.constant 0 : index
    %c0_56 = arith.constant 0 : index
    %c0_57 = arith.constant 0 : index
    %54 = vector.load %arg6[%c0_55, %c0_56, %c0_57] : memref<1x8x512xf32, #tpu.memory_space<vmem>>, vector<1x8x512xf32>
    %55 = vector.shape_cast %54 : vector<1x8x512xf32> to vector<8x512xf32>
    %56 = vector.shape_cast %53 : vector<8x512xf32> to vector<1x8x512xf32>
    tpu.vector_store %arg6[%c0_55, %c0_56, %c0_57], %56 {strides = array<i32>} : memref<1x8x512xf32, #tpu.memory_space<vmem>>, vector<1x8x512xf32>,
    return
  }
  func.func @transform_0(%arg0: i32) -> (i32, i32, i32) {
    %c0_i32 = arith.constant 0 : i32
    %c0_i32_0 = arith.constant 0 : i32
    %c0_i32_1 = arith.constant 0 : i32
    return %arg0, %c0_i32, %c0_i32_0 : i32, i32, i32
  }
  func.func @transform_1(%arg0: i32) -> (i32, i32, i32) {
    %c0_i32 = arith.constant 0 : i32
    %c0_i32_0 = arith.constant 0 : i32
    %c0_i32_1 = arith.constant 0 : i32
    %c0_i32_2 = arith.constant 0 : i32
    return %c0_i32, %c0_i32_0, %c0_i32_1 : i32, i32, i32
  }
  func.func @transform_2(%arg0: i32) -> (i32, i32) {
    %c0_i32 = arith.constant 0 : i32
    %c0_i32_0 = arith.constant 0 : i32
    %c0_i32_1 = arith.constant 0 : i32
    return %c0_i32, %c0_i32_0 : i32, i32
  }
  func.func @transform_3(%arg0: i32) -> (i32, i32, i32) {
    %c0_i32 = arith.constant 0 : i32
    %c0_i32_0 = arith.constant 0 : i32
    %c0_i32_1 = arith.constant 0 : i32
    %c0_i32_2 = arith.constant 0 : i32
    return %c0_i32, %c0_i32_0, %c0_i32_1 : i32, i32, i32
  }
  func.func @transform_4(%arg0: i32) -> (i32, i32) {
    %c0_i32 = arith.constant 0 : i32
    %c0_i32_0 = arith.constant 0 : i32
    %c0_i32_1 = arith.constant 0 : i32
    return %c0_i32, %c0_i32_0 : i32, i32
  }
  func.func @transform_5(%arg0: i32) -> (i32, i32, i32) {
    %c0_i32 = arith.constant 0 : i32
    %c0_i32_0 = arith.constant 0 : i32
    %c0_i32_1 = arith.constant 0 : i32
    return %arg0, %c0_i32, %c0_i32_0 : i32, i32, i32
  }
}

</mosaic_0001>

<llo_original>
// kernel: tpu_custom_call.1
$region0: #{tpu_custom_call.1}
  #allocation0 [shape = 'u32[]', space=smem, size = 0x4, offset = 0x4, fixed_abs, tag = 'smem constant byte address 0x4 - core index']
  #allocation1 [shape = 'u32[144,128]{1,0:T(1,128)}', space=vmem, size = 0x12000, scoped, tag = 'internal scratch']
  #allocation2 [shape = 'bf16[10,512]{1,0:T(8,128)(2,1)}', space=vmem, size = 0x4000, scoped, tag = 'scratch operand']
  #allocation3 [shape = 'bf16[10,512]{1,0:T(8,128)(2,1)}', space=vmem, size = 0x4000, scoped, tag = 'scratch operand']
  %s0 = inlined_call_operand.hbm [shape: f32[2,8,512], index: 0, kind: input, shape index: {}]
  %s1 = inlined_call_operand.hbm [shape: bf16[3,512,512], index: 1, kind: input, shape index: {}]
  %s2 = inlined_call_operand.hbm [shape: f32[1,512], index: 2, kind: input, shape index: {}]
  %s3 = inlined_call_operand.hbm [shape: bf16[3,512,512], index: 3, kind: input, shape index: {}]
  %s4 = inlined_call_operand.hbm [shape: f32[1,512], index: 4, kind: input, shape index: {}]
  %s5 = inlined_call_operand.hbm [shape: f32[2,8,512], index: 5, kind: output, shape index: {}]
  %s6 = sld [smem:[#allocation0]]
  $region73: #{tpu_custom_call.1} parent=0
    _
  %s8 = ssub.s32 1, %s6
  %s9 = scalar_select 0, %s8, %s6
  $region1: #{tpu_custom_call.1} parent=0
    #allocation4 [shape = 'u8[32768]{0}', space=vmem, size = 0x8000, scoped, tag = 'input window, operand 0']
    #allocation5 [shape = 's32[2]{0}', space=sflag, size = 0x8, scoped, tag = 'scoped memory for tpu_custom_call.1']
    #allocation6 [shape = 's32[2]{0}', space=sflag, size = 0x8, scoped, tag = 'scoped memory for tpu_custom_call.1']
    #allocation7 [shape = 'u8[1572864]{0}', space=vmem, size = 0x180000, scoped, tag = 'input window, operand 1, single buffered']
    #allocation8 [shape = 's32[1]{0}', space=sflag, size = 0x4, scoped, tag = 'scoped memory for tpu_custom_call.1']
    #allocation9 [shape = 'u8[2048]{0}', space=vmem, size = 0x800, scoped, tag = 'input window, operand 2, single buffered']
    #allocation10 [shape = 'u8[1572864]{0}', space=vmem, size = 0x180000, scoped, tag = 'input window, operand 3, single buffered']
    #allocation11 [shape = 's32[1]{0}', space=sflag, size = 0x4, scoped, tag = 'scoped memory for tpu_custom_call.1']
    #allocation12 [shape = 'u8[2048]{0}', space=vmem, size = 0x800, scoped, tag = 'input window, operand 4, single buffered']
    #allocation13 [shape = 'u8[32768]{0}', space=vmem, size = 0x8000, scoped, tag = 'output window, operand 0']
    %10 = vsyncpa [#allocation5], 0
    %s11 = scalar_lea.sflag [#allocation5], 1
    %12 = vsyncpa %s11, 0
    %13 = vsyncpa [#allocation8], 0
    %14 = vsyncpa [#allocation11], 0
    %15 = vsyncpa [#allocation6], 0
    %s16 = scalar_lea.sflag [#allocation6], 1
    %17 = vsyncpa %s16, 0
    loop: start=0, step=1, limit=4
    $region2: #{tpu_custom_call.1} parent=1 // loop_pre_header
      _
    $region3: #{tpu_custom_call.1} parent=1 // loop_header
      %s19 = sphi 0, %s23
      %p20 = scmp.ge.s32.totalorder %s19, 4
      %s29 = sphi 0, %s31
      %s32 = sphi 0, %s29
      %s33 = sphi 0, %s32
      %s49 = sphi 0, %s33
      %s53 = sphi 0, %s53
      %s55 = sphi 0, %s53
      %s56 = sphi 0, %s55
      %s70 = sphi 0, %s56
      %s74 = sphi 0, %s74
      %s76 = sphi 0, %s74
      %s77 = sphi 0, %s76
      %s91 = sphi 0, %s77
      %s95 = sphi 0, %s95
      %s97 = sphi 0, %s95
      %s98 = sphi 0, %s97
      %s112 = sphi 0, %s98
      %s116 = sphi 0, %s116
      %s118 = sphi 0, %s116
      %s119 = sphi 0, %s118
      %s133 = sphi 0, %s119
      %s139 = sphi 0, %s141
      %s142 = sphi 0, %s139
      %s143 = sphi 0, %s142
      %s159 = sphi 0, %s143
    $region4: #{tpu_custom_call.1} parent=1 // loop_header_branch
      %22 = sbr.rel (%p20) target = $region8
    $region5: #{tpu_custom_call.1} parent=1 // loop_body
      %s24 = ssub.s32 %s19, 1
      %s25 = ssub.s32 %s19, 2
      %s26 = sadd.s32 %s19, 1
      %s27 = ssub.s32 %s19, %s26
      %p28 = scmp.eq.s32.totalorder %s27, 0
      %s30 = sadd.s32 %s29, 1
      %s31 = scalar_select %p28, %s29, %s30
      %p34 = pneg %p28
      %p35 = scmp.eq.s32.totalorder %s19, 1
      %p36 = por %p34, %p35
      %p37 = scmp.ne.s32.totalorder %s29, %s32
      %p38 = scmp.eq.s32.totalorder %s19, 0
      %p39 = por %p37, %p38
      %p40 = scmp.ne.s32.totalorder %s29, %s32
      %p41 = scmp.eq.s32.totalorder %s24, 1
      %p42 = por %p40, %p41
      %p43 = scmp.ne.s32.totalorder %s32, %s33
      %p44 = scmp.eq.s32.totalorder %s24, 0
      %p45 = por %p43, %p44
      %p46 = scmp.ne.s32.totalorder %s32, %s33
      %p47 = scmp.eq.s32.totalorder %s25, 1
      %p48 = por %p46, %p47
      %p50 = scmp.ne.s32.totalorder %s33, %s49
      %p51 = scmp.eq.s32.totalorder %s25, 0
      %p52 = por %p50, %p51
      %s54 = sadd.s32 %s53, 1
      %p57 = scmp.eq.s32.totalorder %s19, 1
      %p58 = scmp.ne.s32.totalorder %s53, %s55
      %p59 = scmp.eq.s32.totalorder %s19, 0
      %p60 = por %p58, %p59
      %p61 = scmp.ne.s32.totalorder %s53, %s55
      %p62 = scmp.eq.s32.totalorder %s24, 1
      %p63 = por %p61, %p62
      %p64 = scmp.ne.s32.totalorder %s55, %s56
      %p65 = scmp.eq.s32.totalorder %s24, 0
      %p66 = por %p64, %p65
      %p67 = scmp.ne.s32.totalorder %s55, %s56
      %p68 = scmp.eq.s32.totalorder %s25, 1
      %p69 = por %p67, %p68
      %p71 = scmp.ne.s32.totalorder %s56, %s70
      %p72 = scmp.eq.s32.totalorder %s25, 0
      %p73 = por %p71, %p72
      %s75 = sadd.s32 %s74, 1
      %p78 = scmp.eq.s32.totalorder %s19, 1
      %p79 = scmp.ne.s32.totalorder %s74, %s76
      %p80 = scmp.eq.s32.totalorder %s19, 0
      %p81 = por %p79, %p80
      %p82 = scmp.ne.s32.totalorder %s74, %s76
      %p83 = scmp.eq.s32.totalorder %s24, 1
      %p84 = por %p82, %p83
      %p85 = scmp.ne.s32.totalorder %s76, %s77
      %p86 = scmp.eq.s32.totalorder %s24, 0
      %p87 = por %p85, %p86
      %p88 = scmp.ne.s32.totalorder %s76, %s77
      %p89 = scmp.eq.s32.totalorder %s25, 1
      %p90 = por %p88, %p89
      %p92 = scmp.ne.s32.totalorder %s77, %s91
      %p93 = scmp.eq.s32.totalorder %s25, 0
      %p94 = por %p92, %p93
      %s96 = sadd.s32 %s95, 1
      %p99 = scmp.eq.s32.totalorder %s19, 1
      %p100 = scmp.ne.s32.totalorder %s95, %s97
      %p101 = scmp.eq.s32.totalorder %s19, 0
      %p102 = por %p100, %p101
      %p103 = scmp.ne.s32.totalorder %s95, %s97
      %p104 = scmp.eq.s32.totalorder %s24, 1
      %p105 = por %p103, %p104
      %p106 = scmp.ne.s32.totalorder %s97, %s98
      %p107 = scmp.eq.s32.totalorder %s24, 0
      %p108 = por %p106, %p107
      %p109 = scmp.ne.s32.totalorder %s97, %s98
      %p110 = scmp.eq.s32.totalorder %s25, 1
      %p111 = por %p109, %p110
      %p113 = scmp.ne.s32.totalorder %s98, %s112
      %p114 = scmp.eq.s32.totalorder %s25, 0
      %p115 = por %p113, %p114
      %s117 = sadd.s32 %s116, 1
      %p120 = scmp.eq.s32.totalorder %s19, 1
      %p121 = scmp.ne.s32.totalorder %s116, %s118
      %p122 = scmp.eq.s32.totalorder %s19, 0
      %p123 = por %p121, %p122
      %p124 = scmp.ne.s32.totalorder %s116, %s118
      %p125 = scmp.eq.s32.totalorder %s24, 1
      %p126 = por %p124, %p125
      %p127 = scmp.ne.s32.totalorder %s118, %s119
      %p128 = scmp.eq.s32.totalorder %s24, 0
      %p129 = por %p127, %p128
      %p130 = scmp.ne.s32.totalorder %s118, %s119
      %p131 = scmp.eq.s32.totalorder %s25, 1
      %p132 = por %p130, %p131
      %p134 = scmp.ne.s32.totalorder %s119, %s133
      %p135 = scmp.eq.s32.totalorder %s25, 0
      %p136 = por %p134, %p135
      %s137 = ssub.s32 %s19, %s26
      %p138 = scmp.eq.s32.totalorder %s137, 0
      %s140 = sadd.s32 %s139, 1
      %s141 = scalar_select %p138, %s139, %s140
      %p144 = pneg %p138
      %p145 = scmp.eq.s32.totalorder %s19, 1
      %p146 = por %p144, %p145
      %p147 = scmp.ne.s32.totalorder %s139, %s142
      %p148 = scmp.eq.s32.totalorder %s19, 0
      %p149 = por %p147, %p148
      %p150 = scmp.ne.s32.totalorder %s139, %s142
      %p151 = scmp.eq.s32.totalorder %s24, 1
      %p152 = por %p150, %p151
      %p153 = scmp.ne.s32.totalorder %s142, %s143
      %p154 = scmp.eq.s32.totalorder %s24, 0
      %p155 = por %p153, %p154
      %p156 = scmp.ne.s32.totalorder %s142, %s143
      %p157 = scmp.eq.s32.totalorder %s25, 1
      %p158 = por %p156, %p157
      %p160 = scmp.ne.s32.totalorder %s143, %s159
      %p161 = scmp.eq.s32.totalorder %s25, 0
      %p162 = por %p160, %p161
      %p163 = scmp.le.s32.totalorder 1, %s19
      %p164 = scmp.lt.s32.totalorder %s19, 3
      %p165 = pnand %p163, %p164
      %p166 = pneg %p165
      // Predicated region
      $region9: #{tpu_custom_call.1} parent=5 // pred_check
        _
      $region10: #{tpu_custom_call.1} parent=5 // pred_check_branch
        %168 = sbr.rel (%p165) target = $region12
      $region11: #{tpu_custom_call.1} parent=5 // pred_region
        %s169 = ssub.s32 %s19, 1
        // Predicated region
        $region13: #{tpu_custom_call.1} parent=11 // pred_check
          %p170 = pneg %p66
        $region14: #{tpu_custom_call.1} parent=11 // pred_check_branch
          %172 = sbr.rel (%p170) target = $region16
        $region15: #{tpu_custom_call.1} parent=11 // pred_region
          %s174 = ssub.s32 49152, 49152
          %175 = vsyncadd [#allocation8], %s174
          %s176 = sshll.u32 [#allocation7], 4
          %s177 = int_to_ptr.vmem [resolvable:$true] %s176
          %182 = dma.hbm_to_vmem [thread:$0]  %s1, 49152, %s177, [#allocation8], 256, 256, 16
        $region16: #{tpu_custom_call.1} parent=11 // pred_fallthru
          _
        // Predicated region
        $region17: #{tpu_custom_call.1} parent=11 // pred_check
          %p183 = pneg %p87
        $region18: #{tpu_custom_call.1} parent=11 // pred_check_branch
          %185 = sbr.rel (%p183) target = $region20
        $region19: #{tpu_custom_call.1} parent=11 // pred_region
          %s187 = ssub.s32 64, 64
          %188 = vsyncadd [#allocation8], %s187
          %s190 = sshll.u32 [#allocation9], 4
          %s191 = int_to_ptr.vmem [resolvable:$true] %s190
          %193 = dma.hbm_to_vmem [thread:$0]  %s2, 64, %s191, [#allocation8]
        $region20: #{tpu_custom_call.1} parent=11 // pred_fallthru
          _
        // Predicated region
        $region21: #{tpu_custom_call.1} parent=11 // pred_check
          %p194 = pneg %p108
        $region22: #{tpu_custom_call.1} parent=11 // pred_check_branch
          %196 = sbr.rel (%p194) target = $region24
        $region23: #{tpu_custom_call.1} parent=11 // pred_region
          %s198 = ssub.s32 49152, 49152
          %199 = vsyncadd [#allocation11], %s198
          %s200 = sshll.u32 [#allocation10], 4
          %s201 = int_to_ptr.vmem [resolvable:$true] %s200
          %206 = dma.hbm_to_vmem [thread:$0]  %s3, 49152, %s201, [#allocation11], 256, 256, 16
        $region24: #{tpu_custom_call.1} parent=11 // pred_fallthru
          _
        // Predicated region
        $region25: #{tpu_custom_call.1} parent=11 // pred_check
          %p207 = pneg %p129
        $region26: #{tpu_custom_call.1} parent=11 // pred_check_branch
          %209 = sbr.rel (%p207) target = $region28
        $region27: #{tpu_custom_call.1} parent=11 // pred_region
          %s211 = ssub.s32 64, 64
          %212 = vsyncadd [#allocation11], %s211
          %s214 = sshll.u32 [#allocation12], 4
          %s215 = int_to_ptr.vmem [resolvable:$true] %s214
          %217 = dma.hbm_to_vmem [thread:$0]  %s4, 64, %s215, [#allocation11]
        $region28: #{tpu_custom_call.1} parent=11 // pred_fallthru
          _
      $region12: #{tpu_custom_call.1} parent=5 // pred_fallthru
        _
      %p218 = scmp.lt.s32.totalorder %s19, 2
      // Predicated region
      $region29: #{tpu_custom_call.1} parent=5 // pred_check
        %p219 = pneg %p218
      $region30: #{tpu_custom_call.1} parent=5 // pred_check_branch
        %221 = sbr.rel (%p219) target = $region32
      $region31: #{tpu_custom_call.1} parent=5 // pred_region
        // Predicated region
        $region33: #{tpu_custom_call.1} parent=31 // pred_check
          %p222 = pneg %p39
        $region34: #{tpu_custom_call.1} parent=31 // pred_check_branch
          %224 = sbr.rel (%p222) target = $region36
        $region35: #{tpu_custom_call.1} parent=31 // pred_region
          %s225 = sand.u32 %s29, 1
          %s226 = scalar_lea.sflag [#allocation5], %s225
          %s227 = sand.u32 %s29, 1
          %s228 = smul.addr %s227, 32
          %s229 = scalar_lea.vmem [#allocation4], %s228
          %s231 = ssub.s32 512, 512
          %232 = vsyncadd %s226, %s231
          %s233 = smul.addr %s19, 4
          %s234 = smul.addr %s233, 128
          %s235 = scalar_lea.hbm %s0, %s234
          %s237 = sshll.u32 %s229, 4
          %s238 = int_to_ptr.vmem [resolvable:$true] %s237
          %240 = dma.hbm_to_vmem [thread:$0]  %s235, 512, %s238, %s226
        $region36: #{tpu_custom_call.1} parent=31 // pred_fallthru
          _
      $region32: #{tpu_custom_call.1} parent=5 // pred_fallthru
        _
      %p241 = scmp.le.s32.totalorder 1, %s19
      %p242 = scmp.lt.s32.totalorder %s19, 3
      %p243 = pnand %p241, %p242
      %p244 = pneg %p243
      // Predicated region
      $region37: #{tpu_custom_call.1} parent=5 // pred_check
        _
      $region38: #{tpu_custom_call.1} parent=5 // pred_check_branch
        %246 = sbr.rel (%p243) target = $region40
      $region39: #{tpu_custom_call.1} parent=5 // pred_region
        %s247 = ssub.s32 %s19, 1
        %s248 = sand.u32 %s32, 1
        %s249 = scalar_lea.sflag [#allocation5], %s248
        %s250 = sand.u32 %s32, 1
        %s251 = smul.addr %s250, 32
        %s252 = scalar_lea.vmem [#allocation4], %s251
        // Predicated region
        $region41: #{tpu_custom_call.1} parent=39 // pred_check
          %p253 = pneg %p45
        $region42: #{tpu_custom_call.1} parent=39 // pred_check_branch
          %255 = sbr.rel (%p253) target = $region44
        $region43: #{tpu_custom_call.1} parent=39 // pred_region
          %256 = dma.done %s249, 512
        $region44: #{tpu_custom_call.1} parent=39 // pred_fallthru
          _
        // Predicated region
        $region45: #{tpu_custom_call.1} parent=39 // pred_check
          %p257 = pneg %p66
        $region46: #{tpu_custom_call.1} parent=39 // pred_check_branch
          %259 = sbr.rel (%p257) target = $region48
        $region47: #{tpu_custom_call.1} parent=39 // pred_region
          %260 = dma.done [#allocation8], 49152
        $region48: #{tpu_custom_call.1} parent=39 // pred_fallthru
          _
        // Predicated region
        $region49: #{tpu_custom_call.1} parent=39 // pred_check
          %p261 = pneg %p87
        $region50: #{tpu_custom_call.1} parent=39 // pred_check_branch
          %263 = sbr.rel (%p261) target = $region52
        $region51: #{tpu_custom_call.1} parent=39 // pred_region
          %264 = dma.done [#allocation8], 64
        $region52: #{tpu_custom_call.1} parent=39 // pred_fallthru
          _
        // Predicated region
        $region53: #{tpu_custom_call.1} parent=39 // pred_check
          %p265 = pneg %p108
        $region54: #{tpu_custom_call.1} parent=39 // pred_check_branch
          %267 = sbr.rel (%p265) target = $region56
        $region55: #{tpu_custom_call.1} parent=39 // pred_region
          %268 = dma.done [#allocation11], 49152
        $region56: #{tpu_custom_call.1} parent=39 // pred_fallthru
          _
        // Predicated region
        $region57: #{tpu_custom_call.1} parent=39 // pred_check
          %p269 = pneg %p129
        $region58: #{tpu_custom_call.1} parent=39 // pred_check_branch
          %271 = sbr.rel (%p269) target = $region60
        $region59: #{tpu_custom_call.1} parent=39 // pred_region
          %272 = dma.done [#allocation11], 64
        $region60: #{tpu_custom_call.1} parent=39 // pred_fallthru
          _
        %s273 = sand.u32 %s32, 1
        %s274 = scalar_lea.sflag [#allocation5], %s273
        %s275 = sand.u32 %s32, 1
        %s276 = smul.addr %s275, 32
        %s277 = scalar_lea.vmem [#allocation4], %s276
        %p278 = pneg %p45
        %p279 = pneg %p42
        %p280 = pneg %p66
        %p281 = pneg %p63
        %p282 = pneg %p87
        %p283 = pneg %p84
        %p284 = pneg %p108
        %p285 = pneg %p105
        %p286 = pneg %p129
        %p287 = pneg %p126
        %p288 = pneg %p155
        %p289 = pneg %p152
        %s290 = sand.u32 %s142, 1
        %s291 = scalar_lea.sflag [#allocation6], %s290
        %s292 = sand.u32 %s142, 1
        %s293 = smul.addr %s292, 32
        %s294 = scalar_lea.vmem [#allocation13], %s293
        %vm296 = vcmask 1040384
        %vm297 = vsmask.f32 256
        %vm298 = vmand %vm296, %vm297
        %vm299 = vcmask 1044484
        %vm300 = vsmask.f32 4352
        %vm301 = vmand %vm299, %vm300
        %vm302 = vmor %vm301, %vm298
        %v303 = vld [vmem:[#allocation2] sm:$0x11]
        %v304 = vsel %vm302, 0, %v303
        %305 = vst [vmem:[#allocation2] sm:$0x11] %v304
        %v306 = vld [vmem:[#allocation2 + $0x8] sm:$0x11]
        %v307 = vsel %vm302, 0, %v306
        %308 = vst [vmem:[#allocation2 + $0x8] sm:$0x11] %v307
        %vm309 = vsmask.f32 7938
        %vm310 = vmand %vm296, %vm309
        %vm311 = vsmask.f32 7954
        %vm312 = vmand %vm299, %vm311
        %vm313 = vmor %vm312, %vm310
        %v314 = vld [vmem:[#allocation2 + $0x10] sm:$0x11]
        %v315 = vsel %vm313, 0, %v314
        %316 = vst [vmem:[#allocation2 + $0x10] sm:$0x11] %v315
        %v317 = vld [vmem:[#allocation2 + $0x18] sm:$0x11]
        %v318 = vsel %vm313, 0, %v317
        %319 = vst [vmem:[#allocation2 + $0x18] sm:$0x11] %v318
        %v320 = vld [vmem:[#allocation3] sm:$0x11]
        %v321 = vsel %vm302, 0, %v320
        %322 = vst [vmem:[#allocation3] sm:$0x11] %v321
        %v323 = vld [vmem:[#allocation3 + $0x8] sm:$0x11]
        %v324 = vsel %vm302, 0, %v323
        %325 = vst [vmem:[#allocation3 + $0x8] sm:$0x11] %v324
        %v326 = vld [vmem:[#allocation3 + $0x10] sm:$0x11]
        %v327 = vsel %vm313, 0, %v326
        %328 = vst [vmem:[#allocation3 + $0x10] sm:$0x11] %v327
        %v329 = vld [vmem:[#allocation3 + $0x18] sm:$0x11]
        %v330 = vsel %vm313, 0, %v329
        %331 = vst [vmem:[#allocation3 + $0x18] sm:$0x11] %v330
        %v332 = vld [vmem:[%s252] sm:$0xff]
        %v333 = vld [vmem:[%s252 + $0x8] sm:$0xff]
        %v334 = vld [vmem:[%s252 + $0x10] sm:$0xff]
        %v335 = vld [vmem:[%s252 + $0x18] sm:$0xff]
        %v336 = vpack.c.bf16 %v332, %v332
        %v337 = vpack.c.bf16 %v333, %v333
        %v338 = vpack.c.bf16 %v334, %v334
        %v339 = vpack.c.bf16 %v335, %v335
        %v344 = vunpack.c.l.b16 %v336
        %v345 = vunpack.c.l.b16 %v337
        %v346 = vunpack.c.l.b16 %v338
        %v347 = vunpack.c.l.b16 %v339
        %v348 = vpack.c.b16 %v345, %v344
        %v349 = vpack.c.b16 %v347, %v346
        %v351 = vshrl.u32 %v348, 16
        %v353 = vrot.slane %v351, 7
        %v354 = vshll.u32 %v348, 16
        %v356 = vor.u32 %v353, %v354
        %v358 = vshrl.u32 %v349, 16
        %v360 = vrot.slane %v358, 7
        %v361 = vshll.u32 %v349, 16
        %v363 = vor.u32 %v360, %v361
        %v364 = vrot.slane %v353, 4
        %v365 = vrot.slane %v360, 4
        %vm370 = vcmask 1043456
        %vm371 = vmand %vm370, %vm309
        %vm372 = vcmask 1047556
        %vm373 = vmand %vm372, %vm311
        %vm374 = vmor %vm373, %vm371
        %v375 = vld [vmem:[#allocation2] sm:$0xff]
        %v376 = vsel %vm374, %v356, %v375
        %377 = vst [vmem:[#allocation2] sm:$0xff] %v376
        %v378 = vld [vmem:[#allocation2 + $0x8] sm:$0xff]
        %v379 = vsel %vm374, %v363, %v378
        %380 = vst [vmem:[#allocation2 + $0x8] sm:$0xff] %v379
        %v381 = vld [vmem:[#allocation2 + $0x10] sm:$0x11]
        %v382 = vsel %vm302, %v364, %v381
        %383 = vst [vmem:[#allocation2 + $0x10] sm:$0x11] %v382
        %v384 = vld [vmem:[#allocation2 + $0x18] sm:$0x11]
        %v385 = vsel %vm302, %v365, %v384
        %386 = vst [vmem:[#allocation2 + $0x18] sm:$0x11] %v385
        %v387 = vld [vmem:[#allocation2] sm:$0xff]
        %v388 = vld [vmem:[#allocation2 + $0x8] sm:$0xff]
        %v389 = vld [vmem:[#allocation7] sm:$0xff]
        %v390 = vld [vmem:[#allocation7 + $0x8] sm:$0xff]
        %v391 = vld [vmem:[#allocation7 + $0x10] sm:$0xff]
        %v392 = vld [vmem:[#allocation7 + $0x18] sm:$0xff]
        %v393 = vld [vmem:[#allocation7 + $0x20] sm:$0xff]
        %v394 = vld [vmem:[#allocation7 + $0x28] sm:$0xff]
        %v395 = vld [vmem:[#allocation7 + $0x30] sm:$0xff]
        %v396 = vld [vmem:[#allocation7 + $0x38] sm:$0xff]
        %v397 = vld [vmem:[#allocation7 + $0x40] sm:$0xff]
        %v398 = vld [vmem:[#allocation7 + $0x48] sm:$0xff]
        %v399 = vld [vmem:[#allocation7 + $0x50] sm:$0xff]
        %v400 = vld [vmem:[#allocation7 + $0x58] sm:$0xff]
        %v401 = vld [vmem:[#allocation7 + $0x60] sm:$0xff]
        %v402 = vld [vmem:[#allocation7 + $0x68] sm:$0xff]
        %v403 = vld [vmem:[#allocation7 + $0x70] sm:$0xff]
        %v404 = vld [vmem:[#allocation7 + $0x78] sm:$0xff]
        %v405 = vld [vmem:[#allocation7 + $0x80] sm:$0xff]
        %v406 = vld [vmem:[#allocation7 + $0x88] sm:$0xff]
        %v407 = vld [vmem:[#allocation7 + $0x90] sm:$0xff]
        %v408 = vld [vmem:[#allocation7 + $0x98] sm:$0xff]
        %v409 = vld [vmem:[#allocation7 + $0xa0] sm:$0xff]
        %v410 = vld [vmem:[#allocation7 + $0xa8] sm:$0xff]
        %v411 = vld [vmem:[#allocation7 + $0xb0] sm:$0xff]
        %v412 = vld [vmem:[#allocation7 + $0xb8] sm:$0xff]
        %v413 = vld [vmem:[#allocation7 + $0xc0] sm:$0xff]
        %v414 = vld [vmem:[#allocation7 + $0xc8] sm:$0xff]
        %v415 = vld [vmem:[#allocation7 + $0xd0] sm:$0xff]
        %v416 = vld [vmem:[#allocation7 + $0xd8] sm:$0xff]
        %v417 = vld [vmem:[#allocation7 + $0xe0] sm:$0xff]
        %v418 = vld [vmem:[#allocation7 + $0xe8] sm:$0xff]
        %v419 = vld [vmem:[#allocation7 + $0xf0] sm:$0xff]
        %v420 = vld [vmem:[#allocation7 + $0xf8] sm:$0xff]
        %v421 = vld [vmem:[#allocation7 + $0x100] sm:$0xff]
        %v422 = vld [vmem:[#allocation7 + $0x108] sm:$0xff]
        %v423 = vld [vmem:[#allocation7 + $0x110] sm:$0xff]
        %v424 = vld [vmem:[#allocation7 + $0x118] sm:$0xff]
        %v425 = vld [vmem:[#allocation7 + $0x120] sm:$0xff]
        %v426 = vld [vmem:[#allocation7 + $0x128] sm:$0xff]
        %v427 = vld [vmem:[#allocation7 + $0x130] sm:$0xff]
        %v428 = vld [vmem:[#allocation7 + $0x138] sm:$0xff]
        %v429 = vld [vmem:[#allocation7 + $0x140] sm:$0xff]
        %v430 = vld [vmem:[#allocation7 + $0x148] sm:$0xff]
        %v431 = vld [vmem:[#allocation7 + $0x150] sm:$0xff]
        %v432 = vld [vmem:[#allocation7 + $0x158] sm:$0xff]
        %v433 = vld [vmem:[#allocation7 + $0x160] sm:$0xff]
        %v434 = vld [vmem:[#allocation7 + $0x168] sm:$0xff]
        %v435 = vld [vmem:[#allocation7 + $0x170] sm:$0xff]
        %v436 = vld [vmem:[#allocation7 + $0x178] sm:$0xff]
        %v437 = vld [vmem:[#allocation7 + $0x180] sm:$0xff]
        %v438 = vld [vmem:[#allocation7 + $0x188] sm:$0xff]
        %v439 = vld [vmem:[#allocation7 + $0x190] sm:$0xff]
        %v440 = vld [vmem:[#allocation7 + $0x198] sm:$0xff]
        %v441 = vld [vmem:[#allocation7 + $0x1a0] sm:$0xff]
        %v442 = vld [vmem:[#allocation7 + $0x1a8] sm:$0xff]
        %v443 = vld [vmem:[#allocation7 + $0x1b0] sm:$0xff]
        %v444 = vld [vmem:[#allocation7 + $0x1b8] sm:$0xff]
        %v445 = vld [vmem:[#allocation7 + $0x1c0] sm:$0xff]
        %v446 = vld [vmem:[#allocation7 + $0x1c8] sm:$0xff]
        %v447 = vld [vmem:[#allocation7 + $0x1d0] sm:$0xff]
        %v448 = vld [vmem:[#allocation7 + $0x1d8] sm:$0xff]
        %v449 = vld [vmem:[#allocation7 + $0x1e0] sm:$0xff]
        %v450 = vld [vmem:[#allocation7 + $0x1e8] sm:$0xff]
        %v451 = vld [vmem:[#allocation7 + $0x1f0] sm:$0xff]
        %v452 = vld [vmem:[#allocation7 + $0x1f8] sm:$0xff]
        %v453 = vld [vmem:[#allocation7 + $0x200] sm:$0xff]
        %v454 = vld [vmem:[#allocation7 + $0x208] sm:$0xff]
        %v455 = vld [vmem:[#allocation7 + $0x210] sm:$0xff]
        %v456 = vld [vmem:[#allocation7 + $0x218] sm:$0xff]
        %v457 = vld [vmem:[#allocation7 + $0x220] sm:$0xff]
        %v458 = vld [vmem:[#allocation7 + $0x228] sm:$0xff]
        %v459 = vld [vmem:[#allocation7 + $0x230] sm:$0xff]
        %v460 = vld [vmem:[#allocation7 + $0x238] sm:$0xff]
        %v461 = vld [vmem:[#allocation7 + $0x240] sm:$0xff]
        %v462 = vld [vmem:[#allocation7 + $0x248] sm:$0xff]
        %v463 = vld [vmem:[#allocation7 + $0x250] sm:$0xff]
        %v464 = vld [vmem:[#allocation7 + $0x258] sm:$0xff]
        %v465 = vld [vmem:[#allocation7 + $0x260] sm:$0xff]
        %v466 = vld [vmem:[#allocation7 + $0x268] sm:$0xff]
        %v467 = vld [vmem:[#allocation7 + $0x270] sm:$0xff]
        %v468 = vld [vmem:[#allocation7 + $0x278] sm:$0xff]
        %v469 = vld [vmem:[#allocation7 + $0x280] sm:$0xff]
        %v470 = vld [vmem:[#allocation7 + $0x288] sm:$0xff]
        %v471 = vld [vmem:[#allocation7 + $0x290] sm:$0xff]
        %v472 = vld [vmem:[#allocation7 + $0x298] sm:$0xff]
        %v473 = vld [vmem:[#allocation7 + $0x2a0] sm:$0xff]
        %v474 = vld [vmem:[#allocation7 + $0x2a8] sm:$0xff]
        %v475 = vld [vmem:[#allocation7 + $0x2b0] sm:$0xff]
        %v476 = vld [vmem:[#allocation7 + $0x2b8] sm:$0xff]
        %v477 = vld [vmem:[#allocation7 + $0x2c0] sm:$0xff]
        %v478 = vld [vmem:[#allocation7 + $0x2c8] sm:$0xff]
        %v479 = vld [vmem:[#allocation7 + $0x2d0] sm:$0xff]
        %v480 = vld [vmem:[#allocation7 + $0x2d8] sm:$0xff]
        %v481 = vld [vmem:[#allocation7 + $0x2e0] sm:$0xff]
        %v482 = vld [vmem:[#allocation7 + $0x2e8] sm:$0xff]
        %v483 = vld [vmem:[#allocation7 + $0x2f0] sm:$0xff]
        %v484 = vld [vmem:[#allocation7 + $0x2f8] sm:$0xff]
        %v485 = vld [vmem:[#allocation7 + $0x300] sm:$0xff]
        %v486 = vld [vmem:[#allocation7 + $0x308] sm:$0xff]
        %v487 = vld [vmem:[#allocation7 + $0x310] sm:$0xff]
        %v488 = vld [vmem:[#allocation7 + $0x318] sm:$0xff]
        %v489 = vld [vmem:[#allocation7 + $0x320] sm:$0xff]
        %v490 = vld [vmem:[#allocation7 + $0x328] sm:$0xff]
        %v491 = vld [vmem:[#allocation7 + $0x330] sm:$0xff]
        %v492 = vld [vmem:[#allocation7 + $0x338] sm:$0xff]
        %v493 = vld [vmem:[#allocation7 + $0x340] sm:$0xff]
        %v494 = vld [vmem:[#allocation7 + $0x348] sm:$0xff]
        %v495 = vld [vmem:[#allocation7 + $0x350] sm:$0xff]
        %v496 = vld [vmem:[#allocation7 + $0x358] sm:$0xff]
        %v497 = vld [vmem:[#allocation7 + $0x360] sm:$0xff]
        %v498 = vld [vmem:[#allocation7 + $0x368] sm:$0xff]
        %v499 = vld [vmem:[#allocation7 + $0x370] sm:$0xff]
        %v500 = vld [vmem:[#allocation7 + $0x378] sm:$0xff]
        %v501 = vld [vmem:[#allocation7 + $0x380] sm:$0xff]
        %v502 = vld [vmem:[#allocation7 + $0x388] sm:$0xff]
        %v503 = vld [vmem:[#allocation7 + $0x390] sm:$0xff]
        %v504 = vld [vmem:[#allocation7 + $0x398] sm:$0xff]
        %v505 = vld [vmem:[#allocation7 + $0x3a0] sm:$0xff]
        %v506 = vld [vmem:[#allocation7 + $0x3a8] sm:$0xff]
        %v507 = vld [vmem:[#allocation7 + $0x3b0] sm:$0xff]
        %v508 = vld [vmem:[#allocation7 + $0x3b8] sm:$0xff]
        %v509 = vld [vmem:[#allocation7 + $0x3c0] sm:$0xff]
        %v510 = vld [vmem:[#allocation7 + $0x3c8] sm:$0xff]
        %v511 = vld [vmem:[#allocation7 + $0x3d0] sm:$0xff]
        %v512 = vld [vmem:[#allocation7 + $0x3d8] sm:$0xff]
        %v513 = vld [vmem:[#allocation7 + $0x3e0] sm:$0xff]
        %v514 = vld [vmem:[#allocation7 + $0x3e8] sm:$0xff]
        %v515 = vld [vmem:[#allocation7 + $0x3f0] sm:$0xff]
        %v516 = vld [vmem:[#allocation7 + $0x3f8] sm:$0xff]
        %v517 = vld [vmem:[#allocation2 + $0x10] sm:$0x11]
        %v518 = vld [vmem:[#allocation2 + $0x18] sm:$0x11]
        %s519 = scalar_lea.vmem [#allocation7], 1024
        %v520 = vld [vmem:[%s519] sm:$0xff]
        %v521 = vld [vmem:[%s519 + $0x8] sm:$0xff]
        %v522 = vld [vmem:[%s519 + $0x10] sm:$0xff]
        %v523 = vld [vmem:[%s519 + $0x18] sm:$0xff]
        %v524 = vld [vmem:[%s519 + $0x20] sm:$0xff]
        %v525 = vld [vmem:[%s519 + $0x28] sm:$0xff]
        %v526 = vld [vmem:[%s519 + $0x30] sm:$0xff]
        %v527 = vld [vmem:[%s519 + $0x38] sm:$0xff]
        %v528 = vld [vmem:[%s519 + $0x40] sm:$0xff]
        %v529 = vld [vmem:[%s519 + $0x48] sm:$0xff]
        %v530 = vld [vmem:[%s519 + $0x50] sm:$0xff]
        %v531 = vld [vmem:[%s519 + $0x58] sm:$0xff]
        %v532 = vld [vmem:[%s519 + $0x60] sm:$0xff]
        %v533 = vld [vmem:[%s519 + $0x68] sm:$0xff]
        %v534 = vld [vmem:[%s519 + $0x70] sm:$0xff]
        %v535 = vld [vmem:[%s519 + $0x78] sm:$0xff]
        %v536 = vld [vmem:[%s519 + $0x80] sm:$0xff]
        %v537 = vld [vmem:[%s519 + $0x88] sm:$0xff]
        %v538 = vld [vmem:[%s519 + $0x90] sm:$0xff]
        %v539 = vld [vmem:[%s519 + $0x98] sm:$0xff]
        %v540 = vld [vmem:[%s519 + $0xa0] sm:$0xff]
        %v541 = vld [vmem:[%s519 + $0xa8] sm:$0xff]
        %v542 = vld [vmem:[%s519 + $0xb0] sm:$0xff]
        %v543 = vld [vmem:[%s519 + $0xb8] sm:$0xff]
        %v544 = vld [vmem:[%s519 + $0xc0] sm:$0xff]
        %v545 = vld [vmem:[%s519 + $0xc8] sm:$0xff]
        %v546 = vld [vmem:[%s519 + $0xd0] sm:$0xff]
        %v547 = vld [vmem:[%s519 + $0xd8] sm:$0xff]
        %v548 = vld [vmem:[%s519 + $0xe0] sm:$0xff]
        %v549 = vld [vmem:[%s519 + $0xe8] sm:$0xff]
        %v550 = vld [vmem:[%s519 + $0xf0] sm:$0xff]
        %v551 = vld [vmem:[%s519 + $0xf8] sm:$0xff]
        %v552 = vld [vmem:[%s519 + $0x100] sm:$0xff]
        %v553 = vld [vmem:[%s519 + $0x108] sm:$0xff]
        %v554 = vld [vmem:[%s519 + $0x110] sm:$0xff]
        %v555 = vld [vmem:[%s519 + $0x118] sm:$0xff]
        %v556 = vld [vmem:[%s519 + $0x120] sm:$0xff]
        %v557 = vld [vmem:[%s519 + $0x128] sm:$0xff]
        %v558 = vld [vmem:[%s519 + $0x130] sm:$0xff]
        %v559 = vld [vmem:[%s519 + $0x138] sm:$0xff]
        %v560 = vld [vmem:[%s519 + $0x140] sm:$0xff]
        %v561 = vld [vmem:[%s519 + $0x148] sm:$0xff]
        %v562 = vld [vmem:[%s519 + $0x150] sm:$0xff]
        %v563 = vld [vmem:[%s519 + $0x158] sm:$0xff]
        %v564 = vld [vmem:[%s519 + $0x160] sm:$0xff]
        %v565 = vld [vmem:[%s519 + $0x168] sm:$0xff]
        %v566 = vld [vmem:[%s519 + $0x170] sm:$0xff]
        %v567 = vld [vmem:[%s519 + $0x178] sm:$0xff]
        %v568 = vld [vmem:[%s519 + $0x180] sm:$0xff]
        %v569 = vld [vmem:[%s519 + $0x188] sm:$0xff]
        %v570 = vld [vmem:[%s519 + $0x190] sm:$0xff]
        %v571 = vld [vmem:[%s519 + $0x198] sm:$0xff]
        %v572 = vld [vmem:[%s519 + $0x1a0] sm:$0xff]
        %v573 = vld [vmem:[%s519 + $0x1a8] sm:$0xff]
        %v574 = vld [vmem:[%s519 + $0x1b0] sm:$0xff]
        %v575 = vld [vmem:[%s519 + $0x1b8] sm:$0xff]
        %v576 = vld [vmem:[%s519 + $0x1c0] sm:$0xff]
        %v577 = vld [vmem:[%s519 + $0x1c8] sm:$0xff]
        %v578 = vld [vmem:[%s519 + $0x1d0] sm:$0xff]
        %v579 = vld [vmem:[%s519 + $0x1d8] sm:$0xff]
        %v580 = vld [vmem:[%s519 + $0x1e0] sm:$0xff]
        %v581 = vld [vmem:[%s519 + $0x1e8] sm:$0xff]
        %v582 = vld [vmem:[%s519 + $0x1f0] sm:$0xff]
        %v583 = vld [vmem:[%s519 + $0x1f8] sm:$0xff]
        %v584 = vld [vmem:[%s519 + $0x200] sm:$0xff]
        %v585 = vld [vmem:[%s519 + $0x208] sm:$0xff]
        %v586 = vld [vmem:[%s519 + $0x210] sm:$0xff]
        %v587 = vld [vmem:[%s519 + $0x218] sm:$0xff]
        %v588 = vld [vmem:[%s519 + $0x220] sm:$0xff]
        %v589 = vld [vmem:[%s519 + $0x228] sm:$0xff]
        %v590 = vld [vmem:[%s519 + $0x230] sm:$0xff]
        %v591 = vld [vmem:[%s519 + $0x238] sm:$0xff]
        %v592 = vld [vmem:[%s519 + $0x240] sm:$0xff]
        %v593 = vld [vmem:[%s519 + $0x248] sm:$0xff]
        %v594 = vld [vmem:[%s519 + $0x250] sm:$0xff]
        %v595 = vld [vmem:[%s519 + $0x258] sm:$0xff]
        %v596 = vld [vmem:[%s519 + $0x260] sm:$0xff]
        %v597 = vld [vmem:[%s519 + $0x268] sm:$0xff]
        %v598 = vld [vmem:[%s519 + $0x270] sm:$0xff]
        %v599 = vld [vmem:[%s519 + $0x278] sm:$0xff]
        %v600 = vld [vmem:[%s519 + $0x280] sm:$0xff]
        %v601 = vld [vmem:[%s519 + $0x288] sm:$0xff]
        %v602 = vld [vmem:[%s519 + $0x290] sm:$0xff]
        %v603 = vld [vmem:[%s519 + $0x298] sm:$0xff]
        %v604 = vld [vmem:[%s519 + $0x2a0] sm:$0xff]
        %v605 = vld [vmem:[%s519 + $0x2a8] sm:$0xff]
        %v606 = vld [vmem:[%s519 + $0x2b0] sm:$0xff]
        %v607 = vld [vmem:[%s519 + $0x2b8] sm:$0xff]
        %v608 = vld [vmem:[%s519 + $0x2c0] sm:$0xff]
        %v609 = vld [vmem:[%s519 + $0x2c8] sm:$0xff]
        %v610 = vld [vmem:[%s519 + $0x2d0] sm:$0xff]
        %v611 = vld [vmem:[%s519 + $0x2d8] sm:$0xff]
        %v612 = vld [vmem:[%s519 + $0x2e0] sm:$0xff]
        %v613 = vld [vmem:[%s519 + $0x2e8] sm:$0xff]
        %v614 = vld [vmem:[%s519 + $0x2f0] sm:$0xff]
        %v615 = vld [vmem:[%s519 + $0x2f8] sm:$0xff]
        %v616 = vld [vmem:[%s519 + $0x300] sm:$0xff]
        %v617 = vld [vmem:[%s519 + $0x308] sm:$0xff]
        %v618 = vld [vmem:[%s519 + $0x310] sm:$0xff]
        %v619 = vld [vmem:[%s519 + $0x318] sm:$0xff]
        %v620 = vld [vmem:[%s519 + $0x320] sm:$0xff]
        %v621 = vld [vmem:[%s519 + $0x328] sm:$0xff]
        %v622 = vld [vmem:[%s519 + $0x330] sm:$0xff]
        %v623 = vld [vmem:[%s519 + $0x338] sm:$0xff]
        %v624 = vld [vmem:[%s519 + $0x340] sm:$0xff]
        %v625 = vld [vmem:[%s519 + $0x348] sm:$0xff]
        %v626 = vld [vmem:[%s519 + $0x350] sm:$0xff]
        %v627 = vld [vmem:[%s519 + $0x358] sm:$0xff]
        %v628 = vld [vmem:[%s519 + $0x360] sm:$0xff]
        %v629 = vld [vmem:[%s519 + $0x368] sm:$0xff]
        %v630 = vld [vmem:[%s519 + $0x370] sm:$0xff]
        %v631 = vld [vmem:[%s519 + $0x378] sm:$0xff]
        %v632 = vld [vmem:[%s519 + $0x380] sm:$0xff]
        %v633 = vld [vmem:[%s519 + $0x388] sm:$0xff]
        %v634 = vld [vmem:[%s519 + $0x390] sm:$0xff]
        %v635 = vld [vmem:[%s519 + $0x398] sm:$0xff]
        %v636 = vld [vmem:[%s519 + $0x3a0] sm:$0xff]
        %v637 = vld [vmem:[%s519 + $0x3a8] sm:$0xff]
        %v638 = vld [vmem:[%s519 + $0x3b0] sm:$0xff]
        %v639 = vld [vmem:[%s519 + $0x3b8] sm:$0xff]
        %v640 = vld [vmem:[%s519 + $0x3c0] sm:$0xff]
        %v641 = vld [vmem:[%s519 + $0x3c8] sm:$0xff]
        %v642 = vld [vmem:[%s519 + $0x3d0] sm:$0xff]
        %v643 = vld [vmem:[%s519 + $0x3d8] sm:$0xff]
        %v644 = vld [vmem:[%s519 + $0x3e0] sm:$0xff]
        %v645 = vld [vmem:[%s519 + $0x3e8] sm:$0xff]
        %v646 = vld [vmem:[%s519 + $0x3f0] sm:$0xff]
        %v647 = vld [vmem:[%s519 + $0x3f8] sm:$0xff]
        %v652 = vunpack.c.l.b16 %v387
        %v653 = vunpack.c.h.b16 %v387
        %v654 = vunpack.c.l.b16 %v388
        %v655 = vunpack.c.h.b16 %v388
        %v656 = vunpack.c.l.b16 %v517
        %v657 = vunpack.c.h.b16 %v517
        %v658 = vunpack.c.l.b16 %v518
        %v659 = vunpack.c.h.b16 %v518
        %v660 = vpack.c.b16 %v656, %v652
        %v661 = vpack.c.b16 %v657, %v653
        %v662 = vpack.c.b16 %v658, %v654
        %v663 = vpack.c.b16 %v659, %v655
        %v665 = vshrl.u32 %v660, 16
        %v667 = vshll.u32 %v660, 16
        %v669 = vrot.slane %v667, 1
        %v670 = vor.u32 %v665, %v669
        %v672 = vshrl.u32 %v661, 16
        %v674 = vshll.u32 %v661, 16
        %v676 = vrot.slane %v674, 1
        %v677 = vor.u32 %v672, %v676
        %v679 = vshrl.u32 %v662, 16
        %v681 = vshll.u32 %v662, 16
        %v683 = vrot.slane %v681, 1
        %v684 = vor.u32 %v679, %v683
        %v686 = vshrl.u32 %v663, 16
        %v688 = vshll.u32 %v663, 16
        %v690 = vrot.slane %v688, 1
        %v691 = vor.u32 %v686, %v690
        %v824 = vunpack.c.l.b16 %v520
        %v825 = vunpack.c.h.b16 %v520
        %v826 = vunpack.c.l.b16 %v521
        %v827 = vunpack.c.h.b16 %v521
        %v828 = vunpack.c.l.b16 %v522
        %v829 = vunpack.c.h.b16 %v522
        %v830 = vunpack.c.l.b16 %v523
        %v831 = vunpack.c.h.b16 %v523
        %v832 = vunpack.c.l.b16 %v524
        %v833 = vunpack.c.h.b16 %v524
        %v834 = vunpack.c.l.b16 %v525
        %v835 = vunpack.c.h.b16 %v525
        %v836 = vunpack.c.l.b16 %v526
        %v837 = vunpack.c.h.b16 %v526
        %v838 = vunpack.c.l.b16 %v527
        %v839 = vunpack.c.h.b16 %v527
        %v840 = vunpack.c.l.b16 %v528
        %v841 = vunpack.c.h.b16 %v528
        %v842 = vunpack.c.l.b16 %v529
        %v843 = vunpack.c.h.b16 %v529
        %v844 = vunpack.c.l.b16 %v530
        %v845 = vunpack.c.h.b16 %v530
        %v846 = vunpack.c.l.b16 %v531
        %v847 = vunpack.c.h.b16 %v531
        %v848 = vunpack.c.l.b16 %v532
        %v849 = vunpack.c.h.b16 %v532
        %v850 = vunpack.c.l.b16 %v533
        %v851 = vunpack.c.h.b16 %v533
        %v852 = vunpack.c.l.b16 %v534
        %v853 = vunpack.c.h.b16 %v534
        %v854 = vunpack.c.l.b16 %v535
        %v855 = vunpack.c.h.b16 %v535
        %v856 = vunpack.c.l.b16 %v536
        %v857 = vunpack.c.h.b16 %v536
        %v858 = vunpack.c.l.b16 %v537
        %v859 = vunpack.c.h.b16 %v537
        %v860 = vunpack.c.l.b16 %v538
        %v861 = vunpack.c.h.b16 %v538
        %v862 = vunpack.c.l.b16 %v539
        %v863 = vunpack.c.h.b16 %v539
        %v864 = vunpack.c.l.b16 %v540
        %v865 = vunpack.c.h.b16 %v540
        %v866 = vunpack.c.l.b16 %v541
        %v867 = vunpack.c.h.b16 %v541
        %v868 = vunpack.c.l.b16 %v542
        %v869 = vunpack.c.h.b16 %v542
        %v870 = vunpack.c.l.b16 %v543
        %v871 = vunpack.c.h.b16 %v543
        %v872 = vunpack.c.l.b16 %v544
        %v873 = vunpack.c.h.b16 %v544
        %v874 = vunpack.c.l.b16 %v545
        %v875 = vunpack.c.h.b16 %v545
        %v876 = vunpack.c.l.b16 %v546
        %v877 = vunpack.c.h.b16 %v546
        %v878 = vunpack.c.l.b16 %v547
        %v879 = vunpack.c.h.b16 %v547
        %v880 = vunpack.c.l.b16 %v548
        %v881 = vunpack.c.h.b16 %v548
        %v882 = vunpack.c.l.b16 %v549
        %v883 = vunpack.c.h.b16 %v549
        %v884 = vunpack.c.l.b16 %v550
        %v885 = vunpack.c.h.b16 %v550
        %v886 = vunpack.c.l.b16 %v551
        %v887 = vunpack.c.h.b16 %v551
        %v888 = vunpack.c.l.b16 %v552
        %v889 = vunpack.c.h.b16 %v552
        %v890 = vunpack.c.l.b16 %v553
        %v891 = vunpack.c.h.b16 %v553
        %v892 = vunpack.c.l.b16 %v554
        %v893 = vunpack.c.h.b16 %v554
        %v894 = vunpack.c.l.b16 %v555
        %v895 = vunpack.c.h.b16 %v555
        %v896 = vunpack.c.l.b16 %v556
        %v897 = vunpack.c.h.b16 %v556
        %v898 = vunpack.c.l.b16 %v557
        %v899 = vunpack.c.h.b16 %v557
        %v900 = vunpack.c.l.b16 %v558
        %v901 = vunpack.c.h.b16 %v558
        %v902 = vunpack.c.l.b16 %v559
        %v903 = vunpack.c.h.b16 %v559
        %v904 = vunpack.c.l.b16 %v560
        %v905 = vunpack.c.h.b16 %v560
        %v906 = vunpack.c.l.b16 %v561
        %v907 = vunpack.c.h.b16 %v561
        %v908 = vunpack.c.l.b16 %v562
        %v909 = vunpack.c.h.b16 %v562
        %v910 = vunpack.c.l.b16 %v563
        %v911 = vunpack.c.h.b16 %v563
        %v912 = vunpack.c.l.b16 %v564
        %v913 = vunpack.c.h.b16 %v564
        %v914 = vunpack.c.l.b16 %v565
        %v915 = vunpack.c.h.b16 %v565
        %v916 = vunpack.c.l.b16 %v566
        %v917 = vunpack.c.h.b16 %v566
        %v918 = vunpack.c.l.b16 %v567
        %v919 = vunpack.c.h.b16 %v567
        %v920 = vunpack.c.l.b16 %v568
        %v921 = vunpack.c.h.b16 %v568
        %v922 = vunpack.c.l.b16 %v569
        %v923 = vunpack.c.h.b16 %v569
        %v924 = vunpack.c.l.b16 %v570
        %v925 = vunpack.c.h.b16 %v570
        %v926 = vunpack.c.l.b16 %v571
        %v927 = vunpack.c.h.b16 %v571
        %v928 = vunpack.c.l.b16 %v572
        %v929 = vunpack.c.h.b16 %v572
        %v930 = vunpack.c.l.b16 %v573
        %v931 = vunpack.c.h.b16 %v573
        %v932 = vunpack.c.l.b16 %v574
        %v933 = vunpack.c.h.b16 %v574
        %v934 = vunpack.c.l.b16 %v575
        %v935 = vunpack.c.h.b16 %v575
        %v936 = vunpack.c.l.b16 %v576
        %v937 = vunpack.c.h.b16 %v576
        %v938 = vunpack.c.l.b16 %v577
        %v939 = vunpack.c.h.b16 %v577
        %v940 = vunpack.c.l.b16 %v578
        %v941 = vunpack.c.h.b16 %v578
        %v942 = vunpack.c.l.b16 %v579
        %v943 = vunpack.c.h.b16 %v579
        %v944 = vunpack.c.l.b16 %v580
        %v945 = vunpack.c.h.b16 %v580
        %v946 = vunpack.c.l.b16 %v581
        %v947 = vunpack.c.h.b16 %v581
        %v948 = vunpack.c.l.b16 %v582
        %v949 = vunpack.c.h.b16 %v582
        %v950 = vunpack.c.l.b16 %v583
        %v951 = vunpack.c.h.b16 %v583
        %v952 = vunpack.c.l.b16 %v584
        %v953 = vunpack.c.h.b16 %v584
        %v954 = vunpack.c.l.b16 %v585
        %v955 = vunpack.c.h.b16 %v585
        %v956 = vunpack.c.l.b16 %v586
        %v957 = vunpack.c.h.b16 %v586
        %v958 = vunpack.c.l.b16 %v587
        %v959 = vunpack.c.h.b16 %v587
        %v960 = vunpack.c.l.b16 %v588
        %v961 = vunpack.c.h.b16 %v588
        %v962 = vunpack.c.l.b16 %v589
        %v963 = vunpack.c.h.b16 %v589
        %v964 = vunpack.c.l.b16 %v590
        %v965 = vunpack.c.h.b16 %v590
        %v966 = vunpack.c.l.b16 %v591
        %v967 = vunpack.c.h.b16 %v591
        %v968 = vunpack.c.l.b16 %v592
        %v969 = vunpack.c.h.b16 %v592
        %v970 = vunpack.c.l.b16 %v593
        %v971 = vunpack.c.h.b16 %v593
        %v972 = vunpack.c.l.b16 %v594
        %v973 = vunpack.c.h.b16 %v594
        %v974 = vunpack.c.l.b16 %v595
        %v975 = vunpack.c.h.b16 %v595
        %v976 = vunpack.c.l.b16 %v596
        %v977 = vunpack.c.h.b16 %v596
        %v978 = vunpack.c.l.b16 %v597
        %v979 = vunpack.c.h.b16 %v597
        %v980 = vunpack.c.l.b16 %v598
        %v981 = vunpack.c.h.b16 %v598
        %v982 = vunpack.c.l.b16 %v599
        %v983 = vunpack.c.h.b16 %v599
        %v984 = vunpack.c.l.b16 %v600
        %v985 = vunpack.c.h.b16 %v600
        %v986 = vunpack.c.l.b16 %v601
        %v987 = vunpack.c.h.b16 %v601
        %v988 = vunpack.c.l.b16 %v602
        %v989 = vunpack.c.h.b16 %v602
        %v990 = vunpack.c.l.b16 %v603
        %v991 = vunpack.c.h.b16 %v603
        %v992 = vunpack.c.l.b16 %v604
        %v993 = vunpack.c.h.b16 %v604
        %v994 = vunpack.c.l.b16 %v605
        %v995 = vunpack.c.h.b16 %v605
        %v996 = vunpack.c.l.b16 %v606
        %v997 = vunpack.c.h.b16 %v606
        %v998 = vunpack.c.l.b16 %v607
        %v999 = vunpack.c.h.b16 %v607
        %v1000 = vunpack.c.l.b16 %v608
        %v1001 = vunpack.c.h.b16 %v608
        %v1002 = vunpack.c.l.b16 %v609
        %v1003 = vunpack.c.h.b16 %v609
        %v1004 = vunpack.c.l.b16 %v610
        %v1005 = vunpack.c.h.b16 %v610
        %v1006 = vunpack.c.l.b16 %v611
        %v1007 = vunpack.c.h.b16 %v611
        %v1008 = vunpack.c.l.b16 %v612
        %v1009 = vunpack.c.h.b16 %v612
        %v1010 = vunpack.c.l.b16 %v613
        %v1011 = vunpack.c.h.b16 %v613
        %v1012 = vunpack.c.l.b16 %v614
        %v1013 = vunpack.c.h.b16 %v614
        %v1014 = vunpack.c.l.b16 %v615
        %v1015 = vunpack.c.h.b16 %v615
        %v1016 = vunpack.c.l.b16 %v616
        %v1017 = vunpack.c.h.b16 %v616
        %v1018 = vunpack.c.l.b16 %v617
        %v1019 = vunpack.c.h.b16 %v617
        %v1020 = vunpack.c.l.b16 %v618
        %v1021 = vunpack.c.h.b16 %v618
        %v1022 = vunpack.c.l.b16 %v619
        %v1023 = vunpack.c.h.b16 %v619
        %v1024 = vunpack.c.l.b16 %v620
        %v1025 = vunpack.c.h.b16 %v620
        %v1026 = vunpack.c.l.b16 %v621
        %v1027 = vunpack.c.h.b16 %v621
        %v1028 = vunpack.c.l.b16 %v622
        %v1029 = vunpack.c.h.b16 %v622
        %v1030 = vunpack.c.l.b16 %v623
        %v1031 = vunpack.c.h.b16 %v623
        %v1032 = vunpack.c.l.b16 %v624
        %v1033 = vunpack.c.h.b16 %v624
        %v1034 = vunpack.c.l.b16 %v625
        %v1035 = vunpack.c.h.b16 %v625
        %v1036 = vunpack.c.l.b16 %v626
        %v1037 = vunpack.c.h.b16 %v626
        %v1038 = vunpack.c.l.b16 %v627
        %v1039 = vunpack.c.h.b16 %v627
        %v1040 = vunpack.c.l.b16 %v628
        %v1041 = vunpack.c.h.b16 %v628
        %v1042 = vunpack.c.l.b16 %v629
        %v1043 = vunpack.c.h.b16 %v629
        %v1044 = vunpack.c.l.b16 %v630
        %v1045 = vunpack.c.h.b16 %v630
        %v1046 = vunpack.c.l.b16 %v631
        %v1047 = vunpack.c.h.b16 %v631
        %v1048 = vunpack.c.l.b16 %v632
        %v1049 = vunpack.c.h.b16 %v632
        %v1050 = vunpack.c.l.b16 %v633
        %v1051 = vunpack.c.h.b16 %v633
        %v1052 = vunpack.c.l.b16 %v634
        %v1053 = vunpack.c.h.b16 %v634
        %v1054 = vunpack.c.l.b16 %v635
        %v1055 = vunpack.c.h.b16 %v635
        %v1056 = vunpack.c.l.b16 %v636
        %v1057 = vunpack.c.h.b16 %v636
        %v1058 = vunpack.c.l.b16 %v637
        %v1059 = vunpack.c.h.b16 %v637
        %v1060 = vunpack.c.l.b16 %v638
        %v1061 = vunpack.c.h.b16 %v638
        %v1062 = vunpack.c.l.b16 %v639
        %v1063 = vunpack.c.h.b16 %v639
        %v1064 = vunpack.c.l.b16 %v640
        %v1065 = vunpack.c.h.b16 %v640
        %v1066 = vunpack.c.l.b16 %v641
        %v1067 = vunpack.c.h.b16 %v641
        %v1068 = vunpack.c.l.b16 %v642
        %v1069 = vunpack.c.h.b16 %v642
        %v1070 = vunpack.c.l.b16 %v643
        %v1071 = vunpack.c.h.b16 %v643
        %v1072 = vunpack.c.l.b16 %v644
        %v1073 = vunpack.c.h.b16 %v644
        %v1074 = vunpack.c.l.b16 %v645
        %v1075 = vunpack.c.h.b16 %v645
        %v1076 = vunpack.c.l.b16 %v646
        %v1077 = vunpack.c.h.b16 %v646
        %v1078 = vunpack.c.l.b16 %v647
        %v1079 = vunpack.c.h.b16 %v647
        %v1080 = vpack.c.b16 %v828, %v824
        %v1081 = vpack.c.b16 %v829, %v825
        %v1082 = vpack.c.b16 %v830, %v826
        %v1083 = vpack.c.b16 %v831, %v827
        %v1084 = vpack.c.b16 %v836, %v832
        %v1085 = vpack.c.b16 %v837, %v833
        %v1086 = vpack.c.b16 %v838, %v834
        %v1087 = vpack.c.b16 %v839, %v835
        %v1088 = vpack.c.b16 %v844, %v840
        %v1089 = vpack.c.b16 %v845, %v841
        %v1090 = vpack.c.b16 %v846, %v842
        %v1091 = vpack.c.b16 %v847, %v843
        %v1092 = vpack.c.b16 %v852, %v848
        %v1093 = vpack.c.b16 %v853, %v849
        %v1094 = vpack.c.b16 %v854, %v850
        %v1095 = vpack.c.b16 %v855, %v851
        %v1096 = vpack.c.b16 %v860, %v856
        %v1097 = vpack.c.b16 %v861, %v857
        %v1098 = vpack.c.b16 %v862, %v858
        %v1099 = vpack.c.b16 %v863, %v859
        %v1100 = vpack.c.b16 %v868, %v864
        %v1101 = vpack.c.b16 %v869, %v865
        %v1102 = vpack.c.b16 %v870, %v866
        %v1103 = vpack.c.b16 %v871, %v867
        %v1104 = vpack.c.b16 %v876, %v872
        %v1105 = vpack.c.b16 %v877, %v873
        %v1106 = vpack.c.b16 %v878, %v874
        %v1107 = vpack.c.b16 %v879, %v875
        %v1108 = vpack.c.b16 %v884, %v880
        %v1109 = vpack.c.b16 %v885, %v881
        %v1110 = vpack.c.b16 %v886, %v882
        %v1111 = vpack.c.b16 %v887, %v883
        %v1112 = vpack.c.b16 %v892, %v888
        %v1113 = vpack.c.b16 %v893, %v889
        %v1114 = vpack.c.b16 %v894, %v890
        %v1115 = vpack.c.b16 %v895, %v891
        %v1116 = vpack.c.b16 %v900, %v896
        %v1117 = vpack.c.b16 %v901, %v897
        %v1118 = vpack.c.b16 %v902, %v898
        %v1119 = vpack.c.b16 %v903, %v899
        %v1120 = vpack.c.b16 %v908, %v904
        %v1121 = vpack.c.b16 %v909, %v905
        %v1122 = vpack.c.b16 %v910, %v906
        %v1123 = vpack.c.b16 %v911, %v907
        %v1124 = vpack.c.b16 %v916, %v912
        %v1125 = vpack.c.b16 %v917, %v913
        %v1126 = vpack.c.b16 %v918, %v914
        %v1127 = vpack.c.b16 %v919, %v915
        %v1128 = vpack.c.b16 %v924, %v920
        %v1129 = vpack.c.b16 %v925, %v921
        %v1130 = vpack.c.b16 %v926, %v922
        %v1131 = vpack.c.b16 %v927, %v923
        %v1132 = vpack.c.b16 %v932, %v928
        %v1133 = vpack.c.b16 %v933, %v929
        %v1134 = vpack.c.b16 %v934, %v930
        %v1135 = vpack.c.b16 %v935, %v931
        %v1136 = vpack.c.b16 %v940, %v936
        %v1137 = vpack.c.b16 %v941, %v937
        %v1138 = vpack.c.b16 %v942, %v938
        %v1139 = vpack.c.b16 %v943, %v939
        %v1140 = vpack.c.b16 %v948, %v944
        %v1141 = vpack.c.b16 %v949, %v945
        %v1142 = vpack.c.b16 %v950, %v946
        %v1143 = vpack.c.b16 %v951, %v947
        %v1144 = vpack.c.b16 %v956, %v952
        %v1145 = vpack.c.b16 %v957, %v953
        %v1146 = vpack.c.b16 %v958, %v954
        %v1147 = vpack.c.b16 %v959, %v955
        %v1148 = vpack.c.b16 %v964, %v960
        %v1149 = vpack.c.b16 %v965, %v961
        %v1150 = vpack.c.b16 %v966, %v962
        %v1151 = vpack.c.b16 %v967, %v963
        %v1152 = vpack.c.b16 %v972, %v968
        %v1153 = vpack.c.b16 %v973, %v969
        %v1154 = vpack.c.b16 %v974, %v970
        %v1155 = vpack.c.b16 %v975, %v971
        %v1156 = vpack.c.b16 %v980, %v976
        %v1157 = vpack.c.b16 %v981, %v977
        %v1158 = vpack.c.b16 %v982, %v978
        %v1159 = vpack.c.b16 %v983, %v979
        %v1160 = vpack.c.b16 %v988, %v984
        %v1161 = vpack.c.b16 %v989, %v985
        %v1162 = vpack.c.b16 %v990, %v986
        %v1163 = vpack.c.b16 %v991, %v987
        %v1164 = vpack.c.b16 %v996, %v992
        %v1165 = vpack.c.b16 %v997, %v993
        %v1166 = vpack.c.b16 %v998, %v994
        %v1167 = vpack.c.b16 %v999, %v995
        %v1168 = vpack.c.b16 %v1004, %v1000
        %v1169 = vpack.c.b16 %v1005, %v1001
        %v1170 = vpack.c.b16 %v1006, %v1002
        %v1171 = vpack.c.b16 %v1007, %v1003
        %v1172 = vpack.c.b16 %v1012, %v1008
        %v1173 = vpack.c.b16 %v1013, %v1009
        %v1174 = vpack.c.b16 %v1014, %v1010
        %v1175 = vpack.c.b16 %v1015, %v1011
        %v1176 = vpack.c.b16 %v1020, %v1016
        %v1177 = vpack.c.b16 %v1021, %v1017
        %v1178 = vpack.c.b16 %v1022, %v1018
        %v1179 = vpack.c.b16 %v1023, %v1019
        %v1180 = vpack.c.b16 %v1028, %v1024
        %v1181 = vpack.c.b16 %v1029, %v1025
        %v1182 = vpack.c.b16 %v1030, %v1026
        %v1183 = vpack.c.b16 %v1031, %v1027
        %v1184 = vpack.c.b16 %v1036, %v1032
        %v1185 = vpack.c.b16 %v1037, %v1033
        %v1186 = vpack.c.b16 %v1038, %v1034
        %v1187 = vpack.c.b16 %v1039, %v1035
        %v1188 = vpack.c.b16 %v1044, %v1040
        %v1189 = vpack.c.b16 %v1045, %v1041
        %v1190 = vpack.c.b16 %v1046, %v1042
        %v1191 = vpack.c.b16 %v1047, %v1043
        %v1192 = vpack.c.b16 %v1052, %v1048
        %v1193 = vpack.c.b16 %v1053, %v1049
        %v1194 = vpack.c.b16 %v1054, %v1050
        %v1195 = vpack.c.b16 %v1055, %v1051
        %v1196 = vpack.c.b16 %v1060, %v1056
        %v1197 = vpack.c.b16 %v1061, %v1057
        %v1198 = vpack.c.b16 %v1062, %v1058
        %v1199 = vpack.c.b16 %v1063, %v1059
        %v1200 = vpack.c.b16 %v1068, %v1064
        %v1201 = vpack.c.b16 %v1069, %v1065
        %v1202 = vpack.c.b16 %v1070, %v1066
        %v1203 = vpack.c.b16 %v1071, %v1067
        %v1204 = vpack.c.b16 %v1076, %v1072
        %v1205 = vpack.c.b16 %v1077, %v1073
        %v1206 = vpack.c.b16 %v1078, %v1074
        %v1207 = vpack.c.b16 %v1079, %v1075
        %1336 = vmatprep.subr.bf16.mxu0 %v1081
        %1337 = vmatpush1.bf16.msra.mxu0 %v1080
        %1338 = vmatprep.subr.bf16.mxu0 %v1085
        %1339 = vmatpush1.bf16.msra.mxu0 %v1084
        %1340 = vmatprep.subr.bf16.mxu0 %v1089
        %1341 = vmatpush1.bf16.msra.mxu0 %v1088
        %1342 = vmatprep.subr.bf16.mxu0 %v1093
        %1343 = vmatpush1.bf16.msra.mxu0 %v1092
        %1344 = vmatprep.subr.bf16.mxu0 %v1097
        %1345 = vmatpush1.bf16.msra.mxu0 %v1096
        %1346 = vmatprep.subr.bf16.mxu0 %v1101
        %1347 = vmatpush1.bf16.msra.mxu0 %v1100
        %1348 = vmatprep.subr.bf16.mxu0 %v1105
        %1349 = vmatpush1.bf16.msra.mxu0 %v1104
        %1350 = vmatprep.subr.bf16.mxu0 %v1109
        %1351 = vmatpush1.bf16.msra.mxu0 %v1108
        %1352 = vmatprep.subr.bf16.mxu0 %v1113
        %1353 = vmatpush1.bf16.msra.mxu0 %v1112
        %1354 = vmatprep.subr.bf16.mxu0 %v1117
        %1355 = vmatpush1.bf16.msra.mxu0 %v1116
        %1356 = vmatprep.subr.bf16.mxu0 %v1121
        %1357 = vmatpush1.bf16.msra.mxu0 %v1120
        %1358 = vmatprep.subr.bf16.mxu0 %v1125
        %1359 = vmatpush1.bf16.msra.mxu0 %v1124
        %1360 = vmatprep.subr.bf16.mxu0 %v1129
        %1361 = vmatpush1.bf16.msra.mxu0 %v1128
        %1362 = vmatprep.subr.bf16.mxu0 %v1133
        %1363 = vmatpush1.bf16.msra.mxu0 %v1132
        %1364 = vmatprep.subr.bf16.mxu0 %v1137
        %1365 = vmatpush1.bf16.msra.mxu0 %v1136
        %1366 = vmatprep.subr.bf16.mxu0 %v1141
        %1367 = vmatpush1.bf16.msra.mxu0 %v1140
        %1368 = vmatprep.mubr.bf16.mxu0 %v677
        %1369 = vmatmul.mubr.bf16.gmra.mrb[0].mxu0 %v670
        %v1370 = vpop.f32.mrb[0].mxu0
        %v1371 = vadd.f32 0.0, %v1370
        %v1372 = vpop.f32.mrb[0].mxu0
        %v1373 = vadd.f32 0.0, %v1372
        %v1374 = vpop.f32.mrb[0].mxu0
        %v1375 = vpop.f32.mrb[0].mxu0
        %1376 = vdwg.mxu0
        %1377 = vmatprep.subr.bf16.mxu0 %v1145
        %1378 = vmatpush1.bf16.msra.mxu0 %v1144
        %1379 = vmatprep.subr.bf16.mxu0 %v1149
        %1380 = vmatpush1.bf16.msra.mxu0 %v1148
        %1381 = vmatprep.subr.bf16.mxu0 %v1153
        %1382 = vmatpush1.bf16.msra.mxu0 %v1152
        %1383 = vmatprep.subr.bf16.mxu0 %v1157
        %1384 = vmatpush1.bf16.msra.mxu0 %v1156
        %1385 = vmatprep.subr.bf16.mxu0 %v1161
        %1386 = vmatpush1.bf16.msra.mxu0 %v1160
        %1387 = vmatprep.subr.bf16.mxu0 %v1165
        %1388 = vmatpush1.bf16.msra.mxu0 %v1164
        %1389 = vmatprep.subr.bf16.mxu0 %v1169
        %1390 = vmatpush1.bf16.msra.mxu0 %v1168
        %1391 = vmatprep.subr.bf16.mxu0 %v1173
        %1392 = vmatpush1.bf16.msra.mxu0 %v1172
        %1393 = vmatprep.subr.bf16.mxu0 %v1177
        %1394 = vmatpush1.bf16.msra.mxu0 %v1176
        %1395 = vmatprep.subr.bf16.mxu0 %v1181
        %1396 = vmatpush1.bf16.msra.mxu0 %v1180
        %1397 = vmatprep.subr.bf16.mxu0 %v1185
        %1398 = vmatpush1.bf16.msra.mxu0 %v1184
        %1399 = vmatprep.subr.bf16.mxu0 %v1189
        %1400 = vmatpush1.bf16.msra.mxu0 %v1188
        %1401 = vmatprep.subr.bf16.mxu0 %v1193
        %1402 = vmatpush1.bf16.msra.mxu0 %v1192
        %1403 = vmatprep.subr.bf16.mxu0 %v1197
        %1404 = vmatpush1.bf16.msra.mxu0 %v1196
        %1405 = vmatprep.subr.bf16.mxu0 %v1201
        %1406 = vmatpush1.bf16.msra.mxu0 %v1200
        %1407 = vmatprep.subr.bf16.mxu0 %v1205
        %1408 = vmatpush1.bf16.msra.mxu0 %v1204
        %1409 = vmatprep.mubr.bf16.mxu0 %v691
        %1410 = vmatmul.mubr.bf16.gmra.mrb[0].mxu0 %v684
        %v1411 = vpop.f32.mrb[0].mxu0
        %v1412 = vadd.f32 %v1371, %v1411
        %v1413 = vpop.f32.mrb[0].mxu0
        %v1414 = vadd.f32 %v1373, %v1413
        %v1415 = vpop.f32.mrb[0].mxu0
        %v1416 = vpop.f32.mrb[0].mxu0
        %1417 = vdwg.mxu0
        %1418 = vmatprep.subr.bf16.mxu0 %v1083
        %1419 = vmatpush1.bf16.msra.mxu0 %v1082
        %1420 = vmatprep.subr.bf16.mxu0 %v1087
        %1421 = vmatpush1.bf16.msra.mxu0 %v1086
        %1422 = vmatprep.subr.bf16.mxu0 %v1091
        %1423 = vmatpush1.bf16.msra.mxu0 %v1090
        %1424 = vmatprep.subr.bf16.mxu0 %v1095
        %1425 = vmatpush1.bf16.msra.mxu0 %v1094
        %1426 = vmatprep.subr.bf16.mxu0 %v1099
        %1427 = vmatpush1.bf16.msra.mxu0 %v1098
        %1428 = vmatprep.subr.bf16.mxu0 %v1103
        %1429 = vmatpush1.bf16.msra.mxu0 %v1102
        %1430 = vmatprep.subr.bf16.mxu0 %v1107
        %1431 = vmatpush1.bf16.msra.mxu0 %v1106
        %1432 = vmatprep.subr.bf16.mxu0 %v1111
        %1433 = vmatpush1.bf16.msra.mxu0 %v1110
        %1434 = vmatprep.subr.bf16.mxu0 %v1115
        %1435 = vmatpush1.bf16.msra.mxu0 %v1114
        %1436 = vmatprep.subr.bf16.mxu0 %v1119
        %1437 = vmatpush1.bf16.msra.mxu0 %v1118
        %1438 = vmatprep.subr.bf16.mxu0 %v1123
        %1439 = vmatpush1.bf16.msra.mxu0 %v1122
        %1440 = vmatprep.subr.bf16.mxu0 %v1127
        %1441 = vmatpush1.bf16.msra.mxu0 %v1126
        %1442 = vmatprep.subr.bf16.mxu0 %v1131
        %1443 = vmatpush1.bf16.msra.mxu0 %v1130
        %1444 = vmatprep.subr.bf16.mxu0 %v1135
        %1445 = vmatpush1.bf16.msra.mxu0 %v1134
        %1446 = vmatprep.subr.bf16.mxu0 %v1139
        %1447 = vmatpush1.bf16.msra.mxu0 %v1138
        %1448 = vmatprep.subr.bf16.mxu0 %v1143
        %1449 = vmatpush1.bf16.msra.mxu0 %v1142
        %1450 = vmatprep.mubr.bf16.mxu0 %v677
        %1451 = vmatmul.mubr.bf16.gmra.mrb[0].mxu0 %v670
        %v1452 = vpop.f32.mrb[0].mxu0
        %v1453 = vadd.f32 0.0, %v1452
        %v1454 = vpop.f32.mrb[0].mxu0
        %v1455 = vadd.f32 0.0, %v1454
        %v1456 = vpop.f32.mrb[0].mxu0
        %v1457 = vpop.f32.mrb[0].mxu0
        %1458 = vdwg.mxu0
        %1459 = vmatprep.subr.bf16.mxu0 %v1147
        %1460 = vmatpush1.bf16.msra.mxu0 %v1146
        %1461 = vmatprep.subr.bf16.mxu0 %v1151
        %1462 = vmatpush1.bf16.msra.mxu0 %v1150
        %1463 = vmatprep.subr.bf16.mxu0 %v1155
        %1464 = vmatpush1.bf16.msra.mxu0 %v1154
        %1465 = vmatprep.subr.bf16.mxu0 %v1159
        %1466 = vmatpush1.bf16.msra.mxu0 %v1158
        %1467 = vmatprep.subr.bf16.mxu0 %v1163
        %1468 = vmatpush1.bf16.msra.mxu0 %v1162
        %1469 = vmatprep.subr.bf16.mxu0 %v1167
        %1470 = vmatpush1.bf16.msra.mxu0 %v1166
        %1471 = vmatprep.subr.bf16.mxu0 %v1171
        %1472 = vmatpush1.bf16.msra.mxu0 %v1170
        %1473 = vmatprep.subr.bf16.mxu0 %v1175
        %1474 = vmatpush1.bf16.msra.mxu0 %v1174
        %1475 = vmatprep.subr.bf16.mxu0 %v1179
        %1476 = vmatpush1.bf16.msra.mxu0 %v1178
        %1477 = vmatprep.subr.bf16.mxu0 %v1183
        %1478 = vmatpush1.bf16.msra.mxu0 %v1182
        %1479 = vmatprep.subr.bf16.mxu0 %v1187
        %1480 = vmatpush1.bf16.msra.mxu0 %v1186
        %1481 = vmatprep.subr.bf16.mxu0 %v1191
        %1482 = vmatpush1.bf16.msra.mxu0 %v1190
        %1483 = vmatprep.subr.bf16.mxu0 %v1195
        %1484 = vmatpush1.bf16.msra.mxu0 %v1194
        %1485 = vmatprep.subr.bf16.mxu0 %v1199
        %1486 = vmatpush1.bf16.msra.mxu0 %v1198
        %1487 = vmatprep.subr.bf16.mxu0 %v1203
        %1488 = vmatpush1.bf16.msra.mxu0 %v1202
        %1489 = vmatprep.subr.bf16.mxu0 %v1207
        %1490 = vmatpush1.bf16.msra.mxu0 %v1206
        %1491 = vmatprep.mubr.bf16.mxu0 %v691
        %1492 = vmatmul.mubr.bf16.gmra.mrb[0].mxu0 %v684
        %v1493 = vpop.f32.mrb[0].mxu0
        %v1494 = vadd.f32 %v1453, %v1493
        %v1495 = vpop.f32.mrb[0].mxu0
        %v1496 = vadd.f32 %v1455, %v1495
        %v1497 = vpop.f32.mrb[0].mxu0
        %v1498 = vpop.f32.mrb[0].mxu0
        %1499 = vdwg.mxu0
        %v1500 = vpack.c.b16 %v652, %v652
        %v1501 = vpack.c.b16 %v653, %v653
        %v1502 = vpack.c.b16 %v654, %v654
        %v1503 = vpack.c.b16 %v655, %v655
        %v1636 = vunpack.c.l.b16 %v389
        %v1637 = vunpack.c.h.b16 %v389
        %v1638 = vunpack.c.l.b16 %v390
        %v1639 = vunpack.c.h.b16 %v390
        %v1640 = vunpack.c.l.b16 %v391
        %v1641 = vunpack.c.h.b16 %v391
        %v1642 = vunpack.c.l.b16 %v392
        %v1643 = vunpack.c.h.b16 %v392
        %v1644 = vunpack.c.l.b16 %v393
        %v1645 = vunpack.c.h.b16 %v393
        %v1646 = vunpack.c.l.b16 %v394
        %v1647 = vunpack.c.h.b16 %v394
        %v1648 = vunpack.c.l.b16 %v395
        %v1649 = vunpack.c.h.b16 %v395
        %v1650 = vunpack.c.l.b16 %v396
        %v1651 = vunpack.c.h.b16 %v396
        %v1652 = vunpack.c.l.b16 %v397
        %v1653 = vunpack.c.h.b16 %v397
        %v1654 = vunpack.c.l.b16 %v398
        %v1655 = vunpack.c.h.b16 %v398
        %v1656 = vunpack.c.l.b16 %v399
        %v1657 = vunpack.c.h.b16 %v399
        %v1658 = vunpack.c.l.b16 %v400
        %v1659 = vunpack.c.h.b16 %v400
        %v1660 = vunpack.c.l.b16 %v401
        %v1661 = vunpack.c.h.b16 %v401
        %v1662 = vunpack.c.l.b16 %v402
        %v1663 = vunpack.c.h.b16 %v402
        %v1664 = vunpack.c.l.b16 %v403
        %v1665 = vunpack.c.h.b16 %v403
        %v1666 = vunpack.c.l.b16 %v404
        %v1667 = vunpack.c.h.b16 %v404
        %v1668 = vunpack.c.l.b16 %v405
        %v1669 = vunpack.c.h.b16 %v405
        %v1670 = vunpack.c.l.b16 %v406
        %v1671 = vunpack.c.h.b16 %v406
        %v1672 = vunpack.c.l.b16 %v407
        %v1673 = vunpack.c.h.b16 %v407
        %v1674 = vunpack.c.l.b16 %v408
        %v1675 = vunpack.c.h.b16 %v408
        %v1676 = vunpack.c.l.b16 %v409
        %v1677 = vunpack.c.h.b16 %v409
        %v1678 = vunpack.c.l.b16 %v410
        %v1679 = vunpack.c.h.b16 %v410
        %v1680 = vunpack.c.l.b16 %v411
        %v1681 = vunpack.c.h.b16 %v411
        %v1682 = vunpack.c.l.b16 %v412
        %v1683 = vunpack.c.h.b16 %v412
        %v1684 = vunpack.c.l.b16 %v413
        %v1685 = vunpack.c.h.b16 %v413
        %v1686 = vunpack.c.l.b16 %v414
        %v1687 = vunpack.c.h.b16 %v414
        %v1688 = vunpack.c.l.b16 %v415
        %v1689 = vunpack.c.h.b16 %v415
        %v1690 = vunpack.c.l.b16 %v416
        %v1691 = vunpack.c.h.b16 %v416
        %v1692 = vunpack.c.l.b16 %v417
        %v1693 = vunpack.c.h.b16 %v417
        %v1694 = vunpack.c.l.b16 %v418
        %v1695 = vunpack.c.h.b16 %v418
        %v1696 = vunpack.c.l.b16 %v419
        %v1697 = vunpack.c.h.b16 %v419
        %v1698 = vunpack.c.l.b16 %v420
        %v1699 = vunpack.c.h.b16 %v420
        %v1700 = vunpack.c.l.b16 %v421
        %v1701 = vunpack.c.h.b16 %v421
        %v1702 = vunpack.c.l.b16 %v422
        %v1703 = vunpack.c.h.b16 %v422
        %v1704 = vunpack.c.l.b16 %v423
        %v1705 = vunpack.c.h.b16 %v423
        %v1706 = vunpack.c.l.b16 %v424
        %v1707 = vunpack.c.h.b16 %v424
        %v1708 = vunpack.c.l.b16 %v425
        %v1709 = vunpack.c.h.b16 %v425
        %v1710 = vunpack.c.l.b16 %v426
        %v1711 = vunpack.c.h.b16 %v426
        %v1712 = vunpack.c.l.b16 %v427
        %v1713 = vunpack.c.h.b16 %v427
        %v1714 = vunpack.c.l.b16 %v428
        %v1715 = vunpack.c.h.b16 %v428
        %v1716 = vunpack.c.l.b16 %v429
        %v1717 = vunpack.c.h.b16 %v429
        %v1718 = vunpack.c.l.b16 %v430
        %v1719 = vunpack.c.h.b16 %v430
        %v1720 = vunpack.c.l.b16 %v431
        %v1721 = vunpack.c.h.b16 %v431
        %v1722 = vunpack.c.l.b16 %v432
        %v1723 = vunpack.c.h.b16 %v432
        %v1724 = vunpack.c.l.b16 %v433
        %v1725 = vunpack.c.h.b16 %v433
        %v1726 = vunpack.c.l.b16 %v434
        %v1727 = vunpack.c.h.b16 %v434
        %v1728 = vunpack.c.l.b16 %v435
        %v1729 = vunpack.c.h.b16 %v435
        %v1730 = vunpack.c.l.b16 %v436
        %v1731 = vunpack.c.h.b16 %v436
        %v1732 = vunpack.c.l.b16 %v437
        %v1733 = vunpack.c.h.b16 %v437
        %v1734 = vunpack.c.l.b16 %v438
        %v1735 = vunpack.c.h.b16 %v438
        %v1736 = vunpack.c.l.b16 %v439
        %v1737 = vunpack.c.h.b16 %v439
        %v1738 = vunpack.c.l.b16 %v440
        %v1739 = vunpack.c.h.b16 %v440
        %v1740 = vunpack.c.l.b16 %v441
        %v1741 = vunpack.c.h.b16 %v441
        %v1742 = vunpack.c.l.b16 %v442
        %v1743 = vunpack.c.h.b16 %v442
        %v1744 = vunpack.c.l.b16 %v443
        %v1745 = vunpack.c.h.b16 %v443
        %v1746 = vunpack.c.l.b16 %v444
        %v1747 = vunpack.c.h.b16 %v444
        %v1748 = vunpack.c.l.b16 %v445
        %v1749 = vunpack.c.h.b16 %v445
        %v1750 = vunpack.c.l.b16 %v446
        %v1751 = vunpack.c.h.b16 %v446
        %v1752 = vunpack.c.l.b16 %v447
        %v1753 = vunpack.c.h.b16 %v447
        %v1754 = vunpack.c.l.b16 %v448
        %v1755 = vunpack.c.h.b16 %v448
        %v1756 = vunpack.c.l.b16 %v449
        %v1757 = vunpack.c.h.b16 %v449
        %v1758 = vunpack.c.l.b16 %v450
        %v1759 = vunpack.c.h.b16 %v450
        %v1760 = vunpack.c.l.b16 %v451
        %v1761 = vunpack.c.h.b16 %v451
        %v1762 = vunpack.c.l.b16 %v452
        %v1763 = vunpack.c.h.b16 %v452
        %v1764 = vunpack.c.l.b16 %v453
        %v1765 = vunpack.c.h.b16 %v453
        %v1766 = vunpack.c.l.b16 %v454
        %v1767 = vunpack.c.h.b16 %v454
        %v1768 = vunpack.c.l.b16 %v455
        %v1769 = vunpack.c.h.b16 %v455
        %v1770 = vunpack.c.l.b16 %v456
        %v1771 = vunpack.c.h.b16 %v456
        %v1772 = vunpack.c.l.b16 %v457
        %v1773 = vunpack.c.h.b16 %v457
        %v1774 = vunpack.c.l.b16 %v458
        %v1775 = vunpack.c.h.b16 %v458
        %v1776 = vunpack.c.l.b16 %v459
        %v1777 = vunpack.c.h.b16 %v459
        %v1778 = vunpack.c.l.b16 %v460
        %v1779 = vunpack.c.h.b16 %v460
        %v1780 = vunpack.c.l.b16 %v461
        %v1781 = vunpack.c.h.b16 %v461
        %v1782 = vunpack.c.l.b16 %v462
        %v1783 = vunpack.c.h.b16 %v462
        %v1784 = vunpack.c.l.b16 %v463
        %v1785 = vunpack.c.h.b16 %v463
        %v1786 = vunpack.c.l.b16 %v464
        %v1787 = vunpack.c.h.b16 %v464
        %v1788 = vunpack.c.l.b16 %v465
        %v1789 = vunpack.c.h.b16 %v465
        %v1790 = vunpack.c.l.b16 %v466
        %v1791 = vunpack.c.h.b16 %v466
        %v1792 = vunpack.c.l.b16 %v467
        %v1793 = vunpack.c.h.b16 %v467
        %v1794 = vunpack.c.l.b16 %v468
        %v1795 = vunpack.c.h.b16 %v468
        %v1796 = vunpack.c.l.b16 %v469
        %v1797 = vunpack.c.h.b16 %v469
        %v1798 = vunpack.c.l.b16 %v470
        %v1799 = vunpack.c.h.b16 %v470
        %v1800 = vunpack.c.l.b16 %v471
        %v1801 = vunpack.c.h.b16 %v471
        %v1802 = vunpack.c.l.b16 %v472
        %v1803 = vunpack.c.h.b16 %v472
        %v1804 = vunpack.c.l.b16 %v473
        %v1805 = vunpack.c.h.b16 %v473
        %v1806 = vunpack.c.l.b16 %v474
        %v1807 = vunpack.c.h.b16 %v474
        %v1808 = vunpack.c.l.b16 %v475
        %v1809 = vunpack.c.h.b16 %v475
        %v1810 = vunpack.c.l.b16 %v476
        %v1811 = vunpack.c.h.b16 %v476
        %v1812 = vunpack.c.l.b16 %v477
        %v1813 = vunpack.c.h.b16 %v477
        %v1814 = vunpack.c.l.b16 %v478
        %v1815 = vunpack.c.h.b16 %v478
        %v1816 = vunpack.c.l.b16 %v479
        %v1817 = vunpack.c.h.b16 %v479
        %v1818 = vunpack.c.l.b16 %v480
        %v1819 = vunpack.c.h.b16 %v480
        %v1820 = vunpack.c.l.b16 %v481
        %v1821 = vunpack.c.h.b16 %v481
        %v1822 = vunpack.c.l.b16 %v482
        %v1823 = vunpack.c.h.b16 %v482
        %v1824 = vunpack.c.l.b16 %v483
        %v1825 = vunpack.c.h.b16 %v483
        %v1826 = vunpack.c.l.b16 %v484
        %v1827 = vunpack.c.h.b16 %v484
        %v1828 = vunpack.c.l.b16 %v485
        %v1829 = vunpack.c.h.b16 %v485
        %v1830 = vunpack.c.l.b16 %v486
        %v1831 = vunpack.c.h.b16 %v486
        %v1832 = vunpack.c.l.b16 %v487
        %v1833 = vunpack.c.h.b16 %v487
        %v1834 = vunpack.c.l.b16 %v488
        %v1835 = vunpack.c.h.b16 %v488
        %v1836 = vunpack.c.l.b16 %v489
        %v1837 = vunpack.c.h.b16 %v489
        %v1838 = vunpack.c.l.b16 %v490
        %v1839 = vunpack.c.h.b16 %v490
        %v1840 = vunpack.c.l.b16 %v491
        %v1841 = vunpack.c.h.b16 %v491
        %v1842 = vunpack.c.l.b16 %v492
        %v1843 = vunpack.c.h.b16 %v492
        %v1844 = vunpack.c.l.b16 %v493
        %v1845 = vunpack.c.h.b16 %v493
        %v1846 = vunpack.c.l.b16 %v494
        %v1847 = vunpack.c.h.b16 %v494
        %v1848 = vunpack.c.l.b16 %v495
        %v1849 = vunpack.c.h.b16 %v495
        %v1850 = vunpack.c.l.b16 %v496
        %v1851 = vunpack.c.h.b16 %v496
        %v1852 = vunpack.c.l.b16 %v497
        %v1853 = vunpack.c.h.b16 %v497
        %v1854 = vunpack.c.l.b16 %v498
        %v1855 = vunpack.c.h.b16 %v498
        %v1856 = vunpack.c.l.b16 %v499
        %v1857 = vunpack.c.h.b16 %v499
        %v1858 = vunpack.c.l.b16 %v500
        %v1859 = vunpack.c.h.b16 %v500
        %v1860 = vunpack.c.l.b16 %v501
        %v1861 = vunpack.c.h.b16 %v501
        %v1862 = vunpack.c.l.b16 %v502
        %v1863 = vunpack.c.h.b16 %v502
        %v1864 = vunpack.c.l.b16 %v503
        %v1865 = vunpack.c.h.b16 %v503
        %v1866 = vunpack.c.l.b16 %v504
        %v1867 = vunpack.c.h.b16 %v504
        %v1868 = vunpack.c.l.b16 %v505
        %v1869 = vunpack.c.h.b16 %v505
        %v1870 = vunpack.c.l.b16 %v506
        %v1871 = vunpack.c.h.b16 %v506
        %v1872 = vunpack.c.l.b16 %v507
        %v1873 = vunpack.c.h.b16 %v507
        %v1874 = vunpack.c.l.b16 %v508
        %v1875 = vunpack.c.h.b16 %v508
        %v1876 = vunpack.c.l.b16 %v509
        %v1877 = vunpack.c.h.b16 %v509
        %v1878 = vunpack.c.l.b16 %v510
        %v1879 = vunpack.c.h.b16 %v510
        %v1880 = vunpack.c.l.b16 %v511
        %v1881 = vunpack.c.h.b16 %v511
        %v1882 = vunpack.c.l.b16 %v512
        %v1883 = vunpack.c.h.b16 %v512
        %v1884 = vunpack.c.l.b16 %v513
        %v1885 = vunpack.c.h.b16 %v513
        %v1886 = vunpack.c.l.b16 %v514
        %v1887 = vunpack.c.h.b16 %v514
        %v1888 = vunpack.c.l.b16 %v515
        %v1889 = vunpack.c.h.b16 %v515
        %v1890 = vunpack.c.l.b16 %v516
        %v1891 = vunpack.c.h.b16 %v516
        %v1892 = vpack.c.b16 %v1640, %v1636
        %v1893 = vpack.c.b16 %v1641, %v1637
        %v1894 = vpack.c.b16 %v1642, %v1638
        %v1895 = vpack.c.b16 %v1643, %v1639
        %v1896 = vpack.c.b16 %v1648, %v1644
        %v1897 = vpack.c.b16 %v1649, %v1645
        %v1898 = vpack.c.b16 %v1650, %v1646
        %v1899 = vpack.c.b16 %v1651, %v1647
        %v1900 = vpack.c.b16 %v1656, %v1652
        %v1901 = vpack.c.b16 %v1657, %v1653
        %v1902 = vpack.c.b16 %v1658, %v1654
        %v1903 = vpack.c.b16 %v1659, %v1655
        %v1904 = vpack.c.b16 %v1664, %v1660
        %v1905 = vpack.c.b16 %v1665, %v1661
        %v1906 = vpack.c.b16 %v1666, %v1662
        %v1907 = vpack.c.b16 %v1667, %v1663
        %v1908 = vpack.c.b16 %v1672, %v1668
        %v1909 = vpack.c.b16 %v1673, %v1669
        %v1910 = vpack.c.b16 %v1674, %v1670
        %v1911 = vpack.c.b16 %v1675, %v1671
        %v1912 = vpack.c.b16 %v1680, %v1676
        %v1913 = vpack.c.b16 %v1681, %v1677
        %v1914 = vpack.c.b16 %v1682, %v1678
        %v1915 = vpack.c.b16 %v1683, %v1679
        %v1916 = vpack.c.b16 %v1688, %v1684
        %v1917 = vpack.c.b16 %v1689, %v1685
        %v1918 = vpack.c.b16 %v1690, %v1686
        %v1919 = vpack.c.b16 %v1691, %v1687
        %v1920 = vpack.c.b16 %v1696, %v1692
        %v1921 = vpack.c.b16 %v1697, %v1693
        %v1922 = vpack.c.b16 %v1698, %v1694
        %v1923 = vpack.c.b16 %v1699, %v1695
        %v1924 = vpack.c.b16 %v1704, %v1700
        %v1925 = vpack.c.b16 %v1705, %v1701
        %v1926 = vpack.c.b16 %v1706, %v1702
        %v1927 = vpack.c.b16 %v1707, %v1703
        %v1928 = vpack.c.b16 %v1712, %v1708
        %v1929 = vpack.c.b16 %v1713, %v1709
        %v1930 = vpack.c.b16 %v1714, %v1710
        %v1931 = vpack.c.b16 %v1715, %v1711
        %v1932 = vpack.c.b16 %v1720, %v1716
        %v1933 = vpack.c.b16 %v1721, %v1717
        %v1934 = vpack.c.b16 %v1722, %v1718
        %v1935 = vpack.c.b16 %v1723, %v1719
        %v1936 = vpack.c.b16 %v1728, %v1724
        %v1937 = vpack.c.b16 %v1729, %v1725
        %v1938 = vpack.c.b16 %v1730, %v1726
        %v1939 = vpack.c.b16 %v1731, %v1727
        %v1940 = vpack.c.b16 %v1736, %v1732
        %v1941 = vpack.c.b16 %v1737, %v1733
        %v1942 = vpack.c.b16 %v1738, %v1734
        %v1943 = vpack.c.b16 %v1739, %v1735
        %v1944 = vpack.c.b16 %v1744, %v1740
        %v1945 = vpack.c.b16 %v1745, %v1741
        %v1946 = vpack.c.b16 %v1746, %v1742
        %v1947 = vpack.c.b16 %v1747, %v1743
        %v1948 = vpack.c.b16 %v1752, %v1748
        %v1949 = vpack.c.b16 %v1753, %v1749
        %v1950 = vpack.c.b16 %v1754, %v1750
        %v1951 = vpack.c.b16 %v1755, %v1751
        %v1952 = vpack.c.b16 %v1760, %v1756
        %v1953 = vpack.c.b16 %v1761, %v1757
        %v1954 = vpack.c.b16 %v1762, %v1758
        %v1955 = vpack.c.b16 %v1763, %v1759
        %v1956 = vpack.c.b16 %v1768, %v1764
        %v1957 = vpack.c.b16 %v1769, %v1765
        %v1958 = vpack.c.b16 %v1770, %v1766
        %v1959 = vpack.c.b16 %v1771, %v1767
        %v1960 = vpack.c.b16 %v1776, %v1772
        %v1961 = vpack.c.b16 %v1777, %v1773
        %v1962 = vpack.c.b16 %v1778, %v1774
        %v1963 = vpack.c.b16 %v1779, %v1775
        %v1964 = vpack.c.b16 %v1784, %v1780
        %v1965 = vpack.c.b16 %v1785, %v1781
        %v1966 = vpack.c.b16 %v1786, %v1782
        %v1967 = vpack.c.b16 %v1787, %v1783
        %v1968 = vpack.c.b16 %v1792, %v1788
        %v1969 = vpack.c.b16 %v1793, %v1789
        %v1970 = vpack.c.b16 %v1794, %v1790
        %v1971 = vpack.c.b16 %v1795, %v1791
        %v1972 = vpack.c.b16 %v1800, %v1796
        %v1973 = vpack.c.b16 %v1801, %v1797
        %v1974 = vpack.c.b16 %v1802, %v1798
        %v1975 = vpack.c.b16 %v1803, %v1799
        %v1976 = vpack.c.b16 %v1808, %v1804
        %v1977 = vpack.c.b16 %v1809, %v1805
        %v1978 = vpack.c.b16 %v1810, %v1806
        %v1979 = vpack.c.b16 %v1811, %v1807
        %v1980 = vpack.c.b16 %v1816, %v1812
        %v1981 = vpack.c.b16 %v1817, %v1813
        %v1982 = vpack.c.b16 %v1818, %v1814
        %v1983 = vpack.c.b16 %v1819, %v1815
        %v1984 = vpack.c.b16 %v1824, %v1820
        %v1985 = vpack.c.b16 %v1825, %v1821
        %v1986 = vpack.c.b16 %v1826, %v1822
        %v1987 = vpack.c.b16 %v1827, %v1823
        %v1988 = vpack.c.b16 %v1832, %v1828
        %v1989 = vpack.c.b16 %v1833, %v1829
        %v1990 = vpack.c.b16 %v1834, %v1830
        %v1991 = vpack.c.b16 %v1835, %v1831
        %v1992 = vpack.c.b16 %v1840, %v1836
        %v1993 = vpack.c.b16 %v1841, %v1837
        %v1994 = vpack.c.b16 %v1842, %v1838
        %v1995 = vpack.c.b16 %v1843, %v1839
        %v1996 = vpack.c.b16 %v1848, %v1844
        %v1997 = vpack.c.b16 %v1849, %v1845
        %v1998 = vpack.c.b16 %v1850, %v1846
        %v1999 = vpack.c.b16 %v1851, %v1847
        %v2000 = vpack.c.b16 %v1856, %v1852
        %v2001 = vpack.c.b16 %v1857, %v1853
        %v2002 = vpack.c.b16 %v1858, %v1854
        %v2003 = vpack.c.b16 %v1859, %v1855
        %v2004 = vpack.c.b16 %v1864, %v1860
        %v2005 = vpack.c.b16 %v1865, %v1861
        %v2006 = vpack.c.b16 %v1866, %v1862
        %v2007 = vpack.c.b16 %v1867, %v1863
        %v2008 = vpack.c.b16 %v1872, %v1868
        %v2009 = vpack.c.b16 %v1873, %v1869
        %v2010 = vpack.c.b16 %v1874, %v1870
        %v2011 = vpack.c.b16 %v1875, %v1871
        %v2012 = vpack.c.b16 %v1880, %v1876
        %v2013 = vpack.c.b16 %v1881, %v1877
        %v2014 = vpack.c.b16 %v1882, %v1878
        %v2015 = vpack.c.b16 %v1883, %v1879
        %v2016 = vpack.c.b16 %v1888, %v1884
        %v2017 = vpack.c.b16 %v1889, %v1885
        %v2018 = vpack.c.b16 %v1890, %v1886
        %v2019 = vpack.c.b16 %v1891, %v1887
        %2148 = vmatprep.subr.bf16.mxu0 %v1893
        %2149 = vmatpush1.bf16.msra.mxu0 %v1892
        %2150 = vmatprep.subr.bf16.mxu0 %v1897
        %2151 = vmatpush1.bf16.msra.mxu0 %v1896
        %2152 = vmatprep.subr.bf16.mxu0 %v1901
        %2153 = vmatpush1.bf16.msra.mxu0 %v1900
        %2154 = vmatprep.subr.bf16.mxu0 %v1905
        %2155 = vmatpush1.bf16.msra.mxu0 %v1904
        %2156 = vmatprep.subr.bf16.mxu0 %v1909
        %2157 = vmatpush1.bf16.msra.mxu0 %v1908
        %2158 = vmatprep.subr.bf16.mxu0 %v1913
        %2159 = vmatpush1.bf16.msra.mxu0 %v1912
        %2160 = vmatprep.subr.bf16.mxu0 %v1917
        %2161 = vmatpush1.bf16.msra.mxu0 %v1916
        %2162 = vmatprep.subr.bf16.mxu0 %v1921
        %2163 = vmatpush1.bf16.msra.mxu0 %v1920
        %2164 = vmatprep.subr.bf16.mxu0 %v1925
        %2165 = vmatpush1.bf16.msra.mxu0 %v1924
        %2166 = vmatprep.subr.bf16.mxu0 %v1929
        %2167 = vmatpush1.bf16.msra.mxu0 %v1928
        %2168 = vmatprep.subr.bf16.mxu0 %v1933
        %2169 = vmatpush1.bf16.msra.mxu0 %v1932
        %2170 = vmatprep.subr.bf16.mxu0 %v1937
        %2171 = vmatpush1.bf16.msra.mxu0 %v1936
        %2172 = vmatprep.subr.bf16.mxu0 %v1941
        %2173 = vmatpush1.bf16.msra.mxu0 %v1940
        %2174 = vmatprep.subr.bf16.mxu0 %v1945
        %2175 = vmatpush1.bf16.msra.mxu0 %v1944
        %2176 = vmatprep.subr.bf16.mxu0 %v1949
        %2177 = vmatpush1.bf16.msra.mxu0 %v1948
        %2178 = vmatprep.subr.bf16.mxu0 %v1953
        %2179 = vmatpush1.bf16.msra.mxu0 %v1952
        %2180 = vmatprep.mubr.bf16.mxu0 %v1501
        %2181 = vmatmul.mubr.bf16.gmra.mrb[0].mxu0 %v1500
        %v2182 = vpop.f32.mrb[0].mxu0
        %v2183 = vadd.f32 %v1412, %v2182
        %v2184 = vpop.f32.mrb[0].mxu0
        %v2185 = vadd.f32 %v1414, %v2184
        %v2186 = vpop.f32.mrb[0].mxu0
        %v2187 = vpop.f32.mrb[0].mxu0
        %2188 = vdwg.mxu0
        %2189 = vmatprep.subr.bf16.mxu0 %v1957
        %2190 = vmatpush1.bf16.msra.mxu0 %v1956
        %2191 = vmatprep.subr.bf16.mxu0 %v1961
        %2192 = vmatpush1.bf16.msra.mxu0 %v1960
        %2193 = vmatprep.subr.bf16.mxu0 %v1965
        %2194 = vmatpush1.bf16.msra.mxu0 %v1964
        %2195 = vmatprep.subr.bf16.mxu0 %v1969
        %2196 = vmatpush1.bf16.msra.mxu0 %v1968
        %2197 = vmatprep.subr.bf16.mxu0 %v1973
        %2198 = vmatpush1.bf16.msra.mxu0 %v1972
        %2199 = vmatprep.subr.bf16.mxu0 %v1977
        %2200 = vmatpush1.bf16.msra.mxu0 %v1976
        %2201 = vmatprep.subr.bf16.mxu0 %v1981
        %2202 = vmatpush1.bf16.msra.mxu0 %v1980
        %2203 = vmatprep.subr.bf16.mxu0 %v1985
        %2204 = vmatpush1.bf16.msra.mxu0 %v1984
        %2205 = vmatprep.subr.bf16.mxu0 %v1989
        %2206 = vmatpush1.bf16.msra.mxu0 %v1988
        %2207 = vmatprep.subr.bf16.mxu0 %v1993
        %2208 = vmatpush1.bf16.msra.mxu0 %v1992
        %2209 = vmatprep.subr.bf16.mxu0 %v1997
        %2210 = vmatpush1.bf16.msra.mxu0 %v1996
        %2211 = vmatprep.subr.bf16.mxu0 %v2001
        %2212 = vmatpush1.bf16.msra.mxu0 %v2000
        %2213 = vmatprep.subr.bf16.mxu0 %v2005
        %2214 = vmatpush1.bf16.msra.mxu0 %v2004
        %2215 = vmatprep.subr.bf16.mxu0 %v2009
        %2216 = vmatpush1.bf16.msra.mxu0 %v2008
        %2217 = vmatprep.subr.bf16.mxu0 %v2013
        %2218 = vmatpush1.bf16.msra.mxu0 %v2012
        %2219 = vmatprep.subr.bf16.mxu0 %v2017
        %2220 = vmatpush1.bf16.msra.mxu0 %v2016
        %2221 = vmatprep.mubr.bf16.mxu0 %v1503
        %2222 = vmatmul.mubr.bf16.gmra.mrb[0].mxu0 %v1502
        %v2223 = vpop.f32.mrb[0].mxu0
        %v2224 = vadd.f32 %v2183, %v2223
        %v2225 = vpop.f32.mrb[0].mxu0
        %v2226 = vadd.f32 %v2185, %v2225
        %v2227 = vpop.f32.mrb[0].mxu0
        %v2228 = vpop.f32.mrb[0].mxu0
        %2229 = vdwg.mxu0
        %2230 = vmatprep.subr.bf16.mxu0 %v1895
        %2231 = vmatpush1.bf16.msra.mxu0 %v1894
        %2232 = vmatprep.subr.bf16.mxu0 %v1899
        %2233 = vmatpush1.bf16.msra.mxu0 %v1898
        %2234 = vmatprep.subr.bf16.mxu0 %v1903
        %2235 = vmatpush1.bf16.msra.mxu0 %v1902
        %2236 = vmatprep.subr.bf16.mxu0 %v1907
        %2237 = vmatpush1.bf16.msra.mxu0 %v1906
        %2238 = vmatprep.subr.bf16.mxu0 %v1911
        %2239 = vmatpush1.bf16.msra.mxu0 %v1910
        %2240 = vmatprep.subr.bf16.mxu0 %v1915
        %2241 = vmatpush1.bf16.msra.mxu0 %v1914
        %2242 = vmatprep.subr.bf16.mxu0 %v1919
        %2243 = vmatpush1.bf16.msra.mxu0 %v1918
        %2244 = vmatprep.subr.bf16.mxu0 %v1923
        %2245 = vmatpush1.bf16.msra.mxu0 %v1922
        %2246 = vmatprep.subr.bf16.mxu0 %v1927
        %2247 = vmatpush1.bf16.msra.mxu0 %v1926
        %2248 = vmatprep.subr.bf16.mxu0 %v1931
        %2249 = vmatpush1.bf16.msra.mxu0 %v1930
        %2250 = vmatprep.subr.bf16.mxu0 %v1935
        %2251 = vmatpush1.bf16.msra.mxu0 %v1934
        %2252 = vmatprep.subr.bf16.mxu0 %v1939
        %2253 = vmatpush1.bf16.msra.mxu0 %v1938
        %2254 = vmatprep.subr.bf16.mxu0 %v1943
        %2255 = vmatpush1.bf16.msra.mxu0 %v1942
        %2256 = vmatprep.subr.bf16.mxu0 %v1947
        %2257 = vmatpush1.bf16.msra.mxu0 %v1946
        %2258 = vmatprep.subr.bf16.mxu0 %v1951
        %2259 = vmatpush1.bf16.msra.mxu0 %v1950
        %2260 = vmatprep.subr.bf16.mxu0 %v1955
        %2261 = vmatpush1.bf16.msra.mxu0 %v1954
        %2262 = vmatprep.mubr.bf16.mxu0 %v1501
        %2263 = vmatmul.mubr.bf16.gmra.mrb[0].mxu0 %v1500
        %v2264 = vpop.f32.mrb[0].mxu0
        %v2265 = vadd.f32 %v1494, %v2264
        %v2266 = vpop.f32.mrb[0].mxu0
        %v2267 = vadd.f32 %v1496, %v2266
        %v2268 = vpop.f32.mrb[0].mxu0
        %v2269 = vpop.f32.mrb[0].mxu0
        %2270 = vdwg.mxu0
        %2271 = vmatprep.subr.bf16.mxu0 %v1959
        %2272 = vmatpush1.bf16.msra.mxu0 %v1958
        %2273 = vmatprep.subr.bf16.mxu0 %v1963
        %2274 = vmatpush1.bf16.msra.mxu0 %v1962
        %2275 = vmatprep.subr.bf16.mxu0 %v1967
        %2276 = vmatpush1.bf16.msra.mxu0 %v1966
        %2277 = vmatprep.subr.bf16.mxu0 %v1971
        %2278 = vmatpush1.bf16.msra.mxu0 %v1970
        %2279 = vmatprep.subr.bf16.mxu0 %v1975
        %2280 = vmatpush1.bf16.msra.mxu0 %v1974
        %2281 = vmatprep.subr.bf16.mxu0 %v1979
        %2282 = vmatpush1.bf16.msra.mxu0 %v1978
        %2283 = vmatprep.subr.bf16.mxu0 %v1983
        %2284 = vmatpush1.bf16.msra.mxu0 %v1982
        %2285 = vmatprep.subr.bf16.mxu0 %v1987
        %2286 = vmatpush1.bf16.msra.mxu0 %v1986
        %2287 = vmatprep.subr.bf16.mxu0 %v1991
        %2288 = vmatpush1.bf16.msra.mxu0 %v1990
        %2289 = vmatprep.subr.bf16.mxu0 %v1995
        %2290 = vmatpush1.bf16.msra.mxu0 %v1994
        %2291 = vmatprep.subr.bf16.mxu0 %v1999
        %2292 = vmatpush1.bf16.msra.mxu0 %v1998
        %2293 = vmatprep.subr.bf16.mxu0 %v2003
        %2294 = vmatpush1.bf16.msra.mxu0 %v2002
        %2295 = vmatprep.subr.bf16.mxu0 %v2007
        %2296 = vmatpush1.bf16.msra.mxu0 %v2006
        %2297 = vmatprep.subr.bf16.mxu0 %v2011
        %2298 = vmatpush1.bf16.msra.mxu0 %v2010
        %2299 = vmatprep.subr.bf16.mxu0 %v2015
        %2300 = vmatpush1.bf16.msra.mxu0 %v2014
        %2301 = vmatprep.subr.bf16.mxu0 %v2019
        %2302 = vmatpush1.bf16.msra.mxu0 %v2018
        %2303 = vmatprep.mubr.bf16.mxu0 %v1503
        %2304 = vmatmul.mubr.bf16.gmra.mrb[0].mxu0 %v1502
        %v2305 = vpop.f32.mrb[0].mxu0
        %v2306 = vadd.f32 %v2265, %v2305
        %v2307 = vpop.f32.mrb[0].mxu0
        %v2308 = vadd.f32 %v2267, %v2307
        %v2309 = vpop.f32.mrb[0].mxu0
        %v2310 = vpop.f32.mrb[0].mxu0
        %2311 = vdwg.mxu0
        %v2312 = vld [vmem:[#allocation2] sm:$0xee]
        %v2313 = vld [vmem:[#allocation2 + $0x8] sm:$0xee]
        %s2314 = scalar_lea.vmem [#allocation7], 2048
        %v2315 = vld [vmem:[%s2314] sm:$0xff]
        %v2316 = vld [vmem:[%s2314 + $0x8] sm:$0xff]
        %v2317 = vld [vmem:[%s2314 + $0x10] sm:$0xff]
        %v2318 = vld [vmem:[%s2314 + $0x18] sm:$0xff]
        %v2319 = vld [vmem:[%s2314 + $0x20] sm:$0xff]
        %v2320 = vld [vmem:[%s2314 + $0x28] sm:$0xff]
        %v2321 = vld [vmem:[%s2314 + $0x30] sm:$0xff]
        %v2322 = vld [vmem:[%s2314 + $0x38] sm:$0xff]
        %v2323 = vld [vmem:[%s2314 + $0x40] sm:$0xff]
        %v2324 = vld [vmem:[%s2314 + $0x48] sm:$0xff]
        %v2325 = vld [vmem:[%s2314 + $0x50] sm:$0xff]
        %v2326 = vld [vmem:[%s2314 + $0x58] sm:$0xff]
        %v2327 = vld [vmem:[%s2314 + $0x60] sm:$0xff]
        %v2328 = vld [vmem:[%s2314 + $0x68] sm:$0xff]
        %v2329 = vld [vmem:[%s2314 + $0x70] sm:$0xff]
        %v2330 = vld [vmem:[%s2314 + $0x78] sm:$0xff]
        %v2331 = vld [vmem:[%s2314 + $0x80] sm:$0xff]
        %v2332 = vld [vmem:[%s2314 + $0x88] sm:$0xff]
        %v2333 = vld [vmem:[%s2314 + $0x90] sm:$0xff]
        %v2334 = vld [vmem:[%s2314 + $0x98] sm:$0xff]
        %v2335 = vld [vmem:[%s2314 + $0xa0] sm:$0xff]
        %v2336 = vld [vmem:[%s2314 + $0xa8] sm:$0xff]
        %v2337 = vld [vmem:[%s2314 + $0xb0] sm:$0xff]
        %v2338 = vld [vmem:[%s2314 + $0xb8] sm:$0xff]
        %v2339 = vld [vmem:[%s2314 + $0xc0] sm:$0xff]
        %v2340 = vld [vmem:[%s2314 + $0xc8] sm:$0xff]
        %v2341 = vld [vmem:[%s2314 + $0xd0] sm:$0xff]
        %v2342 = vld [vmem:[%s2314 + $0xd8] sm:$0xff]
        %v2343 = vld [vmem:[%s2314 + $0xe0] sm:$0xff]
        %v2344 = vld [vmem:[%s2314 + $0xe8] sm:$0xff]
        %v2345 = vld [vmem:[%s2314 + $0xf0] sm:$0xff]
        %v2346 = vld [vmem:[%s2314 + $0xf8] sm:$0xff]
        %v2347 = vld [vmem:[%s2314 + $0x100] sm:$0xff]
        %v2348 = vld [vmem:[%s2314 + $0x108] sm:$0xff]
        %v2349 = vld [vmem:[%s2314 + $0x110] sm:$0xff]
        %v2350 = vld [vmem:[%s2314 + $0x118] sm:$0xff]
        %v2351 = vld [vmem:[%s2314 + $0x120] sm:$0xff]
        %v2352 = vld [vmem:[%s2314 + $0x128] sm:$0xff]
        %v2353 = vld [vmem:[%s2314 + $0x130] sm:$0xff]
        %v2354 = vld [vmem:[%s2314 + $0x138] sm:$0xff]
        %v2355 = vld [vmem:[%s2314 + $0x140] sm:$0xff]
        %v2356 = vld [vmem:[%s2314 + $0x148] sm:$0xff]
        %v2357 = vld [vmem:[%s2314 + $0x150] sm:$0xff]
        %v2358 = vld [vmem:[%s2314 + $0x158] sm:$0xff]
        %v2359 = vld [vmem:[%s2314 + $0x160] sm:$0xff]
        %v2360 = vld [vmem:[%s2314 + $0x168] sm:$0xff]
        %v2361 = vld [vmem:[%s2314 + $0x170] sm:$0xff]
        %v2362 = vld [vmem:[%s2314 + $0x178] sm:$0xff]
        %v2363 = vld [vmem:[%s2314 + $0x180] sm:$0xff]
        %v2364 = vld [vmem:[%s2314 + $0x188] sm:$0xff]
        %v2365 = vld [vmem:[%s2314 + $0x190] sm:$0xff]
        %v2366 = vld [vmem:[%s2314 + $0x198] sm:$0xff]
        %v2367 = vld [vmem:[%s2314 + $0x1a0] sm:$0xff]
        %v2368 = vld [vmem:[%s2314 + $0x1a8] sm:$0xff]
        %v2369 = vld [vmem:[%s2314 + $0x1b0] sm:$0xff]
        %v2370 = vld [vmem:[%s2314 + $0x1b8] sm:$0xff]
        %v2371 = vld [vmem:[%s2314 + $0x1c0] sm:$0xff]
        %v2372 = vld [vmem:[%s2314 + $0x1c8] sm:$0xff]
        %v2373 = vld [vmem:[%s2314 + $0x1d0] sm:$0xff]
        %v2374 = vld [vmem:[%s2314 + $0x1d8] sm:$0xff]
        %v2375 = vld [vmem:[%s2314 + $0x1e0] sm:$0xff]
        %v2376 = vld [vmem:[%s2314 + $0x1e8] sm:$0xff]
        %v2377 = vld [vmem:[%s2314 + $0x1f0] sm:$0xff]
        %v2378 = vld [vmem:[%s2314 + $0x1f8] sm:$0xff]
        %v2379 = vld [vmem:[%s2314 + $0x200] sm:$0xff]
        %v2380 = vld [vmem:[%s2314 + $0x208] sm:$0xff]
        %v2381 = vld [vmem:[%s2314 + $0x210] sm:$0xff]
        %v2382 = vld [vmem:[%s2314 + $0x218] sm:$0xff]
        %v2383 = vld [vmem:[%s2314 + $0x220] sm:$0xff]
        %v2384 = vld [vmem:[%s2314 + $0x228] sm:$0xff]
        %v2385 = vld [vmem:[%s2314 + $0x230] sm:$0xff]
        %v2386 = vld [vmem:[%s2314 + $0x238] sm:$0xff]
        %v2387 = vld [vmem:[%s2314 + $0x240] sm:$0xff]
        %v2388 = vld [vmem:[%s2314 + $0x248] sm:$0xff]
        %v2389 = vld [vmem:[%s2314 + $0x250] sm:$0xff]
        %v2390 = vld [vmem:[%s2314 + $0x258] sm:$0xff]
        %v2391 = vld [vmem:[%s2314 + $0x260] sm:$0xff]
        %v2392 = vld [vmem:[%s2314 + $0x268] sm:$0xff]
        %v2393 = vld [vmem:[%s2314 + $0x270] sm:$0xff]
        %v2394 = vld [vmem:[%s2314 + $0x278] sm:$0xff]
        %v2395 = vld [vmem:[%s2314 + $0x280] sm:$0xff]
        %v2396 = vld [vmem:[%s2314 + $0x288] sm:$0xff]
        %v2397 = vld [vmem:[%s2314 + $0x290] sm:$0xff]
        %v2398 = vld [vmem:[%s2314 + $0x298] sm:$0xff]
        %v2399 = vld [vmem:[%s2314 + $0x2a0] sm:$0xff]
        %v2400 = vld [vmem:[%s2314 + $0x2a8] sm:$0xff]
        %v2401 = vld [vmem:[%s2314 + $0x2b0] sm:$0xff]
        %v2402 = vld [vmem:[%s2314 + $0x2b8] sm:$0xff]
        %v2403 = vld [vmem:[%s2314 + $0x2c0] sm:$0xff]
        %v2404 = vld [vmem:[%s2314 + $0x2c8] sm:$0xff]
        %v2405 = vld [vmem:[%s2314 + $0x2d0] sm:$0xff]
        %v2406 = vld [vmem:[%s2314 + $0x2d8] sm:$0xff]
        %v2407 = vld [vmem:[%s2314 + $0x2e0] sm:$0xff]
        %v2408 = vld [vmem:[%s2314 + $0x2e8] sm:$0xff]
        %v2409 = vld [vmem:[%s2314 + $0x2f0] sm:$0xff]
        %v2410 = vld [vmem:[%s2314 + $0x2f8] sm:$0xff]
        %v2411 = vld [vmem:[%s2314 + $0x300] sm:$0xff]
        %v2412 = vld [vmem:[%s2314 + $0x308] sm:$0xff]
        %v2413 = vld [vmem:[%s2314 + $0x310] sm:$0xff]
        %v2414 = vld [vmem:[%s2314 + $0x318] sm:$0xff]
        %v2415 = vld [vmem:[%s2314 + $0x320] sm:$0xff]
        %v2416 = vld [vmem:[%s2314 + $0x328] sm:$0xff]
        %v2417 = vld [vmem:[%s2314 + $0x330] sm:$0xff]
        %v2418 = vld [vmem:[%s2314 + $0x338] sm:$0xff]
        %v2419 = vld [vmem:[%s2314 + $0x340] sm:$0xff]
        %v2420 = vld [vmem:[%s2314 + $0x348] sm:$0xff]
        %v2421 = vld [vmem:[%s2314 + $0x350] sm:$0xff]
        %v2422 = vld [vmem:[%s2314 + $0x358] sm:$0xff]
        %v2423 = vld [vmem:[%s2314 + $0x360] sm:$0xff]
        %v2424 = vld [vmem:[%s2314 + $0x368] sm:$0xff]
        %v2425 = vld [vmem:[%s2314 + $0x370] sm:$0xff]
        %v2426 = vld [vmem:[%s2314 + $0x378] sm:$0xff]
        %v2427 = vld [vmem:[%s2314 + $0x380] sm:$0xff]
        %v2428 = vld [vmem:[%s2314 + $0x388] sm:$0xff]
        %v2429 = vld [vmem:[%s2314 + $0x390] sm:$0xff]
        %v2430 = vld [vmem:[%s2314 + $0x398] sm:$0xff]
        %v2431 = vld [vmem:[%s2314 + $0x3a0] sm:$0xff]
        %v2432 = vld [vmem:[%s2314 + $0x3a8] sm:$0xff]
        %v2433 = vld [vmem:[%s2314 + $0x3b0] sm:$0xff]
        %v2434 = vld [vmem:[%s2314 + $0x3b8] sm:$0xff]
        %v2435 = vld [vmem:[%s2314 + $0x3c0] sm:$0xff]
        %v2436 = vld [vmem:[%s2314 + $0x3c8] sm:$0xff]
        %v2437 = vld [vmem:[%s2314 + $0x3d0] sm:$0xff]
        %v2438 = vld [vmem:[%s2314 + $0x3d8] sm:$0xff]
        %v2439 = vld [vmem:[%s2314 + $0x3e0] sm:$0xff]
        %v2440 = vld [vmem:[%s2314 + $0x3e8] sm:$0xff]
        %v2441 = vld [vmem:[%s2314 + $0x3f0] sm:$0xff]
        %v2442 = vld [vmem:[%s2314 + $0x3f8] sm:$0xff]
        %v2445 = vunpack.c.l.b16 %v2312
        %v2446 = vunpack.c.h.b16 %v2312
        %v2447 = vunpack.c.l.b16 %v2313
        %v2448 = vunpack.c.h.b16 %v2313
        %v2449 = vpack.c.b16 %v656, %v2445
        %v2450 = vpack.c.b16 %v657, %v2446
        %v2451 = vpack.c.b16 %v658, %v2447
        %v2452 = vpack.c.b16 %v659, %v2448
        %v2453 = vrot.slane %v2449, 1
        %v2454 = vrot.slane %v2450, 1
        %v2455 = vrot.slane %v2451, 1
        %v2456 = vrot.slane %v2452, 1
        %v2589 = vunpack.c.l.b16 %v2315
        %v2590 = vunpack.c.h.b16 %v2315
        %v2591 = vunpack.c.l.b16 %v2316
        %v2592 = vunpack.c.h.b16 %v2316
        %v2593 = vunpack.c.l.b16 %v2317
        %v2594 = vunpack.c.h.b16 %v2317
        %v2595 = vunpack.c.l.b16 %v2318
        %v2596 = vunpack.c.h.b16 %v2318
        %v2597 = vunpack.c.l.b16 %v2319
        %v2598 = vunpack.c.h.b16 %v2319
        %v2599 = vunpack.c.l.b16 %v2320
        %v2600 = vunpack.c.h.b16 %v2320
        %v2601 = vunpack.c.l.b16 %v2321
        %v2602 = vunpack.c.h.b16 %v2321
        %v2603 = vunpack.c.l.b16 %v2322
        %v2604 = vunpack.c.h.b16 %v2322
        %v2605 = vunpack.c.l.b16 %v2323
        %v2606 = vunpack.c.h.b16 %v2323
        %v2607 = vunpack.c.l.b16 %v2324
        %v2608 = vunpack.c.h.b16 %v2324
        %v2609 = vunpack.c.l.b16 %v2325
        %v2610 = vunpack.c.h.b16 %v2325
        %v2611 = vunpack.c.l.b16 %v2326
        %v2612 = vunpack.c.h.b16 %v2326
        %v2613 = vunpack.c.l.b16 %v2327
        %v2614 = vunpack.c.h.b16 %v2327
        %v2615 = vunpack.c.l.b16 %v2328
        %v2616 = vunpack.c.h.b16 %v2328
        %v2617 = vunpack.c.l.b16 %v2329
        %v2618 = vunpack.c.h.b16 %v2329
        %v2619 = vunpack.c.l.b16 %v2330
        %v2620 = vunpack.c.h.b16 %v2330
        %v2621 = vunpack.c.l.b16 %v2331
        %v2622 = vunpack.c.h.b16 %v2331
        %v2623 = vunpack.c.l.b16 %v2332
        %v2624 = vunpack.c.h.b16 %v2332
        %v2625 = vunpack.c.l.b16 %v2333
        %v2626 = vunpack.c.h.b16 %v2333
        %v2627 = vunpack.c.l.b16 %v2334
        %v2628 = vunpack.c.h.b16 %v2334
        %v2629 = vunpack.c.l.b16 %v2335
        %v2630 = vunpack.c.h.b16 %v2335
        %v2631 = vunpack.c.l.b16 %v2336
        %v2632 = vunpack.c.h.b16 %v2336
        %v2633 = vunpack.c.l.b16 %v2337
        %v2634 = vunpack.c.h.b16 %v2337
        %v2635 = vunpack.c.l.b16 %v2338
        %v2636 = vunpack.c.h.b16 %v2338
        %v2637 = vunpack.c.l.b16 %v2339
        %v2638 = vunpack.c.h.b16 %v2339
        %v2639 = vunpack.c.l.b16 %v2340
        %v2640 = vunpack.c.h.b16 %v2340
        %v2641 = vunpack.c.l.b16 %v2341
        %v2642 = vunpack.c.h.b16 %v2341
        %v2643 = vunpack.c.l.b16 %v2342
        %v2644 = vunpack.c.h.b16 %v2342
        %v2645 = vunpack.c.l.b16 %v2343
        %v2646 = vunpack.c.h.b16 %v2343
        %v2647 = vunpack.c.l.b16 %v2344
        %v2648 = vunpack.c.h.b16 %v2344
        %v2649 = vunpack.c.l.b16 %v2345
        %v2650 = vunpack.c.h.b16 %v2345
        %v2651 = vunpack.c.l.b16 %v2346
        %v2652 = vunpack.c.h.b16 %v2346
        %v2653 = vunpack.c.l.b16 %v2347
        %v2654 = vunpack.c.h.b16 %v2347
        %v2655 = vunpack.c.l.b16 %v2348
        %v2656 = vunpack.c.h.b16 %v2348
        %v2657 = vunpack.c.l.b16 %v2349
        %v2658 = vunpack.c.h.b16 %v2349
        %v2659 = vunpack.c.l.b16 %v2350
        %v2660 = vunpack.c.h.b16 %v2350
        %v2661 = vunpack.c.l.b16 %v2351
        %v2662 = vunpack.c.h.b16 %v2351
        %v2663 = vunpack.c.l.b16 %v2352
        %v2664 = vunpack.c.h.b16 %v2352
        %v2665 = vunpack.c.l.b16 %v2353
        %v2666 = vunpack.c.h.b16 %v2353
        %v2667 = vunpack.c.l.b16 %v2354
        %v2668 = vunpack.c.h.b16 %v2354
        %v2669 = vunpack.c.l.b16 %v2355
        %v2670 = vunpack.c.h.b16 %v2355
        %v2671 = vunpack.c.l.b16 %v2356
        %v2672 = vunpack.c.h.b16 %v2356
        %v2673 = vunpack.c.l.b16 %v2357
        %v2674 = vunpack.c.h.b16 %v2357
        %v2675 = vunpack.c.l.b16 %v2358
        %v2676 = vunpack.c.h.b16 %v2358
        %v2677 = vunpack.c.l.b16 %v2359
        %v2678 = vunpack.c.h.b16 %v2359
        %v2679 = vunpack.c.l.b16 %v2360
        %v2680 = vunpack.c.h.b16 %v2360
        %v2681 = vunpack.c.l.b16 %v2361
        %v2682 = vunpack.c.h.b16 %v2361
        %v2683 = vunpack.c.l.b16 %v2362
        %v2684 = vunpack.c.h.b16 %v2362
        %v2685 = vunpack.c.l.b16 %v2363
        %v2686 = vunpack.c.h.b16 %v2363
        %v2687 = vunpack.c.l.b16 %v2364
        %v2688 = vunpack.c.h.b16 %v2364
        %v2689 = vunpack.c.l.b16 %v2365
        %v2690 = vunpack.c.h.b16 %v2365
        %v2691 = vunpack.c.l.b16 %v2366
        %v2692 = vunpack.c.h.b16 %v2366
        %v2693 = vunpack.c.l.b16 %v2367
        %v2694 = vunpack.c.h.b16 %v2367
        %v2695 = vunpack.c.l.b16 %v2368
        %v2696 = vunpack.c.h.b16 %v2368
        %v2697 = vunpack.c.l.b16 %v2369
        %v2698 = vunpack.c.h.b16 %v2369
        %v2699 = vunpack.c.l.b16 %v2370
        %v2700 = vunpack.c.h.b16 %v2370
        %v2701 = vunpack.c.l.b16 %v2371
        %v2702 = vunpack.c.h.b16 %v2371
        %v2703 = vunpack.c.l.b16 %v2372
        %v2704 = vunpack.c.h.b16 %v2372
        %v2705 = vunpack.c.l.b16 %v2373
        %v2706 = vunpack.c.h.b16 %v2373
        %v2707 = vunpack.c.l.b16 %v2374
        %v2708 = vunpack.c.h.b16 %v2374
        %v2709 = vunpack.c.l.b16 %v2375
        %v2710 = vunpack.c.h.b16 %v2375
        %v2711 = vunpack.c.l.b16 %v2376
        %v2712 = vunpack.c.h.b16 %v2376
        %v2713 = vunpack.c.l.b16 %v2377
        %v2714 = vunpack.c.h.b16 %v2377
        %v2715 = vunpack.c.l.b16 %v2378
        %v2716 = vunpack.c.h.b16 %v2378
        %v2717 = vunpack.c.l.b16 %v2379
        %v2718 = vunpack.c.h.b16 %v2379
        %v2719 = vunpack.c.l.b16 %v2380
        %v2720 = vunpack.c.h.b16 %v2380
        %v2721 = vunpack.c.l.b16 %v2381
        %v2722 = vunpack.c.h.b16 %v2381
        %v2723 = vunpack.c.l.b16 %v2382
        %v2724 = vunpack.c.h.b16 %v2382
        %v2725 = vunpack.c.l.b16 %v2383
        %v2726 = vunpack.c.h.b16 %v2383
        %v2727 = vunpack.c.l.b16 %v2384
        %v2728 = vunpack.c.h.b16 %v2384
        %v2729 = vunpack.c.l.b16 %v2385
        %v2730 = vunpack.c.h.b16 %v2385
        %v2731 = vunpack.c.l.b16 %v2386
        %v2732 = vunpack.c.h.b16 %v2386
        %v2733 = vunpack.c.l.b16 %v2387
        %v2734 = vunpack.c.h.b16 %v2387
        %v2735 = vunpack.c.l.b16 %v2388
        %v2736 = vunpack.c.h.b16 %v2388
        %v2737 = vunpack.c.l.b16 %v2389
        %v2738 = vunpack.c.h.b16 %v2389
        %v2739 = vunpack.c.l.b16 %v2390
        %v2740 = vunpack.c.h.b16 %v2390
        %v2741 = vunpack.c.l.b16 %v2391
        %v2742 = vunpack.c.h.b16 %v2391
        %v2743 = vunpack.c.l.b16 %v2392
        %v2744 = vunpack.c.h.b16 %v2392
        %v2745 = vunpack.c.l.b16 %v2393
        %v2746 = vunpack.c.h.b16 %v2393
        %v2747 = vunpack.c.l.b16 %v2394
        %v2748 = vunpack.c.h.b16 %v2394
        %v2749 = vunpack.c.l.b16 %v2395
        %v2750 = vunpack.c.h.b16 %v2395
        %v2751 = vunpack.c.l.b16 %v2396
        %v2752 = vunpack.c.h.b16 %v2396
        %v2753 = vunpack.c.l.b16 %v2397
        %v2754 = vunpack.c.h.b16 %v2397
        %v2755 = vunpack.c.l.b16 %v2398
        %v2756 = vunpack.c.h.b16 %v2398
        %v2757 = vunpack.c.l.b16 %v2399
        %v2758 = vunpack.c.h.b16 %v2399
        %v2759 = vunpack.c.l.b16 %v2400
        %v2760 = vunpack.c.h.b16 %v2400
        %v2761 = vunpack.c.l.b16 %v2401
        %v2762 = vunpack.c.h.b16 %v2401
        %v2763 = vunpack.c.l.b16 %v2402
        %v2764 = vunpack.c.h.b16 %v2402
        %v2765 = vunpack.c.l.b16 %v2403
        %v2766 = vunpack.c.h.b16 %v2403
        %v2767 = vunpack.c.l.b16 %v2404
        %v2768 = vunpack.c.h.b16 %v2404
        %v2769 = vunpack.c.l.b16 %v2405
        %v2770 = vunpack.c.h.b16 %v2405
        %v2771 = vunpack.c.l.b16 %v2406
        %v2772 = vunpack.c.h.b16 %v2406
        %v2773 = vunpack.c.l.b16 %v2407
        %v2774 = vunpack.c.h.b16 %v2407
        %v2775 = vunpack.c.l.b16 %v2408
        %v2776 = vunpack.c.h.b16 %v2408
        %v2777 = vunpack.c.l.b16 %v2409
        %v2778 = vunpack.c.h.b16 %v2409
        %v2779 = vunpack.c.l.b16 %v2410
        %v2780 = vunpack.c.h.b16 %v2410
        %v2781 = vunpack.c.l.b16 %v2411
        %v2782 = vunpack.c.h.b16 %v2411
        %v2783 = vunpack.c.l.b16 %v2412
        %v2784 = vunpack.c.h.b16 %v2412
        %v2785 = vunpack.c.l.b16 %v2413
        %v2786 = vunpack.c.h.b16 %v2413
        %v2787 = vunpack.c.l.b16 %v2414
        %v2788 = vunpack.c.h.b16 %v2414
        %v2789 = vunpack.c.l.b16 %v2415
        %v2790 = vunpack.c.h.b16 %v2415
        %v2791 = vunpack.c.l.b16 %v2416
        %v2792 = vunpack.c.h.b16 %v2416
        %v2793 = vunpack.c.l.b16 %v2417
        %v2794 = vunpack.c.h.b16 %v2417
        %v2795 = vunpack.c.l.b16 %v2418
        %v2796 = vunpack.c.h.b16 %v2418
        %v2797 = vunpack.c.l.b16 %v2419
        %v2798 = vunpack.c.h.b16 %v2419
        %v2799 = vunpack.c.l.b16 %v2420
        %v2800 = vunpack.c.h.b16 %v2420
        %v2801 = vunpack.c.l.b16 %v2421
        %v2802 = vunpack.c.h.b16 %v2421
        %v2803 = vunpack.c.l.b16 %v2422
        %v2804 = vunpack.c.h.b16 %v2422
        %v2805 = vunpack.c.l.b16 %v2423
        %v2806 = vunpack.c.h.b16 %v2423
        %v2807 = vunpack.c.l.b16 %v2424
        %v2808 = vunpack.c.h.b16 %v2424
        %v2809 = vunpack.c.l.b16 %v2425
        %v2810 = vunpack.c.h.b16 %v2425
        %v2811 = vunpack.c.l.b16 %v2426
        %v2812 = vunpack.c.h.b16 %v2426
        %v2813 = vunpack.c.l.b16 %v2427
        %v2814 = vunpack.c.h.b16 %v2427
        %v2815 = vunpack.c.l.b16 %v2428
        %v2816 = vunpack.c.h.b16 %v2428
        %v2817 = vunpack.c.l.b16 %v2429
        %v2818 = vunpack.c.h.b16 %v2429
        %v2819 = vunpack.c.l.b16 %v2430
        %v2820 = vunpack.c.h.b16 %v2430
        %v2821 = vunpack.c.l.b16 %v2431
        %v2822 = vunpack.c.h.b16 %v2431
        %v2823 = vunpack.c.l.b16 %v2432
        %v2824 = vunpack.c.h.b16 %v2432
        %v2825 = vunpack.c.l.b16 %v2433
        %v2826 = vunpack.c.h.b16 %v2433
        %v2827 = vunpack.c.l.b16 %v2434
        %v2828 = vunpack.c.h.b16 %v2434
        %v2829 = vunpack.c.l.b16 %v2435
        %v2830 = vunpack.c.h.b16 %v2435
        %v2831 = vunpack.c.l.b16 %v2436
        %v2832 = vunpack.c.h.b16 %v2436
        %v2833 = vunpack.c.l.b16 %v2437
        %v2834 = vunpack.c.h.b16 %v2437
        %v2835 = vunpack.c.l.b16 %v2438
        %v2836 = vunpack.c.h.b16 %v2438
        %v2837 = vunpack.c.l.b16 %v2439
        %v2838 = vunpack.c.h.b16 %v2439
        %v2839 = vunpack.c.l.b16 %v2440
        %v2840 = vunpack.c.h.b16 %v2440
        %v2841 = vunpack.c.l.b16 %v2441
        %v2842 = vunpack.c.h.b16 %v2441
        %v2843 = vunpack.c.l.b16 %v2442
        %v2844 = vunpack.c.h.b16 %v2442
        %v2845 = vpack.c.b16 %v2593, %v2589
        %v2846 = vpack.c.b16 %v2594, %v2590
        %v2847 = vpack.c.b16 %v2595, %v2591
        %v2848 = vpack.c.b16 %v2596, %v2592
        %v2849 = vpack.c.b16 %v2601, %v2597
        %v2850 = vpack.c.b16 %v2602, %v2598
        %v2851 = vpack.c.b16 %v2603, %v2599
        %v2852 = vpack.c.b16 %v2604, %v2600
        %v2853 = vpack.c.b16 %v2609, %v2605
        %v2854 = vpack.c.b16 %v2610, %v2606
        %v2855 = vpack.c.b16 %v2611, %v2607
        %v2856 = vpack.c.b16 %v2612, %v2608
        %v2857 = vpack.c.b16 %v2617, %v2613
        %v2858 = vpack.c.b16 %v2618, %v2614
        %v2859 = vpack.c.b16 %v2619, %v2615
        %v2860 = vpack.c.b16 %v2620, %v2616
        %v2861 = vpack.c.b16 %v2625, %v2621
        %v2862 = vpack.c.b16 %v2626, %v2622
        %v2863 = vpack.c.b16 %v2627, %v2623
        %v2864 = vpack.c.b16 %v2628, %v2624
        %v2865 = vpack.c.b16 %v2633, %v2629
        %v2866 = vpack.c.b16 %v2634, %v2630
        %v2867 = vpack.c.b16 %v2635, %v2631
        %v2868 = vpack.c.b16 %v2636, %v2632
        %v2869 = vpack.c.b16 %v2641, %v2637
        %v2870 = vpack.c.b16 %v2642, %v2638
        %v2871 = vpack.c.b16 %v2643, %v2639
        %v2872 = vpack.c.b16 %v2644, %v2640
        %v2873 = vpack.c.b16 %v2649, %v2645
        %v2874 = vpack.c.b16 %v2650, %v2646
        %v2875 = vpack.c.b16 %v2651, %v2647
        %v2876 = vpack.c.b16 %v2652, %v2648
        %v2877 = vpack.c.b16 %v2657, %v2653
        %v2878 = vpack.c.b16 %v2658, %v2654
        %v2879 = vpack.c.b16 %v2659, %v2655
        %v2880 = vpack.c.b16 %v2660, %v2656
        %v2881 = vpack.c.b16 %v2665, %v2661
        %v2882 = vpack.c.b16 %v2666, %v2662
        %v2883 = vpack.c.b16 %v2667, %v2663
        %v2884 = vpack.c.b16 %v2668, %v2664
        %v2885 = vpack.c.b16 %v2673, %v2669
        %v2886 = vpack.c.b16 %v2674, %v2670
        %v2887 = vpack.c.b16 %v2675, %v2671
        %v2888 = vpack.c.b16 %v2676, %v2672
        %v2889 = vpack.c.b16 %v2681, %v2677
        %v2890 = vpack.c.b16 %v2682, %v2678
        %v2891 = vpack.c.b16 %v2683, %v2679
        %v2892 = vpack.c.b16 %v2684, %v2680
        %v2893 = vpack.c.b16 %v2689, %v2685
        %v2894 = vpack.c.b16 %v2690, %v2686
        %v2895 = vpack.c.b16 %v2691, %v2687
        %v2896 = vpack.c.b16 %v2692, %v2688
        %v2897 = vpack.c.b16 %v2697, %v2693
        %v2898 = vpack.c.b16 %v2698, %v2694
        %v2899 = vpack.c.b16 %v2699, %v2695
        %v2900 = vpack.c.b16 %v2700, %v2696
        %v2901 = vpack.c.b16 %v2705, %v2701
        %v2902 = vpack.c.b16 %v2706, %v2702
        %v2903 = vpack.c.b16 %v2707, %v2703
        %v2904 = vpack.c.b16 %v2708, %v2704
        %v2905 = vpack.c.b16 %v2713, %v2709
        %v2906 = vpack.c.b16 %v2714, %v2710
        %v2907 = vpack.c.b16 %v2715, %v2711
        %v2908 = vpack.c.b16 %v2716, %v2712
        %v2909 = vpack.c.b16 %v2721, %v2717
        %v2910 = vpack.c.b16 %v2722, %v2718
        %v2911 = vpack.c.b16 %v2723, %v2719
        %v2912 = vpack.c.b16 %v2724, %v2720
        %v2913 = vpack.c.b16 %v2729, %v2725
        %v2914 = vpack.c.b16 %v2730, %v2726
        %v2915 = vpack.c.b16 %v2731, %v2727
        %v2916 = vpack.c.b16 %v2732, %v2728
        %v2917 = vpack.c.b16 %v2737, %v2733
        %v2918 = vpack.c.b16 %v2738, %v2734
        %v2919 = vpack.c.b16 %v2739, %v2735
        %v2920 = vpack.c.b16 %v2740, %v2736
        %v2921 = vpack.c.b16 %v2745, %v2741
        %v2922 = vpack.c.b16 %v2746, %v2742
        %v2923 = vpack.c.b16 %v2747, %v2743
        %v2924 = vpack.c.b16 %v2748, %v2744
        %v2925 = vpack.c.b16 %v2753, %v2749
        %v2926 = vpack.c.b16 %v2754, %v2750
        %v2927 = vpack.c.b16 %v2755, %v2751
        %v2928 = vpack.c.b16 %v2756, %v2752
        %v2929 = vpack.c.b16 %v2761, %v2757
        %v2930 = vpack.c.b16 %v2762, %v2758
        %v2931 = vpack.c.b16 %v2763, %v2759
        %v2932 = vpack.c.b16 %v2764, %v2760
        %v2933 = vpack.c.b16 %v2769, %v2765
        %v2934 = vpack.c.b16 %v2770, %v2766
        %v2935 = vpack.c.b16 %v2771, %v2767
        %v2936 = vpack.c.b16 %v2772, %v2768
        %v2937 = vpack.c.b16 %v2777, %v2773
        %v2938 = vpack.c.b16 %v2778, %v2774
        %v2939 = vpack.c.b16 %v2779, %v2775
        %v2940 = vpack.c.b16 %v2780, %v2776
        %v2941 = vpack.c.b16 %v2785, %v2781
        %v2942 = vpack.c.b16 %v2786, %v2782
        %v2943 = vpack.c.b16 %v2787, %v2783
        %v2944 = vpack.c.b16 %v2788, %v2784
        %v2945 = vpack.c.b16 %v2793, %v2789
        %v2946 = vpack.c.b16 %v2794, %v2790
        %v2947 = vpack.c.b16 %v2795, %v2791
        %v2948 = vpack.c.b16 %v2796, %v2792
        %v2949 = vpack.c.b16 %v2801, %v2797
        %v2950 = vpack.c.b16 %v2802, %v2798
        %v2951 = vpack.c.b16 %v2803, %v2799
        %v2952 = vpack.c.b16 %v2804, %v2800
        %v2953 = vpack.c.b16 %v2809, %v2805
        %v2954 = vpack.c.b16 %v2810, %v2806
        %v2955 = vpack.c.b16 %v2811, %v2807
        %v2956 = vpack.c.b16 %v2812, %v2808
        %v2957 = vpack.c.b16 %v2817, %v2813
        %v2958 = vpack.c.b16 %v2818, %v2814
        %v2959 = vpack.c.b16 %v2819, %v2815
        %v2960 = vpack.c.b16 %v2820, %v2816
        %v2961 = vpack.c.b16 %v2825, %v2821
        %v2962 = vpack.c.b16 %v2826, %v2822
        %v2963 = vpack.c.b16 %v2827, %v2823
        %v2964 = vpack.c.b16 %v2828, %v2824
        %v2965 = vpack.c.b16 %v2833, %v2829
        %v2966 = vpack.c.b16 %v2834, %v2830
        %v2967 = vpack.c.b16 %v2835, %v2831
        %v2968 = vpack.c.b16 %v2836, %v2832
        %v2969 = vpack.c.b16 %v2841, %v2837
        %v2970 = vpack.c.b16 %v2842, %v2838
        %v2971 = vpack.c.b16 %v2843, %v2839
        %v2972 = vpack.c.b16 %v2844, %v2840
        %3101 = vmatprep.subr.bf16.mxu0 %v2846
        %3102 = vmatpush1.bf16.msra.mxu0 %v2845
        %3103 = vmatprep.subr.bf16.mxu0 %v2850
        %3104 = vmatpush1.bf16.msra.mxu0 %v2849
        %3105 = vmatprep.subr.bf16.mxu0 %v2854
        %3106 = vmatpush1.bf16.msra.mxu0 %v2853
        %3107 = vmatprep.subr.bf16.mxu0 %v2858
        %3108 = vmatpush1.bf16.msra.mxu0 %v2857
        %3109 = vmatprep.subr.bf16.mxu0 %v2862
        %3110 = vmatpush1.bf16.msra.mxu0 %v2861
        %3111 = vmatprep.subr.bf16.mxu0 %v2866
        %3112 = vmatpush1.bf16.msra.mxu0 %v2865
        %3113 = vmatprep.subr.bf16.mxu0 %v2870
        %3114 = vmatpush1.bf16.msra.mxu0 %v2869
        %3115 = vmatprep.subr.bf16.mxu0 %v2874
        %3116 = vmatpush1.bf16.msra.mxu0 %v2873
        %3117 = vmatprep.subr.bf16.mxu0 %v2878
        %3118 = vmatpush1.bf16.msra.mxu0 %v2877
        %3119 = vmatprep.subr.bf16.mxu0 %v2882
        %3120 = vmatpush1.bf16.msra.mxu0 %v2881
        %3121 = vmatprep.subr.bf16.mxu0 %v2886
        %3122 = vmatpush1.bf16.msra.mxu0 %v2885
        %3123 = vmatprep.subr.bf16.mxu0 %v2890
        %3124 = vmatpush1.bf16.msra.mxu0 %v2889
        %3125 = vmatprep.subr.bf16.mxu0 %v2894
        %3126 = vmatpush1.bf16.msra.mxu0 %v2893
        %3127 = vmatprep.subr.bf16.mxu0 %v2898
        %3128 = vmatpush1.bf16.msra.mxu0 %v2897
        %3129 = vmatprep.subr.bf16.mxu0 %v2902
        %3130 = vmatpush1.bf16.msra.mxu0 %v2901
        %3131 = vmatprep.subr.bf16.mxu0 %v2906
        %3132 = vmatpush1.bf16.msra.mxu0 %v2905
        %3133 = vmatprep.mubr.bf16.mxu0 %v2454
        %3134 = vmatmul.mubr.bf16.gmra.mrb[0].mxu0 %v2453
        %v3135 = vpop.f32.mrb[0].mxu0
        %v3136 = vadd.f32 0.0, %v3135
        %v3137 = vpop.f32.mrb[0].mxu0
        %v3138 = vadd.f32 0.0, %v3137
        %v3139 = vpop.f32.mrb[0].mxu0
        %v3140 = vpop.f32.mrb[0].mxu0
        %3141 = vdwg.mxu0
        %3142 = vmatprep.subr.bf16.mxu0 %v2910
        %3143 = vmatpush1.bf16.msra.mxu0 %v2909
        %3144 = vmatprep.subr.bf16.mxu0 %v2914
        %3145 = vmatpush1.bf16.msra.mxu0 %v2913
        %3146 = vmatprep.subr.bf16.mxu0 %v2918
        %3147 = vmatpush1.bf16.msra.mxu0 %v2917
        %3148 = vmatprep.subr.bf16.mxu0 %v2922
        %3149 = vmatpush1.bf16.msra.mxu0 %v2921
        %3150 = vmatprep.subr.bf16.mxu0 %v2926
        %3151 = vmatpush1.bf16.msra.mxu0 %v2925
        %3152 = vmatprep.subr.bf16.mxu0 %v2930
        %3153 = vmatpush1.bf16.msra.mxu0 %v2929
        %3154 = vmatprep.subr.bf16.mxu0 %v2934
        %3155 = vmatpush1.bf16.msra.mxu0 %v2933
        %3156 = vmatprep.subr.bf16.mxu0 %v2938
        %3157 = vmatpush1.bf16.msra.mxu0 %v2937
        %3158 = vmatprep.subr.bf16.mxu0 %v2942
        %3159 = vmatpush1.bf16.msra.mxu0 %v2941
        %3160 = vmatprep.subr.bf16.mxu0 %v2946
        %3161 = vmatpush1.bf16.msra.mxu0 %v2945
        %3162 = vmatprep.subr.bf16.mxu0 %v2950
        %3163 = vmatpush1.bf16.msra.mxu0 %v2949
        %3164 = vmatprep.subr.bf16.mxu0 %v2954
        %3165 = vmatpush1.bf16.msra.mxu0 %v2953
        %3166 = vmatprep.subr.bf16.mxu0 %v2958
        %3167 = vmatpush1.bf16.msra.mxu0 %v2957
        %3168 = vmatprep.subr.bf16.mxu0 %v2962
        %3169 = vmatpush1.bf16.msra.mxu0 %v2961
        %3170 = vmatprep.subr.bf16.mxu0 %v2966
        %3171 = vmatpush1.bf16.msra.mxu0 %v2965
        %3172 = vmatprep.subr.bf16.mxu0 %v2970
        %3173 = vmatpush1.bf16.msra.mxu0 %v2969
        %3174 = vmatprep.mubr.bf16.mxu0 %v2456
        %3175 = vmatmul.mubr.bf16.gmra.mrb[0].mxu0 %v2455
        %v3176 = vpop.f32.mrb[0].mxu0
        %v3177 = vadd.f32 %v3136, %v3176
        %v3178 = vpop.f32.mrb[0].mxu0
        %v3179 = vadd.f32 %v3138, %v3178
        %v3180 = vpop.f32.mrb[0].mxu0
        %v3181 = vpop.f32.mrb[0].mxu0
        %3182 = vdwg.mxu0
        %3183 = vmatprep.subr.bf16.mxu0 %v2848
        %3184 = vmatpush1.bf16.msra.mxu0 %v2847
        %3185 = vmatprep.subr.bf16.mxu0 %v2852
        %3186 = vmatpush1.bf16.msra.mxu0 %v2851
        %3187 = vmatprep.subr.bf16.mxu0 %v2856
        %3188 = vmatpush1.bf16.msra.mxu0 %v2855
        %3189 = vmatprep.subr.bf16.mxu0 %v2860
        %3190 = vmatpush1.bf16.msra.mxu0 %v2859
        %3191 = vmatprep.subr.bf16.mxu0 %v2864
        %3192 = vmatpush1.bf16.msra.mxu0 %v2863
        %3193 = vmatprep.subr.bf16.mxu0 %v2868
        %3194 = vmatpush1.bf16.msra.mxu0 %v2867
        %3195 = vmatprep.subr.bf16.mxu0 %v2872
        %3196 = vmatpush1.bf16.msra.mxu0 %v2871
        %3197 = vmatprep.subr.bf16.mxu0 %v2876
        %3198 = vmatpush1.bf16.msra.mxu0 %v2875
        %3199 = vmatprep.subr.bf16.mxu0 %v2880
        %3200 = vmatpush1.bf16.msra.mxu0 %v2879
        %3201 = vmatprep.subr.bf16.mxu0 %v2884
        %3202 = vmatpush1.bf16.msra.mxu0 %v2883
        %3203 = vmatprep.subr.bf16.mxu0 %v2888
        %3204 = vmatpush1.bf16.msra.mxu0 %v2887
        %3205 = vmatprep.subr.bf16.mxu0 %v2892
        %3206 = vmatpush1.bf16.msra.mxu0 %v2891
        %3207 = vmatprep.subr.bf16.mxu0 %v2896
        %3208 = vmatpush1.bf16.msra.mxu0 %v2895
        %3209 = vmatprep.subr.bf16.mxu0 %v2900
        %3210 = vmatpush1.bf16.msra.mxu0 %v2899
        %3211 = vmatprep.subr.bf16.mxu0 %v2904
        %3212 = vmatpush1.bf16.msra.mxu0 %v2903
        %3213 = vmatprep.subr.bf16.mxu0 %v2908
        %3214 = vmatpush1.bf16.msra.mxu0 %v2907
        %3215 = vmatprep.mubr.bf16.mxu0 %v2454
        %3216 = vmatmul.mubr.bf16.gmra.mrb[0].mxu0 %v2453
        %v3217 = vpop.f32.mrb[0].mxu0
        %v3218 = vadd.f32 0.0, %v3217
        %v3219 = vpop.f32.mrb[0].mxu0
        %v3220 = vadd.f32 0.0, %v3219
        %v3221 = vpop.f32.mrb[0].mxu0
        %v3222 = vpop.f32.mrb[0].mxu0
        %3223 = vdwg.mxu0
        %3224 = vmatprep.subr.bf16.mxu0 %v2912
        %3225 = vmatpush1.bf16.msra.mxu0 %v2911
        %3226 = vmatprep.subr.bf16.mxu0 %v2916
        %3227 = vmatpush1.bf16.msra.mxu0 %v2915
        %3228 = vmatprep.subr.bf16.mxu0 %v2920
        %3229 = vmatpush1.bf16.msra.mxu0 %v2919
        %3230 = vmatprep.subr.bf16.mxu0 %v2924
        %3231 = vmatpush1.bf16.msra.mxu0 %v2923
        %3232 = vmatprep.subr.bf16.mxu0 %v2928
        %3233 = vmatpush1.bf16.msra.mxu0 %v2927
        %3234 = vmatprep.subr.bf16.mxu0 %v2932
        %3235 = vmatpush1.bf16.msra.mxu0 %v2931
        %3236 = vmatprep.subr.bf16.mxu0 %v2936
        %3237 = vmatpush1.bf16.msra.mxu0 %v2935
        %3238 = vmatprep.subr.bf16.mxu0 %v2940
        %3239 = vmatpush1.bf16.msra.mxu0 %v2939
        %3240 = vmatprep.subr.bf16.mxu0 %v2944
        %3241 = vmatpush1.bf16.msra.mxu0 %v2943
        %3242 = vmatprep.subr.bf16.mxu0 %v2948
        %3243 = vmatpush1.bf16.msra.mxu0 %v2947
        %3244 = vmatprep.subr.bf16.mxu0 %v2952
        %3245 = vmatpush1.bf16.msra.mxu0 %v2951
        %3246 = vmatprep.subr.bf16.mxu0 %v2956
        %3247 = vmatpush1.bf16.msra.mxu0 %v2955
        %3248 = vmatprep.subr.bf16.mxu0 %v2960
        %3249 = vmatpush1.bf16.msra.mxu0 %v2959
        %3250 = vmatprep.subr.bf16.mxu0 %v2964
        %3251 = vmatpush1.bf16.msra.mxu0 %v2963
        %3252 = vmatprep.subr.bf16.mxu0 %v2968
        %3253 = vmatpush1.bf16.msra.mxu0 %v2967
        %3254 = vmatprep.subr.bf16.mxu0 %v2972
        %3255 = vmatpush1.bf16.msra.mxu0 %v2971
        %3256 = vmatprep.mubr.bf16.mxu0 %v2456
        %3257 = vmatmul.mubr.bf16.gmra.mrb[0].mxu0 %v2455
        %v3258 = vpop.f32.mrb[0].mxu0
        %v3259 = vadd.f32 %v3218, %v3258
        %v3260 = vpop.f32.mrb[0].mxu0
        %v3261 = vadd.f32 %v3220, %v3260
        %v3262 = vpop.f32.mrb[0].mxu0
        %v3263 = vpop.f32.mrb[0].mxu0
        %3264 = vdwg.mxu0
        %v3265 = vadd.f32 %v2224, %v3177
        %v3266 = vadd.f32 %v2226, %v3179
        %v3267 = vadd.f32 %v2306, %v3259
        %v3268 = vadd.f32 %v2308, %v3261
        %v3269 = vld [vmem:[#allocation9] sm:$0xf]
        %v3271 = vlaneseq
        %v3272 = vshrl.u32 %v3271, 7
        %v3273 = vsub.s32 0, %v3272
        %v3274 = vrot.slane %v3269, %v3273
        %v3275 = vlaneseq
        %v3276 = vshrl.u32 %v3275, 7
        %v3277 = vsub.s32 1, %v3276
        %v3278 = vrot.slane %v3269, %v3277
        %v3279 = vlaneseq
        %v3280 = vshrl.u32 %v3279, 7
        %v3281 = vsub.s32 2, %v3280
        %v3282 = vrot.slane %v3269, %v3281
        %v3283 = vlaneseq
        %v3284 = vshrl.u32 %v3283, 7
        %v3285 = vsub.s32 3, %v3284
        %v3286 = vrot.slane %v3269, %v3285
        %v3291 = vadd.f32 %v3265, %v3274
        %v3292 = vadd.f32 %v3266, %v3278
        %v3293 = vadd.f32 %v3267, %v3282
        %v3294 = vadd.f32 %v3268, %v3286
        %v3295 = vmax.f32 %v3291, 0.0
        %v3296 = vmax.f32 %v3292, 0.0
        %v3297 = vmax.f32 %v3293, 0.0
        %v3298 = vmax.f32 %v3294, 0.0
        %v3299 = vpack.c.bf16 %v3295, %v3295
        %v3300 = vpack.c.bf16 %v3296, %v3296
        %v3301 = vpack.c.bf16 %v3297, %v3297
        %v3302 = vpack.c.bf16 %v3298, %v3298
        %v3307 = vunpack.c.l.b16 %v3299
        %v3308 = vunpack.c.l.b16 %v3300
        %v3309 = vunpack.c.l.b16 %v3301
        %v3310 = vunpack.c.l.b16 %v3302
        %v3311 = vpack.c.b16 %v3308, %v3307
        %v3312 = vpack.c.b16 %v3310, %v3309
        %v3314 = vshrl.u32 %v3311, 16
        %v3316 = vrot.slane %v3314, 7
        %v3317 = vshll.u32 %v3311, 16
        %v3319 = vor.u32 %v3316, %v3317
        %v3321 = vshrl.u32 %v3312, 16
        %v3323 = vrot.slane %v3321, 7
        %v3324 = vshll.u32 %v3312, 16
        %v3326 = vor.u32 %v3323, %v3324
        %v3327 = vrot.slane %v3316, 4
        %v3328 = vrot.slane %v3323, 4
        %v3333 = vld [vmem:[#allocation3] sm:$0xff]
        %v3334 = vsel %vm374, %v3319, %v3333
        %3335 = vst [vmem:[#allocation3] sm:$0xff] %v3334
        %v3336 = vld [vmem:[#allocation3 + $0x8] sm:$0xff]
        %v3337 = vsel %vm374, %v3326, %v3336
        %3338 = vst [vmem:[#allocation3 + $0x8] sm:$0xff] %v3337
        %v3339 = vld [vmem:[#allocation3 + $0x10] sm:$0x11]
        %v3340 = vsel %vm302, %v3327, %v3339
        %3341 = vst [vmem:[#allocation3 + $0x10] sm:$0x11] %v3340
        %v3342 = vld [vmem:[#allocation3 + $0x18] sm:$0x11]
        %v3343 = vsel %vm302, %v3328, %v3342
        %3344 = vst [vmem:[#allocation3 + $0x18] sm:$0x11] %v3343
        %v3345 = vld [vmem:[#allocation3] sm:$0xff]
        %v3346 = vld [vmem:[#allocation3 + $0x8] sm:$0xff]
        %v3347 = vld [vmem:[#allocation10] sm:$0xff]
        %v3348 = vld [vmem:[#allocation10 + $0x8] sm:$0xff]
        %v3349 = vld [vmem:[#allocation10 + $0x10] sm:$0xff]
        %v3350 = vld [vmem:[#allocation10 + $0x18] sm:$0xff]
        %v3351 = vld [vmem:[#allocation10 + $0x20] sm:$0xff]
        %v3352 = vld [vmem:[#allocation10 + $0x28] sm:$0xff]
        %v3353 = vld [vmem:[#allocation10 + $0x30] sm:$0xff]
        %v3354 = vld [vmem:[#allocation10 + $0x38] sm:$0xff]
        %v3355 = vld [vmem:[#allocation10 + $0x40] sm:$0xff]
        %v3356 = vld [vmem:[#allocation10 + $0x48] sm:$0xff]
        %v3357 = vld [vmem:[#allocation10 + $0x50] sm:$0xff]
        %v3358 = vld [vmem:[#allocation10 + $0x58] sm:$0xff]
        %v3359 = vld [vmem:[#allocation10 + $0x60] sm:$0xff]
        %v3360 = vld [vmem:[#allocation10 + $0x68] sm:$0xff]
        %v3361 = vld [vmem:[#allocation10 + $0x70] sm:$0xff]
        %v3362 = vld [vmem:[#allocation10 + $0x78] sm:$0xff]
        %v3363 = vld [vmem:[#allocation10 + $0x80] sm:$0xff]
        %v3364 = vld [vmem:[#allocation10 + $0x88] sm:$0xff]
        %v3365 = vld [vmem:[#allocation10 + $0x90] sm:$0xff]
        %v3366 = vld [vmem:[#allocation10 + $0x98] sm:$0xff]
        %v3367 = vld [vmem:[#allocation10 + $0xa0] sm:$0xff]
        %v3368 = vld [vmem:[#allocation10 + $0xa8] sm:$0xff]
        %v3369 = vld [vmem:[#allocation10 + $0xb0] sm:$0xff]
        %v3370 = vld [vmem:[#allocation10 + $0xb8] sm:$0xff]
        %v3371 = vld [vmem:[#allocation10 + $0xc0] sm:$0xff]
        %v3372 = vld [vmem:[#allocation10 + $0xc8] sm:$0xff]
        %v3373 = vld [vmem:[#allocation10 + $0xd0] sm:$0xff]
        %v3374 = vld [vmem:[#allocation10 + $0xd8] sm:$0xff]
        %v3375 = vld [vmem:[#allocation10 + $0xe0] sm:$0xff]
        %v3376 = vld [vmem:[#allocation10 + $0xe8] sm:$0xff]
        %v3377 = vld [vmem:[#allocation10 + $0xf0] sm:$0xff]
        %v3378 = vld [vmem:[#allocation10 + $0xf8] sm:$0xff]
        %v3379 = vld [vmem:[#allocation10 + $0x100] sm:$0xff]
        %v3380 = vld [vmem:[#allocation10 + $0x108] sm:$0xff]
        %v3381 = vld [vmem:[#allocation10 + $0x110] sm:$0xff]
        %v3382 = vld [vmem:[#allocation10 + $0x118] sm:$0xff]
        %v3383 = vld [vmem:[#allocation10 + $0x120] sm:$0xff]
        %v3384 = vld [vmem:[#allocation10 + $0x128] sm:$0xff]
        %v3385 = vld [vmem:[#allocation10 + $0x130] sm:$0xff]
        %v3386 = vld [vmem:[#allocation10 + $0x138] sm:$0xff]
        %v3387 = vld [vmem:[#allocation10 + $0x140] sm:$0xff]
        %v3388 = vld [vmem:[#allocation10 + $0x148] sm:$0xff]
        %v3389 = vld [vmem:[#allocation10 + $0x150] sm:$0xff]
        %v3390 = vld [vmem:[#allocation10 + $0x158] sm:$0xff]
        %v3391 = vld [vmem:[#allocation10 + $0x160] sm:$0xff]
        %v3392 = vld [vmem:[#allocation10 + $0x168] sm:$0xff]
        %v3393 = vld [vmem:[#allocation10 + $0x170] sm:$0xff]
        %v3394 = vld [vmem:[#allocation10 + $0x178] sm:$0xff]
        %v3395 = vld [vmem:[#allocation10 + $0x180] sm:$0xff]
        %v3396 = vld [vmem:[#allocation10 + $0x188] sm:$0xff]
        %v3397 = vld [vmem:[#allocation10 + $0x190] sm:$0xff]
        %v3398 = vld [vmem:[#allocation10 + $0x198] sm:$0xff]
        %v3399 = vld [vmem:[#allocation10 + $0x1a0] sm:$0xff]
        %v3400 = vld [vmem:[#allocation10 + $0x1a8] sm:$0xff]
        %v3401 = vld [vmem:[#allocation10 + $0x1b0] sm:$0xff]
        %v3402 = vld [vmem:[#allocation10 + $0x1b8] sm:$0xff]
        %v3403 = vld [vmem:[#allocation10 + $0x1c0] sm:$0xff]
        %v3404 = vld [vmem:[#allocation10 + $0x1c8] sm:$0xff]
        %v3405 = vld [vmem:[#allocation10 + $0x1d0] sm:$0xff]
        %v3406 = vld [vmem:[#allocation10 + $0x1d8] sm:$0xff]
        %v3407 = vld [vmem:[#allocation10 + $0x1e0] sm:$0xff]
        %v3408 = vld [vmem:[#allocation10 + $0x1e8] sm:$0xff]
        %v3409 = vld [vmem:[#allocation10 + $0x1f0] sm:$0xff]
        %v3410 = vld [vmem:[#allocation10 + $0x1f8] sm:$0xff]
        %v3411 = vld [vmem:[#allocation10 + $0x200] sm:$0xff]
        %v3412 = vld [vmem:[#allocation10 + $0x208] sm:$0xff]
        %v3413 = vld [vmem:[#allocation10 + $0x210] sm:$0xff]
        %v3414 = vld [vmem:[#allocation10 + $0x218] sm:$0xff]
        %v3415 = vld [vmem:[#allocation10 + $0x220] sm:$0xff]
        %v3416 = vld [vmem:[#allocation10 + $0x228] sm:$0xff]
        %v3417 = vld [vmem:[#allocation10 + $0x230] sm:$0xff]
        %v3418 = vld [vmem:[#allocation10 + $0x238] sm:$0xff]
        %v3419 = vld [vmem:[#allocation10 + $0x240] sm:$0xff]
        %v3420 = vld [vmem:[#allocation10 + $0x248] sm:$0xff]
        %v3421 = vld [vmem:[#allocation10 + $0x250] sm:$0xff]
        %v3422 = vld [vmem:[#allocation10 + $0x258] sm:$0xff]
        %v3423 = vld [vmem:[#allocation10 + $0x260] sm:$0xff]
        %v3424 = vld [vmem:[#allocation10 + $0x268] sm:$0xff]
        %v3425 = vld [vmem:[#allocation10 + $0x270] sm:$0xff]
        %v3426 = vld [vmem:[#allocation10 + $0x278] sm:$0xff]
        %v3427 = vld [vmem:[#allocation10 + $0x280] sm:$0xff]
        %v3428 = vld [vmem:[#allocation10 + $0x288] sm:$0xff]
        %v3429 = vld [vmem:[#allocation10 + $0x290] sm:$0xff]
        %v3430 = vld [vmem:[#allocation10 + $0x298] sm:$0xff]
        %v3431 = vld [vmem:[#allocation10 + $0x2a0] sm:$0xff]
        %v3432 = vld [vmem:[#allocation10 + $0x2a8] sm:$0xff]
        %v3433 = vld [vmem:[#allocation10 + $0x2b0] sm:$0xff]
        %v3434 = vld [vmem:[#allocation10 + $0x2b8] sm:$0xff]
        %v3435 = vld [vmem:[#allocation10 + $0x2c0] sm:$0xff]
        %v3436 = vld [vmem:[#allocation10 + $0x2c8] sm:$0xff]
        %v3437 = vld [vmem:[#allocation10 + $0x2d0] sm:$0xff]
        %v3438 = vld [vmem:[#allocation10 + $0x2d8] sm:$0xff]
        %v3439 = vld [vmem:[#allocation10 + $0x2e0] sm:$0xff]
        %v3440 = vld [vmem:[#allocation10 + $0x2e8] sm:$0xff]
        %v3441 = vld [vmem:[#allocation10 + $0x2f0] sm:$0xff]
        %v3442 = vld [vmem:[#allocation10 + $0x2f8] sm:$0xff]
        %v3443 = vld [vmem:[#allocation10 + $0x300] sm:$0xff]
        %v3444 = vld [vmem:[#allocation10 + $0x308] sm:$0xff]
        %v3445 = vld [vmem:[#allocation10 + $0x310] sm:$0xff]
        %v3446 = vld [vmem:[#allocation10 + $0x318] sm:$0xff]
        %v3447 = vld [vmem:[#allocation10 + $0x320] sm:$0xff]
        %v3448 = vld [vmem:[#allocation10 + $0x328] sm:$0xff]
        %v3449 = vld [vmem:[#allocation10 + $0x330] sm:$0xff]
        %v3450 = vld [vmem:[#allocation10 + $0x338] sm:$0xff]
        %v3451 = vld [vmem:[#allocation10 + $0x340] sm:$0xff]
        %v3452 = vld [vmem:[#allocation10 + $0x348] sm:$0xff]
        %v3453 = vld [vmem:[#allocation10 + $0x350] sm:$0xff]
        %v3454 = vld [vmem:[#allocation10 + $0x358] sm:$0xff]
        %v3455 = vld [vmem:[#allocation10 + $0x360] sm:$0xff]
        %v3456 = vld [vmem:[#allocation10 + $0x368] sm:$0xff]
        %v3457 = vld [vmem:[#allocation10 + $0x370] sm:$0xff]
        %v3458 = vld [vmem:[#allocation10 + $0x378] sm:$0xff]
        %v3459 = vld [vmem:[#allocation10 + $0x380] sm:$0xff]
        %v3460 = vld [vmem:[#allocation10 + $0x388] sm:$0xff]
        %v3461 = vld [vmem:[#allocation10 + $0x390] sm:$0xff]
        %v3462 = vld [vmem:[#allocation10 + $0x398] sm:$0xff]
        %v3463 = vld [vmem:[#allocation10 + $0x3a0] sm:$0xff]
        %v3464 = vld [vmem:[#allocation10 + $0x3a8] sm:$0xff]
        %v3465 = vld [vmem:[#allocation10 + $0x3b0] sm:$0xff]
        %v3466 = vld [vmem:[#allocation10 + $0x3b8] sm:$0xff]
        %v3467 = vld [vmem:[#allocation10 + $0x3c0] sm:$0xff]
        %v3468 = vld [vmem:[#allocation10 + $0x3c8] sm:$0xff]
        %v3469 = vld [vmem:[#allocation10 + $0x3d0] sm:$0xff]
        %v3470 = vld [vmem:[#allocation10 + $0x3d8] sm:$0xff]
        %v3471 = vld [vmem:[#allocation10 + $0x3e0] sm:$0xff]
        %v3472 = vld [vmem:[#allocation10 + $0x3e8] sm:$0xff]
        %v3473 = vld [vmem:[#allocation10 + $0x3f0] sm:$0xff]
        %v3474 = vld [vmem:[#allocation10 + $0x3f8] sm:$0xff]
        %v3475 = vld [vmem:[#allocation3 + $0x10] sm:$0x11]
        %v3476 = vld [vmem:[#allocation3 + $0x18] sm:$0x11]
        %s3477 = scalar_lea.vmem [#allocation10], 1024
        %v3478 = vld [vmem:[%s3477] sm:$0xff]
        %v3479 = vld [vmem:[%s3477 + $0x8] sm:$0xff]
        %v3480 = vld [vmem:[%s3477 + $0x10] sm:$0xff]
        %v3481 = vld [vmem:[%s3477 + $0x18] sm:$0xff]
        %v3482 = vld [vmem:[%s3477 + $0x20] sm:$0xff]
        %v3483 = vld [vmem:[%s3477 + $0x28] sm:$0xff]
        %v3484 = vld [vmem:[%s3477 + $0x30] sm:$0xff]
        %v3485 = vld [vmem:[%s3477 + $0x38] sm:$0xff]
        %v3486 = vld [vmem:[%s3477 + $0x40] sm:$0xff]
        %v3487 = vld [vmem:[%s3477 + $0x48] sm:$0xff]
        %v3488 = vld [vmem:[%s3477 + $0x50] sm:$0xff]
        %v3489 = vld [vmem:[%s3477 + $0x58] sm:$0xff]
        %v3490 = vld [vmem:[%s3477 + $0x60] sm:$0xff]
        %v3491 = vld [vmem:[%s3477 + $0x68] sm:$0xff]
        %v3492 = vld [vmem:[%s3477 + $0x70] sm:$0xff]
        %v3493 = vld [vmem:[%s3477 + $0x78] sm:$0xff]
        %v3494 = vld [vmem:[%s3477 + $0x80] sm:$0xff]
        %v3495 = vld [vmem:[%s3477 + $0x88] sm:$0xff]
        %v3496 = vld [vmem:[%s3477 + $0x90] sm:$0xff]
        %v3497 = vld [vmem:[%s3477 + $0x98] sm:$0xff]
        %v3498 = vld [vmem:[%s3477 + $0xa0] sm:$0xff]
        %v3499 = vld [vmem:[%s3477 + $0xa8] sm:$0xff]
        %v3500 = vld [vmem:[%s3477 + $0xb0] sm:$0xff]
        %v3501 = vld [vmem:[%s3477 + $0xb8] sm:$0xff]
        %v3502 = vld [vmem:[%s3477 + $0xc0] sm:$0xff]
        %v3503 = vld [vmem:[%s3477 + $0xc8] sm:$0xff]
        %v3504 = vld [vmem:[%s3477 + $0xd0] sm:$0xff]
        %v3505 = vld [vmem:[%s3477 + $0xd8] sm:$0xff]
        %v3506 = vld [vmem:[%s3477 + $0xe0] sm:$0xff]
        %v3507 = vld [vmem:[%s3477 + $0xe8] sm:$0xff]
        %v3508 = vld [vmem:[%s3477 + $0xf0] sm:$0xff]
        %v3509 = vld [vmem:[%s3477 + $0xf8] sm:$0xff]
        %v3510 = vld [vmem:[%s3477 + $0x100] sm:$0xff]
        %v3511 = vld [vmem:[%s3477 + $0x108] sm:$0xff]
        %v3512 = vld [vmem:[%s3477 + $0x110] sm:$0xff]
        %v3513 = vld [vmem:[%s3477 + $0x118] sm:$0xff]
        %v3514 = vld [vmem:[%s3477 + $0x120] sm:$0xff]
        %v3515 = vld [vmem:[%s3477 + $0x128] sm:$0xff]
        %v3516 = vld [vmem:[%s3477 + $0x130] sm:$0xff]
        %v3517 = vld [vmem:[%s3477 + $0x138] sm:$0xff]
        %v3518 = vld [vmem:[%s3477 + $0x140] sm:$0xff]
        %v3519 = vld [vmem:[%s3477 + $0x148] sm:$0xff]
        %v3520 = vld [vmem:[%s3477 + $0x150] sm:$0xff]
        %v3521 = vld [vmem:[%s3477 + $0x158] sm:$0xff]
        %v3522 = vld [vmem:[%s3477 + $0x160] sm:$0xff]
        %v3523 = vld [vmem:[%s3477 + $0x168] sm:$0xff]
        %v3524 = vld [vmem:[%s3477 + $0x170] sm:$0xff]
        %v3525 = vld [vmem:[%s3477 + $0x178] sm:$0xff]
        %v3526 = vld [vmem:[%s3477 + $0x180] sm:$0xff]
        %v3527 = vld [vmem:[%s3477 + $0x188] sm:$0xff]
        %v3528 = vld [vmem:[%s3477 + $0x190] sm:$0xff]
        %v3529 = vld [vmem:[%s3477 + $0x198] sm:$0xff]
        %v3530 = vld [vmem:[%s3477 + $0x1a0] sm:$0xff]
        %v3531 = vld [vmem:[%s3477 + $0x1a8] sm:$0xff]
        %v3532 = vld [vmem:[%s3477 + $0x1b0] sm:$0xff]
        %v3533 = vld [vmem:[%s3477 + $0x1b8] sm:$0xff]
        %v3534 = vld [vmem:[%s3477 + $0x1c0] sm:$0xff]
        %v3535 = vld [vmem:[%s3477 + $0x1c8] sm:$0xff]
        %v3536 = vld [vmem:[%s3477 + $0x1d0] sm:$0xff]
        %v3537 = vld [vmem:[%s3477 + $0x1d8] sm:$0xff]
        %v3538 = vld [vmem:[%s3477 + $0x1e0] sm:$0xff]
        %v3539 = vld [vmem:[%s3477 + $0x1e8] sm:$0xff]
        %v3540 = vld [vmem:[%s3477 + $0x1f0] sm:$0xff]
        %v3541 = vld [vmem:[%s3477 + $0x1f8] sm:$0xff]
        %v3542 = vld [vmem:[%s3477 + $0x200] sm:$0xff]
        %v3543 = vld [vmem:[%s3477 + $0x208] sm:$0xff]
        %v3544 = vld [vmem:[%s3477 + $0x210] sm:$0xff]
        %v3545 = vld [vmem:[%s3477 + $0x218] sm:$0xff]
        %v3546 = vld [vmem:[%s3477 + $0x220] sm:$0xff]
        %v3547 = vld [vmem:[%s3477 + $0x228] sm:$0xff]
        %v3548 = vld [vmem:[%s3477 + $0x230] sm:$0xff]
        %v3549 = vld [vmem:[%s3477 + $0x238] sm:$0xff]
        %v3550 = vld [vmem:[%s3477 + $0x240] sm:$0xff]
        %v3551 = vld [vmem:[%s3477 + $0x248] sm:$0xff]
        %v3552 = vld [vmem:[%s3477 + $0x250] sm:$0xff]
        %v3553 = vld [vmem:[%s3477 + $0x258] sm:$0xff]
        %v3554 = vld [vmem:[%s3477 + $0x260] sm:$0xff]
        %v3555 = vld [vmem:[%s3477 + $0x268] sm:$0xff]
        %v3556 = vld [vmem:[%s3477 + $0x270] sm:$0xff]
        %v3557 = vld [vmem:[%s3477 + $0x278] sm:$0xff]
        %v3558 = vld [vmem:[%s3477 + $0x280] sm:$0xff]
        %v3559 = vld [vmem:[%s3477 + $0x288] sm:$0xff]
        %v3560 = vld [vmem:[%s3477 + $0x290] sm:$0xff]
        %v3561 = vld [vmem:[%s3477 + $0x298] sm:$0xff]
        %v3562 = vld [vmem:[%s3477 + $0x2a0] sm:$0xff]
        %v3563 = vld [vmem:[%s3477 + $0x2a8] sm:$0xff]
        %v3564 = vld [vmem:[%s3477 + $0x2b0] sm:$0xff]
        %v3565 = vld [vmem:[%s3477 + $0x2b8] sm:$0xff]
        %v3566 = vld [vmem:[%s3477 + $0x2c0] sm:$0xff]
        %v3567 = vld [vmem:[%s3477 + $0x2c8] sm:$0xff]
        %v3568 = vld [vmem:[%s3477 + $0x2d0] sm:$0xff]
        %v3569 = vld [vmem:[%s3477 + $0x2d8] sm:$0xff]
        %v3570 = vld [vmem:[%s3477 + $0x2e0] sm:$0xff]
        %v3571 = vld [vmem:[%s3477 + $0x2e8] sm:$0xff]
        %v3572 = vld [vmem:[%s3477 + $0x2f0] sm:$0xff]
        %v3573 = vld [vmem:[%s3477 + $0x2f8] sm:$0xff]
        %v3574 = vld [vmem:[%s3477 + $0x300] sm:$0xff]
        %v3575 = vld [vmem:[%s3477 + $0x308] sm:$0xff]
        %v3576 = vld [vmem:[%s3477 + $0x310] sm:$0xff]
        %v3577 = vld [vmem:[%s3477 + $0x318] sm:$0xff]
        %v3578 = vld [vmem:[%s3477 + $0x320] sm:$0xff]
        %v3579 = vld [vmem:[%s3477 + $0x328] sm:$0xff]
        %v3580 = vld [vmem:[%s3477 + $0x330] sm:$0xff]
        %v3581 = vld [vmem:[%s3477 + $0x338] sm:$0xff]
        %v3582 = vld [vmem:[%s3477 + $0x340] sm:$0xff]
        %v3583 = vld [vmem:[%s3477 + $0x348] sm:$0xff]
        %v3584 = vld [vmem:[%s3477 + $0x350] sm:$0xff]
        %v3585 = vld [vmem:[%s3477 + $0x358] sm:$0xff]
        %v3586 = vld [vmem:[%s3477 + $0x360] sm:$0xff]
        %v3587 = vld [vmem:[%s3477 + $0x368] sm:$0xff]
        %v3588 = vld [vmem:[%s3477 + $0x370] sm:$0xff]
        %v3589 = vld [vmem:[%s3477 + $0x378] sm:$0xff]
        %v3590 = vld [vmem:[%s3477 + $0x380] sm:$0xff]
        %v3591 = vld [vmem:[%s3477 + $0x388] sm:$0xff]
        %v3592 = vld [vmem:[%s3477 + $0x390] sm:$0xff]
        %v3593 = vld [vmem:[%s3477 + $0x398] sm:$0xff]
        %v3594 = vld [vmem:[%s3477 + $0x3a0] sm:$0xff]
        %v3595 = vld [vmem:[%s3477 + $0x3a8] sm:$0xff]
        %v3596 = vld [vmem:[%s3477 + $0x3b0] sm:$0xff]
        %v3597 = vld [vmem:[%s3477 + $0x3b8] sm:$0xff]
        %v3598 = vld [vmem:[%s3477 + $0x3c0] sm:$0xff]
        %v3599 = vld [vmem:[%s3477 + $0x3c8] sm:$0xff]
        %v3600 = vld [vmem:[%s3477 + $0x3d0] sm:$0xff]
        %v3601 = vld [vmem:[%s3477 + $0x3d8] sm:$0xff]
        %v3602 = vld [vmem:[%s3477 + $0x3e0] sm:$0xff]
        %v3603 = vld [vmem:[%s3477 + $0x3e8] sm:$0xff]
        %v3604 = vld [vmem:[%s3477 + $0x3f0] sm:$0xff]
        %v3605 = vld [vmem:[%s3477 + $0x3f8] sm:$0xff]
        %v3610 = vunpack.c.l.b16 %v3345
        %v3611 = vunpack.c.h.b16 %v3345
        %v3612 = vunpack.c.l.b16 %v3346
        %v3613 = vunpack.c.h.b16 %v3346
        %v3614 = vunpack.c.l.b16 %v3475
        %v3615 = vunpack.c.h.b16 %v3475
        %v3616 = vunpack.c.l.b16 %v3476
        %v3617 = vunpack.c.h.b16 %v3476
        %v3618 = vpack.c.b16 %v3614, %v3610
        %v3619 = vpack.c.b16 %v3615, %v3611
        %v3620 = vpack.c.b16 %v3616, %v3612
        %v3621 = vpack.c.b16 %v3617, %v3613
        %v3623 = vshrl.u32 %v3618, 16
        %v3625 = vshll.u32 %v3618, 16
        %v3627 = vrot.slane %v3625, 1
        %v3628 = vor.u32 %v3623, %v3627
        %v3630 = vshrl.u32 %v3619, 16
        %v3632 = vshll.u32 %v3619, 16
        %v3634 = vrot.slane %v3632, 1
        %v3635 = vor.u32 %v3630, %v3634
        %v3637 = vshrl.u32 %v3620, 16
        %v3639 = vshll.u32 %v3620, 16
        %v3641 = vrot.slane %v3639, 1
        %v3642 = vor.u32 %v3637, %v3641
        %v3644 = vshrl.u32 %v3621, 16
        %v3646 = vshll.u32 %v3621, 16
        %v3648 = vrot.slane %v3646, 1
        %v3649 = vor.u32 %v3644, %v3648
        %v3782 = vunpack.c.l.b16 %v3478
        %v3783 = vunpack.c.h.b16 %v3478
        %v3784 = vunpack.c.l.b16 %v3479
        %v3785 = vunpack.c.h.b16 %v3479
        %v3786 = vunpack.c.l.b16 %v3480
        %v3787 = vunpack.c.h.b16 %v3480
        %v3788 = vunpack.c.l.b16 %v3481
        %v3789 = vunpack.c.h.b16 %v3481
        %v3790 = vunpack.c.l.b16 %v3482
        %v3791 = vunpack.c.h.b16 %v3482
        %v3792 = vunpack.c.l.b16 %v3483
        %v3793 = vunpack.c.h.b16 %v3483
        %v3794 = vunpack.c.l.b16 %v3484
        %v3795 = vunpack.c.h.b16 %v3484
        %v3796 = vunpack.c.l.b16 %v3485
        %v3797 = vunpack.c.h.b16 %v3485
        %v3798 = vunpack.c.l.b16 %v3486
        %v3799 = vunpack.c.h.b16 %v3486
        %v3800 = vunpack.c.l.b16 %v3487
        %v3801 = vunpack.c.h.b16 %v3487
        %v3802 = vunpack.c.l.b16 %v3488
        %v3803 = vunpack.c.h.b16 %v3488
        %v3804 = vunpack.c.l.b16 %v3489
        %v3805 = vunpack.c.h.b16 %v3489
        %v3806 = vunpack.c.l.b16 %v3490
        %v3807 = vunpack.c.h.b16 %v3490
        %v3808 = vunpack.c.l.b16 %v3491
        %v3809 = vunpack.c.h.b16 %v3491
        %v3810 = vunpack.c.l.b16 %v3492
        %v3811 = vunpack.c.h.b16 %v3492
        %v3812 = vunpack.c.l.b16 %v3493
        %v3813 = vunpack.c.h.b16 %v3493
        %v3814 = vunpack.c.l.b16 %v3494
        %v3815 = vunpack.c.h.b16 %v3494
        %v3816 = vunpack.c.l.b16 %v3495
        %v3817 = vunpack.c.h.b16 %v3495
        %v3818 = vunpack.c.l.b16 %v3496
        %v3819 = vunpack.c.h.b16 %v3496
        %v3820 = vunpack.c.l.b16 %v3497
        %v3821 = vunpack.c.h.b16 %v3497
        %v3822 = vunpack.c.l.b16 %v3498
        %v3823 = vunpack.c.h.b16 %v3498
        %v3824 = vunpack.c.l.b16 %v3499
        %v3825 = vunpack.c.h.b16 %v3499
        %v3826 = vunpack.c.l.b16 %v3500
        %v3827 = vunpack.c.h.b16 %v3500
        %v3828 = vunpack.c.l.b16 %v3501
        %v3829 = vunpack.c.h.b16 %v3501
        %v3830 = vunpack.c.l.b16 %v3502
        %v3831 = vunpack.c.h.b16 %v3502
        %v3832 = vunpack.c.l.b16 %v3503
        %v3833 = vunpack.c.h.b16 %v3503
        %v3834 = vunpack.c.l.b16 %v3504
        %v3835 = vunpack.c.h.b16 %v3504
        %v3836 = vunpack.c.l.b16 %v3505
        %v3837 = vunpack.c.h.b16 %v3505
        %v3838 = vunpack.c.l.b16 %v3506
        %v3839 = vunpack.c.h.b16 %v3506
        %v3840 = vunpack.c.l.b16 %v3507
        %v3841 = vunpack.c.h.b16 %v3507
        %v3842 = vunpack.c.l.b16 %v3508
        %v3843 = vunpack.c.h.b16 %v3508
        %v3844 = vunpack.c.l.b16 %v3509
        %v3845 = vunpack.c.h.b16 %v3509
        %v3846 = vunpack.c.l.b16 %v3510
        %v3847 = vunpack.c.h.b16 %v3510
        %v3848 = vunpack.c.l.b16 %v3511
        %v3849 = vunpack.c.h.b16 %v3511
        %v3850 = vunpack.c.l.b16 %v3512
        %v3851 = vunpack.c.h.b16 %v3512
        %v3852 = vunpack.c.l.b16 %v3513
        %v3853 = vunpack.c.h.b16 %v3513
        %v3854 = vunpack.c.l.b16 %v3514
        %v3855 = vunpack.c.h.b16 %v3514
        %v3856 = vunpack.c.l.b16 %v3515
        %v3857 = vunpack.c.h.b16 %v3515
        %v3858 = vunpack.c.l.b16 %v3516
        %v3859 = vunpack.c.h.b16 %v3516
        %v3860 = vunpack.c.l.b16 %v3517
        %v3861 = vunpack.c.h.b16 %v3517
        %v3862 = vunpack.c.l.b16 %v3518
        %v3863 = vunpack.c.h.b16 %v3518
        %v3864 = vunpack.c.l.b16 %v3519
        %v3865 = vunpack.c.h.b16 %v3519
        %v3866 = vunpack.c.l.b16 %v3520
        %v3867 = vunpack.c.h.b16 %v3520
        %v3868 = vunpack.c.l.b16 %v3521
        %v3869 = vunpack.c.h.b16 %v3521
        %v3870 = vunpack.c.l.b16 %v3522
        %v3871 = vunpack.c.h.b16 %v3522
        %v3872 = vunpack.c.l.b16 %v3523
        %v3873 = vunpack.c.h.b16 %v3523
        %v3874 = vunpack.c.l.b16 %v3524
        %v3875 = vunpack.c.h.b16 %v3524
        %v3876 = vunpack.c.l.b16 %v3525
        %v3877 = vunpack.c.h.b16 %v3525
        %v3878 = vunpack.c.l.b16 %v3526
        %v3879 = vunpack.c.h.b16 %v3526
        %v3880 = vunpack.c.l.b16 %v3527
        %v3881 = vunpack.c.h.b16 %v3527
        %v3882 = vunpack.c.l.b16 %v3528
        %v3883 = vunpack.c.h.b16 %v3528
        %v3884 = vunpack.c.l.b16 %v3529
        %v3885 = vunpack.c.h.b16 %v3529
        %v3886 = vunpack.c.l.b16 %v3530
        %v3887 = vunpack.c.h.b16 %v3530
        %v3888 = vunpack.c.l.b16 %v3531
        %v3889 = vunpack.c.h.b16 %v3531
        %v3890 = vunpack.c.l.b16 %v3532
        %v3891 = vunpack.c.h.b16 %v3532
        %v3892 = vunpack.c.l.b16 %v3533
        %v3893 = vunpack.c.h.b16 %v3533
        %v3894 = vunpack.c.l.b16 %v3534
        %v3895 = vunpack.c.h.b16 %v3534
        %v3896 = vunpack.c.l.b16 %v3535
        %v3897 = vunpack.c.h.b16 %v3535
        %v3898 = vunpack.c.l.b16 %v3536
        %v3899 = vunpack.c.h.b16 %v3536
        %v3900 = vunpack.c.l.b16 %v3537
        %v3901 = vunpack.c.h.b16 %v3537
        %v3902 = vunpack.c.l.b16 %v3538
        %v3903 = vunpack.c.h.b16 %v3538
        %v3904 = vunpack.c.l.b16 %v3539
        %v3905 = vunpack.c.h.b16 %v3539
        %v3906 = vunpack.c.l.b16 %v3540
        %v3907 = vunpack.c.h.b16 %v3540
        %v3908 = vunpack.c.l.b16 %v3541
        %v3909 = vunpack.c.h.b16 %v3541
        %v3910 = vunpack.c.l.b16 %v3542
        %v3911 = vunpack.c.h.b16 %v3542
        %v3912 = vunpack.c.l.b16 %v3543
        %v3913 = vunpack.c.h.b16 %v3543
        %v3914 = vunpack.c.l.b16 %v3544
        %v3915 = vunpack.c.h.b16 %v3544
        %v3916 = vunpack.c.l.b16 %v3545
        %v3917 = vunpack.c.h.b16 %v3545
        %v3918 = vunpack.c.l.b16 %v3546
        %v3919 = vunpack.c.h.b16 %v3546
        %v3920 = vunpack.c.l.b16 %v3547
        %v3921 = vunpack.c.h.b16 %v3547
        %v3922 = vunpack.c.l.b16 %v3548
        %v3923 = vunpack.c.h.b16 %v3548
        %v3924 = vunpack.c.l.b16 %v3549
        %v3925 = vunpack.c.h.b16 %v3549
        %v3926 = vunpack.c.l.b16 %v3550
        %v3927 = vunpack.c.h.b16 %v3550
        %v3928 = vunpack.c.l.b16 %v3551
        %v3929 = vunpack.c.h.b16 %v3551
        %v3930 = vunpack.c.l.b16 %v3552
        %v3931 = vunpack.c.h.b16 %v3552
        %v3932 = vunpack.c.l.b16 %v3553
        %v3933 = vunpack.c.h.b16 %v3553
        %v3934 = vunpack.c.l.b16 %v3554
        %v3935 = vunpack.c.h.b16 %v3554
        %v3936 = vunpack.c.l.b16 %v3555
        %v3937 = vunpack.c.h.b16 %v3555
        %v3938 = vunpack.c.l.b16 %v3556
        %v3939 = vunpack.c.h.b16 %v3556
        %v3940 = vunpack.c.l.b16 %v3557
        %v3941 = vunpack.c.h.b16 %v3557
        %v3942 = vunpack.c.l.b16 %v3558
        %v3943 = vunpack.c.h.b16 %v3558
        %v3944 = vunpack.c.l.b16 %v3559
        %v3945 = vunpack.c.h.b16 %v3559
        %v3946 = vunpack.c.l.b16 %v3560
        %v3947 = vunpack.c.h.b16 %v3560
        %v3948 = vunpack.c.l.b16 %v3561
        %v3949 = vunpack.c.h.b16 %v3561
        %v3950 = vunpack.c.l.b16 %v3562
        %v3951 = vunpack.c.h.b16 %v3562
        %v3952 = vunpack.c.l.b16 %v3563
        %v3953 = vunpack.c.h.b16 %v3563
        %v3954 = vunpack.c.l.b16 %v3564
        %v3955 = vunpack.c.h.b16 %v3564
        %v3956 = vunpack.c.l.b16 %v3565
        %v3957 = vunpack.c.h.b16 %v3565
        %v3958 = vunpack.c.l.b16 %v3566
        %v3959 = vunpack.c.h.b16 %v3566
        %v3960 = vunpack.c.l.b16 %v3567
        %v3961 = vunpack.c.h.b16 %v3567
        %v3962 = vunpack.c.l.b16 %v3568
        %v3963 = vunpack.c.h.b16 %v3568
        %v3964 = vunpack.c.l.b16 %v3569
        %v3965 = vunpack.c.h.b16 %v3569
        %v3966 = vunpack.c.l.b16 %v3570
        %v3967 = vunpack.c.h.b16 %v3570
        %v3968 = vunpack.c.l.b16 %v3571
        %v3969 = vunpack.c.h.b16 %v3571
        %v3970 = vunpack.c.l.b16 %v3572
        %v3971 = vunpack.c.h.b16 %v3572
        %v3972 = vunpack.c.l.b16 %v3573
        %v3973 = vunpack.c.h.b16 %v3573
        %v3974 = vunpack.c.l.b16 %v3574
        %v3975 = vunpack.c.h.b16 %v3574
        %v3976 = vunpack.c.l.b16 %v3575
        %v3977 = vunpack.c.h.b16 %v3575
        %v3978 = vunpack.c.l.b16 %v3576
        %v3979 = vunpack.c.h.b16 %v3576
        %v3980 = vunpack.c.l.b16 %v3577
        %v3981 = vunpack.c.h.b16 %v3577
        %v3982 = vunpack.c.l.b16 %v3578
        %v3983 = vunpack.c.h.b16 %v3578
        %v3984 = vunpack.c.l.b16 %v3579
        %v3985 = vunpack.c.h.b16 %v3579
        %v3986 = vunpack.c.l.b16 %v3580
        %v3987 = vunpack.c.h.b16 %v3580
        %v3988 = vunpack.c.l.b16 %v3581
        %v3989 = vunpack.c.h.b16 %v3581
        %v3990 = vunpack.c.l.b16 %v3582
        %v3991 = vunpack.c.h.b16 %v3582
        %v3992 = vunpack.c.l.b16 %v3583
        %v3993 = vunpack.c.h.b16 %v3583
        %v3994 = vunpack.c.l.b16 %v3584
        %v3995 = vunpack.c.h.b16 %v3584
        %v3996 = vunpack.c.l.b16 %v3585
        %v3997 = vunpack.c.h.b16 %v3585
        %v3998 = vunpack.c.l.b16 %v3586
        %v3999 = vunpack.c.h.b16 %v3586
        %v4000 = vunpack.c.l.b16 %v3587
        %v4001 = vunpack.c.h.b16 %v3587
        %v4002 = vunpack.c.l.b16 %v3588
        %v4003 = vunpack.c.h.b16 %v3588
        %v4004 = vunpack.c.l.b16 %v3589
        %v4005 = vunpack.c.h.b16 %v3589
        %v4006 = vunpack.c.l.b16 %v3590
        %v4007 = vunpack.c.h.b16 %v3590
        %v4008 = vunpack.c.l.b16 %v3591
        %v4009 = vunpack.c.h.b16 %v3591
        %v4010 = vunpack.c.l.b16 %v3592
        %v4011 = vunpack.c.h.b16 %v3592
        %v4012 = vunpack.c.l.b16 %v3593
        %v4013 = vunpack.c.h.b16 %v3593
        %v4014 = vunpack.c.l.b16 %v3594
        %v4015 = vunpack.c.h.b16 %v3594
        %v4016 = vunpack.c.l.b16 %v3595
        %v4017 = vunpack.c.h.b16 %v3595
        %v4018 = vunpack.c.l.b16 %v3596
        %v4019 = vunpack.c.h.b16 %v3596
        %v4020 = vunpack.c.l.b16 %v3597
        %v4021 = vunpack.c.h.b16 %v3597
        %v4022 = vunpack.c.l.b16 %v3598
        %v4023 = vunpack.c.h.b16 %v3598
        %v4024 = vunpack.c.l.b16 %v3599
        %v4025 = vunpack.c.h.b16 %v3599
        %v4026 = vunpack.c.l.b16 %v3600
        %v4027 = vunpack.c.h.b16 %v3600
        %v4028 = vunpack.c.l.b16 %v3601
        %v4029 = vunpack.c.h.b16 %v3601
        %v4030 = vunpack.c.l.b16 %v3602
        %v4031 = vunpack.c.h.b16 %v3602
        %v4032 = vunpack.c.l.b16 %v3603
        %v4033 = vunpack.c.h.b16 %v3603
        %v4034 = vunpack.c.l.b16 %v3604
        %v4035 = vunpack.c.h.b16 %v3604
        %v4036 = vunpack.c.l.b16 %v3605
        %v4037 = vunpack.c.h.b16 %v3605
        %v4038 = vpack.c.b16 %v3786, %v3782
        %v4039 = vpack.c.b16 %v3787, %v3783
        %v4040 = vpack.c.b16 %v3788, %v3784
        %v4041 = vpack.c.b16 %v3789, %v3785
        %v4042 = vpack.c.b16 %v3794, %v3790
        %v4043 = vpack.c.b16 %v3795, %v3791
        %v4044 = vpack.c.b16 %v3796, %v3792
        %v4045 = vpack.c.b16 %v3797, %v3793
        %v4046 = vpack.c.b16 %v3802, %v3798
        %v4047 = vpack.c.b16 %v3803, %v3799
        %v4048 = vpack.c.b16 %v3804, %v3800
        %v4049 = vpack.c.b16 %v3805, %v3801
        %v4050 = vpack.c.b16 %v3810, %v3806
        %v4051 = vpack.c.b16 %v3811, %v3807
        %v4052 = vpack.c.b16 %v3812, %v3808
        %v4053 = vpack.c.b16 %v3813, %v3809
        %v4054 = vpack.c.b16 %v3818, %v3814
        %v4055 = vpack.c.b16 %v3819, %v3815
        %v4056 = vpack.c.b16 %v3820, %v3816
        %v4057 = vpack.c.b16 %v3821, %v3817
        %v4058 = vpack.c.b16 %v3826, %v3822
        %v4059 = vpack.c.b16 %v3827, %v3823
        %v4060 = vpack.c.b16 %v3828, %v3824
        %v4061 = vpack.c.b16 %v3829, %v3825
        %v4062 = vpack.c.b16 %v3834, %v3830
        %v4063 = vpack.c.b16 %v3835, %v3831
        %v4064 = vpack.c.b16 %v3836, %v3832
        %v4065 = vpack.c.b16 %v3837, %v3833
        %v4066 = vpack.c.b16 %v3842, %v3838
        %v4067 = vpack.c.b16 %v3843, %v3839
        %v4068 = vpack.c.b16 %v3844, %v3840
        %v4069 = vpack.c.b16 %v3845, %v3841
        %v4070 = vpack.c.b16 %v3850, %v3846
        %v4071 = vpack.c.b16 %v3851, %v3847
        %v4072 = vpack.c.b16 %v3852, %v3848
        %v4073 = vpack.c.b16 %v3853, %v3849
        %v4074 = vpack.c.b16 %v3858, %v3854
        %v4075 = vpack.c.b16 %v3859, %v3855
        %v4076 = vpack.c.b16 %v3860, %v3856
        %v4077 = vpack.c.b16 %v3861, %v3857
        %v4078 = vpack.c.b16 %v3866, %v3862
        %v4079 = vpack.c.b16 %v3867, %v3863
        %v4080 = vpack.c.b16 %v3868, %v3864
        %v4081 = vpack.c.b16 %v3869, %v3865
        %v4082 = vpack.c.b16 %v3874, %v3870
        %v4083 = vpack.c.b16 %v3875, %v3871
        %v4084 = vpack.c.b16 %v3876, %v3872
        %v4085 = vpack.c.b16 %v3877, %v3873
        %v4086 = vpack.c.b16 %v3882, %v3878
        %v4087 = vpack.c.b16 %v3883, %v3879
        %v4088 = vpack.c.b16 %v3884, %v3880
        %v4089 = vpack.c.b16 %v3885, %v3881
        %v4090 = vpack.c.b16 %v3890, %v3886
        %v4091 = vpack.c.b16 %v3891, %v3887
        %v4092 = vpack.c.b16 %v3892, %v3888
        %v4093 = vpack.c.b16 %v3893, %v3889
        %v4094 = vpack.c.b16 %v3898, %v3894
        %v4095 = vpack.c.b16 %v3899, %v3895
        %v4096 = vpack.c.b16 %v3900, %v3896
        %v4097 = vpack.c.b16 %v3901, %v3897
        %v4098 = vpack.c.b16 %v3906, %v3902
        %v4099 = vpack.c.b16 %v3907, %v3903
        %v4100 = vpack.c.b16 %v3908, %v3904
        %v4101 = vpack.c.b16 %v3909, %v3905
        %v4102 = vpack.c.b16 %v3914, %v3910
        %v4103 = vpack.c.b16 %v3915, %v3911
        %v4104 = vpack.c.b16 %v3916, %v3912
        %v4105 = vpack.c.b16 %v3917, %v3913
        %v4106 = vpack.c.b16 %v3922, %v3918
        %v4107 = vpack.c.b16 %v3923, %v3919
        %v4108 = vpack.c.b16 %v3924, %v3920
        %v4109 = vpack.c.b16 %v3925, %v3921
        %v4110 = vpack.c.b16 %v3930, %v3926
        %v4111 = vpack.c.b16 %v3931, %v3927
        %v4112 = vpack.c.b16 %v3932, %v3928
        %v4113 = vpack.c.b16 %v3933, %v3929
        %v4114 = vpack.c.b16 %v3938, %v3934
        %v4115 = vpack.c.b16 %v3939, %v3935
        %v4116 = vpack.c.b16 %v3940, %v3936
        %v4117 = vpack.c.b16 %v3941, %v3937
        %v4118 = vpack.c.b16 %v3946, %v3942
        %v4119 = vpack.c.b16 %v3947, %v3943
        %v4120 = vpack.c.b16 %v3948, %v3944
        %v4121 = vpack.c.b16 %v3949, %v3945
        %v4122 = vpack.c.b16 %v3954, %v3950
        %v4123 = vpack.c.b16 %v3955, %v3951
        %v4124 = vpack.c.b16 %v3956, %v3952
        %v4125 = vpack.c.b16 %v3957, %v3953
        %v4126 = vpack.c.b16 %v3962, %v3958
        %v4127 = vpack.c.b16 %v3963, %v3959
        %v4128 = vpack.c.b16 %v3964, %v3960
        %v4129 = vpack.c.b16 %v3965, %v3961
        %v4130 = vpack.c.b16 %v3970, %v3966
        %v4131 = vpack.c.b16 %v3971, %v3967
        %v4132 = vpack.c.b16 %v3972, %v3968
        %v4133 = vpack.c.b16 %v3973, %v3969
        %v4134 = vpack.c.b16 %v3978, %v3974
        %v4135 = vpack.c.b16 %v3979, %v3975
        %v4136 = vpack.c.b16 %v3980, %v3976
        %v4137 = vpack.c.b16 %v3981, %v3977
        %v4138 = vpack.c.b16 %v3986, %v3982
        %v4139 = vpack.c.b16 %v3987, %v3983
        %v4140 = vpack.c.b16 %v3988, %v3984
        %v4141 = vpack.c.b16 %v3989, %v3985
        %v4142 = vpack.c.b16 %v3994, %v3990
        %v4143 = vpack.c.b16 %v3995, %v3991
        %v4144 = vpack.c.b16 %v3996, %v3992
        %v4145 = vpack.c.b16 %v3997, %v3993
        %v4146 = vpack.c.b16 %v4002, %v3998
        %v4147 = vpack.c.b16 %v4003, %v3999
        %v4148 = vpack.c.b16 %v4004, %v4000
        %v4149 = vpack.c.b16 %v4005, %v4001
        %v4150 = vpack.c.b16 %v4010, %v4006
        %v4151 = vpack.c.b16 %v4011, %v4007
        %v4152 = vpack.c.b16 %v4012, %v4008
        %v4153 = vpack.c.b16 %v4013, %v4009
        %v4154 = vpack.c.b16 %v4018, %v4014
        %v4155 = vpack.c.b16 %v4019, %v4015
        %v4156 = vpack.c.b16 %v4020, %v4016
        %v4157 = vpack.c.b16 %v4021, %v4017
        %v4158 = vpack.c.b16 %v4026, %v4022
        %v4159 = vpack.c.b16 %v4027, %v4023
        %v4160 = vpack.c.b16 %v4028, %v4024
        %v4161 = vpack.c.b16 %v4029, %v4025
        %v4162 = vpack.c.b16 %v4034, %v4030
        %v4163 = vpack.c.b16 %v4035, %v4031
        %v4164 = vpack.c.b16 %v4036, %v4032
        %v4165 = vpack.c.b16 %v4037, %v4033
        %4294 = vmatprep.subr.bf16.mxu0 %v4039
        %4295 = vmatpush1.bf16.msra.mxu0 %v4038
        %4296 = vmatprep.subr.bf16.mxu0 %v4043
        %4297 = vmatpush1.bf16.msra.mxu0 %v4042
        %4298 = vmatprep.subr.bf16.mxu0 %v4047
        %4299 = vmatpush1.bf16.msra.mxu0 %v4046
        %4300 = vmatprep.subr.bf16.mxu0 %v4051
        %4301 = vmatpush1.bf16.msra.mxu0 %v4050
        %4302 = vmatprep.subr.bf16.mxu0 %v4055
        %4303 = vmatpush1.bf16.msra.mxu0 %v4054
        %4304 = vmatprep.subr.bf16.mxu0 %v4059
        %4305 = vmatpush1.bf16.msra.mxu0 %v4058
        %4306 = vmatprep.subr.bf16.mxu0 %v4063
        %4307 = vmatpush1.bf16.msra.mxu0 %v4062
        %4308 = vmatprep.subr.bf16.mxu0 %v4067
        %4309 = vmatpush1.bf16.msra.mxu0 %v4066
        %4310 = vmatprep.subr.bf16.mxu0 %v4071
        %4311 = vmatpush1.bf16.msra.mxu0 %v4070
        %4312 = vmatprep.subr.bf16.mxu0 %v4075
        %4313 = vmatpush1.bf16.msra.mxu0 %v4074
        %4314 = vmatprep.subr.bf16.mxu0 %v4079
        %4315 = vmatpush1.bf16.msra.mxu0 %v4078
        %4316 = vmatprep.subr.bf16.mxu0 %v4083
        %4317 = vmatpush1.bf16.msra.mxu0 %v4082
        %4318 = vmatprep.subr.bf16.mxu0 %v4087
        %4319 = vmatpush1.bf16.msra.mxu0 %v4086
        %4320 = vmatprep.subr.bf16.mxu0 %v4091
        %4321 = vmatpush1.bf16.msra.mxu0 %v4090
        %4322 = vmatprep.subr.bf16.mxu0 %v4095
        %4323 = vmatpush1.bf16.msra.mxu0 %v4094
        %4324 = vmatprep.subr.bf16.mxu0 %v4099
        %4325 = vmatpush1.bf16.msra.mxu0 %v4098
        %4326 = vmatprep.mubr.bf16.mxu0 %v3635
        %4327 = vmatmul.mubr.bf16.gmra.mrb[0].mxu0 %v3628
        %v4328 = vpop.f32.mrb[0].mxu0
        %v4329 = vadd.f32 0.0, %v4328
        %v4330 = vpop.f32.mrb[0].mxu0
        %v4331 = vadd.f32 0.0, %v4330
        %v4332 = vpop.f32.mrb[0].mxu0
        %v4333 = vpop.f32.mrb[0].mxu0
        %4334 = vdwg.mxu0
        %4335 = vmatprep.subr.bf16.mxu0 %v4103
        %4336 = vmatpush1.bf16.msra.mxu0 %v4102
        %4337 = vmatprep.subr.bf16.mxu0 %v4107
        %4338 = vmatpush1.bf16.msra.mxu0 %v4106
        %4339 = vmatprep.subr.bf16.mxu0 %v4111
        %4340 = vmatpush1.bf16.msra.mxu0 %v4110
        %4341 = vmatprep.subr.bf16.mxu0 %v4115
        %4342 = vmatpush1.bf16.msra.mxu0 %v4114
        %4343 = vmatprep.subr.bf16.mxu0 %v4119
        %4344 = vmatpush1.bf16.msra.mxu0 %v4118
        %4345 = vmatprep.subr.bf16.mxu0 %v4123
        %4346 = vmatpush1.bf16.msra.mxu0 %v4122
        %4347 = vmatprep.subr.bf16.mxu0 %v4127
        %4348 = vmatpush1.bf16.msra.mxu0 %v4126
        %4349 = vmatprep.subr.bf16.mxu0 %v4131
        %4350 = vmatpush1.bf16.msra.mxu0 %v4130
        %4351 = vmatprep.subr.bf16.mxu0 %v4135
        %4352 = vmatpush1.bf16.msra.mxu0 %v4134
        %4353 = vmatprep.subr.bf16.mxu0 %v4139
        %4354 = vmatpush1.bf16.msra.mxu0 %v4138
        %4355 = vmatprep.subr.bf16.mxu0 %v4143
        %4356 = vmatpush1.bf16.msra.mxu0 %v4142
        %4357 = vmatprep.subr.bf16.mxu0 %v4147
        %4358 = vmatpush1.bf16.msra.mxu0 %v4146
        %4359 = vmatprep.subr.bf16.mxu0 %v4151
        %4360 = vmatpush1.bf16.msra.mxu0 %v4150
        %4361 = vmatprep.subr.bf16.mxu0 %v4155
        %4362 = vmatpush1.bf16.msra.mxu0 %v4154
        %4363 = vmatprep.subr.bf16.mxu0 %v4159
        %4364 = vmatpush1.bf16.msra.mxu0 %v4158
        %4365 = vmatprep.subr.bf16.mxu0 %v4163
        %4366 = vmatpush1.bf16.msra.mxu0 %v4162
        %4367 = vmatprep.mubr.bf16.mxu0 %v3649
        %4368 = vmatmul.mubr.bf16.gmra.mrb[0].mxu0 %v3642
        %v4369 = vpop.f32.mrb[0].mxu0
        %v4370 = vadd.f32 %v4329, %v4369
        %v4371 = vpop.f32.mrb[0].mxu0
        %v4372 = vadd.f32 %v4331, %v4371
        %v4373 = vpop.f32.mrb[0].mxu0
        %v4374 = vpop.f32.mrb[0].mxu0
        %4375 = vdwg.mxu0
        %4376 = vmatprep.subr.bf16.mxu0 %v4041
        %4377 = vmatpush1.bf16.msra.mxu0 %v4040
        %4378 = vmatprep.subr.bf16.mxu0 %v4045
        %4379 = vmatpush1.bf16.msra.mxu0 %v4044
        %4380 = vmatprep.subr.bf16.mxu0 %v4049
        %4381 = vmatpush1.bf16.msra.mxu0 %v4048
        %4382 = vmatprep.subr.bf16.mxu0 %v4053
        %4383 = vmatpush1.bf16.msra.mxu0 %v4052
        %4384 = vmatprep.subr.bf16.mxu0 %v4057
        %4385 = vmatpush1.bf16.msra.mxu0 %v4056
        %4386 = vmatprep.subr.bf16.mxu0 %v4061
        %4387 = vmatpush1.bf16.msra.mxu0 %v4060
        %4388 = vmatprep.subr.bf16.mxu0 %v4065
        %4389 = vmatpush1.bf16.msra.mxu0 %v4064
        %4390 = vmatprep.subr.bf16.mxu0 %v4069
        %4391 = vmatpush1.bf16.msra.mxu0 %v4068
        %4392 = vmatprep.subr.bf16.mxu0 %v4073
        %4393 = vmatpush1.bf16.msra.mxu0 %v4072
        %4394 = vmatprep.subr.bf16.mxu0 %v4077
        %4395 = vmatpush1.bf16.msra.mxu0 %v4076
        %4396 = vmatprep.subr.bf16.mxu0 %v4081
        %4397 = vmatpush1.bf16.msra.mxu0 %v4080
        %4398 = vmatprep.subr.bf16.mxu0 %v4085
        %4399 = vmatpush1.bf16.msra.mxu0 %v4084
        %4400 = vmatprep.subr.bf16.mxu0 %v4089
        %4401 = vmatpush1.bf16.msra.mxu0 %v4088
        %4402 = vmatprep.subr.bf16.mxu0 %v4093
        %4403 = vmatpush1.bf16.msra.mxu0 %v4092
        %4404 = vmatprep.subr.bf16.mxu0 %v4097
        %4405 = vmatpush1.bf16.msra.mxu0 %v4096
        %4406 = vmatprep.subr.bf16.mxu0 %v4101
        %4407 = vmatpush1.bf16.msra.mxu0 %v4100
        %4408 = vmatprep.mubr.bf16.mxu0 %v3635
        %4409 = vmatmul.mubr.bf16.gmra.mrb[0].mxu0 %v3628
        %v4410 = vpop.f32.mrb[0].mxu0
        %v4411 = vadd.f32 0.0, %v4410
        %v4412 = vpop.f32.mrb[0].mxu0
        %v4413 = vadd.f32 0.0, %v4412
        %v4414 = vpop.f32.mrb[0].mxu0
        %v4415 = vpop.f32.mrb[0].mxu0
        %4416 = vdwg.mxu0
        %4417 = vmatprep.subr.bf16.mxu0 %v4105
        %4418 = vmatpush1.bf16.msra.mxu0 %v4104
        %4419 = vmatprep.subr.bf16.mxu0 %v4109
        %4420 = vmatpush1.bf16.msra.mxu0 %v4108
        %4421 = vmatprep.subr.bf16.mxu0 %v4113
        %4422 = vmatpush1.bf16.msra.mxu0 %v4112
        %4423 = vmatprep.subr.bf16.mxu0 %v4117
        %4424 = vmatpush1.bf16.msra.mxu0 %v4116
        %4425 = vmatprep.subr.bf16.mxu0 %v4121
        %4426 = vmatpush1.bf16.msra.mxu0 %v4120
        %4427 = vmatprep.subr.bf16.mxu0 %v4125
        %4428 = vmatpush1.bf16.msra.mxu0 %v4124
        %4429 = vmatprep.subr.bf16.mxu0 %v4129
        %4430 = vmatpush1.bf16.msra.mxu0 %v4128
        %4431 = vmatprep.subr.bf16.mxu0 %v4133
        %4432 = vmatpush1.bf16.msra.mxu0 %v4132
        %4433 = vmatprep.subr.bf16.mxu0 %v4137
        %4434 = vmatpush1.bf16.msra.mxu0 %v4136
        %4435 = vmatprep.subr.bf16.mxu0 %v4141
        %4436 = vmatpush1.bf16.msra.mxu0 %v4140
        %4437 = vmatprep.subr.bf16.mxu0 %v4145
        %4438 = vmatpush1.bf16.msra.mxu0 %v4144
        %4439 = vmatprep.subr.bf16.mxu0 %v4149
        %4440 = vmatpush1.bf16.msra.mxu0 %v4148
        %4441 = vmatprep.subr.bf16.mxu0 %v4153
        %4442 = vmatpush1.bf16.msra.mxu0 %v4152
        %4443 = vmatprep.subr.bf16.mxu0 %v4157
        %4444 = vmatpush1.bf16.msra.mxu0 %v4156
        %4445 = vmatprep.subr.bf16.mxu0 %v4161
        %4446 = vmatpush1.bf16.msra.mxu0 %v4160
        %4447 = vmatprep.subr.bf16.mxu0 %v4165
        %4448 = vmatpush1.bf16.msra.mxu0 %v4164
        %4449 = vmatprep.mubr.bf16.mxu0 %v3649
        %4450 = vmatmul.mubr.bf16.gmra.mrb[0].mxu0 %v3642
        %v4451 = vpop.f32.mrb[0].mxu0
        %v4452 = vadd.f32 %v4411, %v4451
        %v4453 = vpop.f32.mrb[0].mxu0
        %v4454 = vadd.f32 %v4413, %v4453
        %v4455 = vpop.f32.mrb[0].mxu0
        %v4456 = vpop.f32.mrb[0].mxu0
        %4457 = vdwg.mxu0
        %v4458 = vpack.c.b16 %v3610, %v3610
        %v4459 = vpack.c.b16 %v3611, %v3611
        %v4460 = vpack.c.b16 %v3612, %v3612
        %v4461 = vpack.c.b16 %v3613, %v3613
        %v4594 = vunpack.c.l.b16 %v3347
        %v4595 = vunpack.c.h.b16 %v3347
        %v4596 = vunpack.c.l.b16 %v3348
        %v4597 = vunpack.c.h.b16 %v3348
        %v4598 = vunpack.c.l.b16 %v3349
        %v4599 = vunpack.c.h.b16 %v3349
        %v4600 = vunpack.c.l.b16 %v3350
        %v4601 = vunpack.c.h.b16 %v3350
        %v4602 = vunpack.c.l.b16 %v3351
        %v4603 = vunpack.c.h.b16 %v3351
        %v4604 = vunpack.c.l.b16 %v3352
        %v4605 = vunpack.c.h.b16 %v3352
        %v4606 = vunpack.c.l.b16 %v3353
        %v4607 = vunpack.c.h.b16 %v3353
        %v4608 = vunpack.c.l.b16 %v3354
        %v4609 = vunpack.c.h.b16 %v3354
        %v4610 = vunpack.c.l.b16 %v3355
        %v4611 = vunpack.c.h.b16 %v3355
        %v4612 = vunpack.c.l.b16 %v3356
        %v4613 = vunpack.c.h.b16 %v3356
        %v4614 = vunpack.c.l.b16 %v3357
        %v4615 = vunpack.c.h.b16 %v3357
        %v4616 = vunpack.c.l.b16 %v3358
        %v4617 = vunpack.c.h.b16 %v3358
        %v4618 = vunpack.c.l.b16 %v3359
        %v4619 = vunpack.c.h.b16 %v3359
        %v4620 = vunpack.c.l.b16 %v3360
        %v4621 = vunpack.c.h.b16 %v3360
        %v4622 = vunpack.c.l.b16 %v3361
        %v4623 = vunpack.c.h.b16 %v3361
        %v4624 = vunpack.c.l.b16 %v3362
        %v4625 = vunpack.c.h.b16 %v3362
        %v4626 = vunpack.c.l.b16 %v3363
        %v4627 = vunpack.c.h.b16 %v3363
        %v4628 = vunpack.c.l.b16 %v3364
        %v4629 = vunpack.c.h.b16 %v3364
        %v4630 = vunpack.c.l.b16 %v3365
        %v4631 = vunpack.c.h.b16 %v3365
        %v4632 = vunpack.c.l.b16 %v3366
        %v4633 = vunpack.c.h.b16 %v3366
        %v4634 = vunpack.c.l.b16 %v3367
        %v4635 = vunpack.c.h.b16 %v3367
        %v4636 = vunpack.c.l.b16 %v3368
        %v4637 = vunpack.c.h.b16 %v3368
        %v4638 = vunpack.c.l.b16 %v3369
        %v4639 = vunpack.c.h.b16 %v3369
        %v4640 = vunpack.c.l.b16 %v3370
        %v4641 = vunpack.c.h.b16 %v3370
        %v4642 = vunpack.c.l.b16 %v3371
        %v4643 = vunpack.c.h.b16 %v3371
        %v4644 = vunpack.c.l.b16 %v3372
        %v4645 = vunpack.c.h.b16 %v3372
        %v4646 = vunpack.c.l.b16 %v3373
        %v4647 = vunpack.c.h.b16 %v3373
        %v4648 = vunpack.c.l.b16 %v3374
        %v4649 = vunpack.c.h.b16 %v3374
        %v4650 = vunpack.c.l.b16 %v3375
        %v4651 = vunpack.c.h.b16 %v3375
        %v4652 = vunpack.c.l.b16 %v3376
        %v4653 = vunpack.c.h.b16 %v3376
        %v4654 = vunpack.c.l.b16 %v3377
        %v4655 = vunpack.c.h.b16 %v3377
        %v4656 = vunpack.c.l.b16 %v3378
        %v4657 = vunpack.c.h.b16 %v3378
        %v4658 = vunpack.c.l.b16 %v3379
        %v4659 = vunpack.c.h.b16 %v3379
        %v4660 = vunpack.c.l.b16 %v3380
        %v4661 = vunpack.c.h.b16 %v3380
        %v4662 = vunpack.c.l.b16 %v3381
        %v4663 = vunpack.c.h.b16 %v3381
        %v4664 = vunpack.c.l.b16 %v3382
        %v4665 = vunpack.c.h.b16 %v3382
        %v4666 = vunpack.c.l.b16 %v3383
        %v4667 = vunpack.c.h.b16 %v3383
        %v4668 = vunpack.c.l.b16 %v3384
        %v4669 = vunpack.c.h.b16 %v3384
        %v4670 = vunpack.c.l.b16 %v3385
        %v4671 = vunpack.c.h.b16 %v3385
        %v4672 = vunpack.c.l.b16 %v3386
        %v4673 = vunpack.c.h.b16 %v3386
        %v4674 = vunpack.c.l.b16 %v3387
        %v4675 = vunpack.c.h.b16 %v3387
        %v4676 = vunpack.c.l.b16 %v3388
        %v4677 = vunpack.c.h.b16 %v3388
        %v4678 = vunpack.c.l.b16 %v3389
        %v4679 = vunpack.c.h.b16 %v3389
        %v4680 = vunpack.c.l.b16 %v3390
        %v4681 = vunpack.c.h.b16 %v3390
        %v4682 = vunpack.c.l.b16 %v3391
        %v4683 = vunpack.c.h.b16 %v3391
        %v4684 = vunpack.c.l.b16 %v3392
        %v4685 = vunpack.c.h.b16 %v3392
        %v4686 = vunpack.c.l.b16 %v3393
        %v4687 = vunpack.c.h.b16 %v3393
        %v4688 = vunpack.c.l.b16 %v3394
        %v4689 = vunpack.c.h.b16 %v3394
        %v4690 = vunpack.c.l.b16 %v3395
        %v4691 = vunpack.c.h.b16 %v3395
        %v4692 = vunpack.c.l.b16 %v3396
        %v4693 = vunpack.c.h.b16 %v3396
        %v4694 = vunpack.c.l.b16 %v3397
        %v4695 = vunpack.c.h.b16 %v3397
        %v4696 = vunpack.c.l.b16 %v3398
        %v4697 = vunpack.c.h.b16 %v3398
        %v4698 = vunpack.c.l.b16 %v3399
        %v4699 = vunpack.c.h.b16 %v3399
        %v4700 = vunpack.c.l.b16 %v3400
        %v4701 = vunpack.c.h.b16 %v3400
        %v4702 = vunpack.c.l.b16 %v3401
        %v4703 = vunpack.c.h.b16 %v3401
        %v4704 = vunpack.c.l.b16 %v3402
        %v4705 = vunpack.c.h.b16 %v3402
        %v4706 = vunpack.c.l.b16 %v3403
        %v4707 = vunpack.c.h.b16 %v3403
        %v4708 = vunpack.c.l.b16 %v3404
        %v4709 = vunpack.c.h.b16 %v3404
        %v4710 = vunpack.c.l.b16 %v3405
        %v4711 = vunpack.c.h.b16 %v3405
        %v4712 = vunpack.c.l.b16 %v3406
        %v4713 = vunpack.c.h.b16 %v3406
        %v4714 = vunpack.c.l.b16 %v3407
        %v4715 = vunpack.c.h.b16 %v3407
        %v4716 = vunpack.c.l.b16 %v3408
        %v4717 = vunpack.c.h.b16 %v3408
        %v4718 = vunpack.c.l.b16 %v3409
        %v4719 = vunpack.c.h.b16 %v3409
        %v4720 = vunpack.c.l.b16 %v3410
        %v4721 = vunpack.c.h.b16 %v3410
        %v4722 = vunpack.c.l.b16 %v3411
        %v4723 = vunpack.c.h.b16 %v3411
        %v4724 = vunpack.c.l.b16 %v3412
        %v4725 = vunpack.c.h.b16 %v3412
        %v4726 = vunpack.c.l.b16 %v3413
        %v4727 = vunpack.c.h.b16 %v3413
        %v4728 = vunpack.c.l.b16 %v3414
        %v4729 = vunpack.c.h.b16 %v3414
        %v4730 = vunpack.c.l.b16 %v3415
        %v4731 = vunpack.c.h.b16 %v3415
        %v4732 = vunpack.c.l.b16 %v3416
        %v4733 = vunpack.c.h.b16 %v3416
        %v4734 = vunpack.c.l.b16 %v3417
        %v4735 = vunpack.c.h.b16 %v3417
        %v4736 = vunpack.c.l.b16 %v3418
        %v4737 = vunpack.c.h.b16 %v3418
        %v4738 = vunpack.c.l.b16 %v3419
        %v4739 = vunpack.c.h.b16 %v3419
        %v4740 = vunpack.c.l.b16 %v3420
        %v4741 = vunpack.c.h.b16 %v3420
        %v4742 = vunpack.c.l.b16 %v3421
        %v4743 = vunpack.c.h.b16 %v3421
        %v4744 = vunpack.c.l.b16 %v3422
        %v4745 = vunpack.c.h.b16 %v3422
        %v4746 = vunpack.c.l.b16 %v3423
        %v4747 = vunpack.c.h.b16 %v3423
        %v4748 = vunpack.c.l.b16 %v3424
        %v4749 = vunpack.c.h.b16 %v3424
        %v4750 = vunpack.c.l.b16 %v3425
        %v4751 = vunpack.c.h.b16 %v3425
        %v4752 = vunpack.c.l.b16 %v3426
        %v4753 = vunpack.c.h.b16 %v3426
        %v4754 = vunpack.c.l.b16 %v3427
        %v4755 = vunpack.c.h.b16 %v3427
        %v4756 = vunpack.c.l.b16 %v3428
        %v4757 = vunpack.c.h.b16 %v3428
        %v4758 = vunpack.c.l.b16 %v3429
        %v4759 = vunpack.c.h.b16 %v3429
        %v4760 = vunpack.c.l.b16 %v3430
        %v4761 = vunpack.c.h.b16 %v3430
        %v4762 = vunpack.c.l.b16 %v3431
        %v4763 = vunpack.c.h.b16 %v3431
        %v4764 = vunpack.c.l.b16 %v3432
        %v4765 = vunpack.c.h.b16 %v3432
        %v4766 = vunpack.c.l.b16 %v3433
        %v4767 = vunpack.c.h.b16 %v3433
        %v4768 = vunpack.c.l.b16 %v3434
        %v4769 = vunpack.c.h.b16 %v3434
        %v4770 = vunpack.c.l.b16 %v3435
        %v4771 = vunpack.c.h.b16 %v3435
        %v4772 = vunpack.c.l.b16 %v3436
        %v4773 = vunpack.c.h.b16 %v3436
        %v4774 = vunpack.c.l.b16 %v3437
        %v4775 = vunpack.c.h.b16 %v3437
        %v4776 = vunpack.c.l.b16 %v3438
        %v4777 = vunpack.c.h.b16 %v3438
        %v4778 = vunpack.c.l.b16 %v3439
        %v4779 = vunpack.c.h.b16 %v3439
        %v4780 = vunpack.c.l.b16 %v3440
        %v4781 = vunpack.c.h.b16 %v3440
        %v4782 = vunpack.c.l.b16 %v3441
        %v4783 = vunpack.c.h.b16 %v3441
        %v4784 = vunpack.c.l.b16 %v3442
        %v4785 = vunpack.c.h.b16 %v3442
        %v4786 = vunpack.c.l.b16 %v3443
        %v4787 = vunpack.c.h.b16 %v3443
        %v4788 = vunpack.c.l.b16 %v3444
        %v4789 = vunpack.c.h.b16 %v3444
        %v4790 = vunpack.c.l.b16 %v3445
        %v4791 = vunpack.c.h.b16 %v3445
        %v4792 = vunpack.c.l.b16 %v3446
        %v4793 = vunpack.c.h.b16 %v3446
        %v4794 = vunpack.c.l.b16 %v3447
        %v4795 = vunpack.c.h.b16 %v3447
        %v4796 = vunpack.c.l.b16 %v3448
        %v4797 = vunpack.c.h.b16 %v3448
        %v4798 = vunpack.c.l.b16 %v3449
        %v4799 = vunpack.c.h.b16 %v3449
        %v4800 = vunpack.c.l.b16 %v3450
        %v4801 = vunpack.c.h.b16 %v3450
        %v4802 = vunpack.c.l.b16 %v3451
        %v4803 = vunpack.c.h.b16 %v3451
        %v4804 = vunpack.c.l.b16 %v3452
        %v4805 = vunpack.c.h.b16 %v3452
        %v4806 = vunpack.c.l.b16 %v3453
        %v4807 = vunpack.c.h.b16 %v3453
        %v4808 = vunpack.c.l.b16 %v3454
        %v4809 = vunpack.c.h.b16 %v3454
        %v4810 = vunpack.c.l.b16 %v3455
        %v4811 = vunpack.c.h.b16 %v3455
        %v4812 = vunpack.c.l.b16 %v3456
        %v4813 = vunpack.c.h.b16 %v3456
        %v4814 = vunpack.c.l.b16 %v3457
        %v4815 = vunpack.c.h.b16 %v3457
        %v4816 = vunpack.c.l.b16 %v3458
        %v4817 = vunpack.c.h.b16 %v3458
        %v4818 = vunpack.c.l.b16 %v3459
        %v4819 = vunpack.c.h.b16 %v3459
        %v4820 = vunpack.c.l.b16 %v3460
        %v4821 = vunpack.c.h.b16 %v3460
        %v4822 = vunpack.c.l.b16 %v3461
        %v4823 = vunpack.c.h.b16 %v3461
        %v4824 = vunpack.c.l.b16 %v3462
        %v4825 = vunpack.c.h.b16 %v3462
        %v4826 = vunpack.c.l.b16 %v3463
        %v4827 = vunpack.c.h.b16 %v3463
        %v4828 = vunpack.c.l.b16 %v3464
        %v4829 = vunpack.c.h.b16 %v3464
        %v4830 = vunpack.c.l.b16 %v3465
        %v4831 = vunpack.c.h.b16 %v3465
        %v4832 = vunpack.c.l.b16 %v3466
        %v4833 = vunpack.c.h.b16 %v3466
        %v4834 = vunpack.c.l.b16 %v3467
        %v4835 = vunpack.c.h.b16 %v3467
        %v4836 = vunpack.c.l.b16 %v3468
        %v4837 = vunpack.c.h.b16 %v3468
        %v4838 = vunpack.c.l.b16 %v3469
        %v4839 = vunpack.c.h.b16 %v3469
        %v4840 = vunpack.c.l.b16 %v3470
        %v4841 = vunpack.c.h.b16 %v3470
        %v4842 = vunpack.c.l.b16 %v3471
        %v4843 = vunpack.c.h.b16 %v3471
        %v4844 = vunpack.c.l.b16 %v3472
        %v4845 = vunpack.c.h.b16 %v3472
        %v4846 = vunpack.c.l.b16 %v3473
        %v4847 = vunpack.c.h.b16 %v3473
        %v4848 = vunpack.c.l.b16 %v3474
        %v4849 = vunpack.c.h.b16 %v3474
        %v4850 = vpack.c.b16 %v4598, %v4594
        %v4851 = vpack.c.b16 %v4599, %v4595
        %v4852 = vpack.c.b16 %v4600, %v4596
        %v4853 = vpack.c.b16 %v4601, %v4597
        %v4854 = vpack.c.b16 %v4606, %v4602
        %v4855 = vpack.c.b16 %v4607, %v4603
        %v4856 = vpack.c.b16 %v4608, %v4604
        %v4857 = vpack.c.b16 %v4609, %v4605
        %v4858 = vpack.c.b16 %v4614, %v4610
        %v4859 = vpack.c.b16 %v4615, %v4611
        %v4860 = vpack.c.b16 %v4616, %v4612
        %v4861 = vpack.c.b16 %v4617, %v4613
        %v4862 = vpack.c.b16 %v4622, %v4618
        %v4863 = vpack.c.b16 %v4623, %v4619
        %v4864 = vpack.c.b16 %v4624, %v4620
        %v4865 = vpack.c.b16 %v4625, %v4621
        %v4866 = vpack.c.b16 %v4630, %v4626
        %v4867 = vpack.c.b16 %v4631, %v4627
        %v4868 = vpack.c.b16 %v4632, %v4628
        %v4869 = vpack.c.b16 %v4633, %v4629
        %v4870 = vpack.c.b16 %v4638, %v4634
        %v4871 = vpack.c.b16 %v4639, %v4635
        %v4872 = vpack.c.b16 %v4640, %v4636
        %v4873 = vpack.c.b16 %v4641, %v4637
        %v4874 = vpack.c.b16 %v4646, %v4642
        %v4875 = vpack.c.b16 %v4647, %v4643
        %v4876 = vpack.c.b16 %v4648, %v4644
        %v4877 = vpack.c.b16 %v4649, %v4645
        %v4878 = vpack.c.b16 %v4654, %v4650
        %v4879 = vpack.c.b16 %v4655, %v4651
        %v4880 = vpack.c.b16 %v4656, %v4652
        %v4881 = vpack.c.b16 %v4657, %v4653
        %v4882 = vpack.c.b16 %v4662, %v4658
        %v4883 = vpack.c.b16 %v4663, %v4659
        %v4884 = vpack.c.b16 %v4664, %v4660
        %v4885 = vpack.c.b16 %v4665, %v4661
        %v4886 = vpack.c.b16 %v4670, %v4666
        %v4887 = vpack.c.b16 %v4671, %v4667
        %v4888 = vpack.c.b16 %v4672, %v4668
        %v4889 = vpack.c.b16 %v4673, %v4669
        %v4890 = vpack.c.b16 %v4678, %v4674
        %v4891 = vpack.c.b16 %v4679, %v4675
        %v4892 = vpack.c.b16 %v4680, %v4676
        %v4893 = vpack.c.b16 %v4681, %v4677
        %v4894 = vpack.c.b16 %v4686, %v4682
        %v4895 = vpack.c.b16 %v4687, %v4683
        %v4896 = vpack.c.b16 %v4688, %v4684
        %v4897 = vpack.c.b16 %v4689, %v4685
        %v4898 = vpack.c.b16 %v4694, %v4690
        %v4899 = vpack.c.b16 %v4695, %v4691
        %v4900 = vpack.c.b16 %v4696, %v4692
        %v4901 = vpack.c.b16 %v4697, %v4693
        %v4902 = vpack.c.b16 %v4702, %v4698
        %v4903 = vpack.c.b16 %v4703, %v4699
        %v4904 = vpack.c.b16 %v4704, %v4700
        %v4905 = vpack.c.b16 %v4705, %v4701
        %v4906 = vpack.c.b16 %v4710, %v4706
        %v4907 = vpack.c.b16 %v4711, %v4707
        %v4908 = vpack.c.b16 %v4712, %v4708
        %v4909 = vpack.c.b16 %v4713, %v4709
        %v4910 = vpack.c.b16 %v4718, %v4714
        %v4911 = vpack.c.b16 %v4719, %v4715
        %v4912 = vpack.c.b16 %v4720, %v4716
        %v4913 = vpack.c.b16 %v4721, %v4717
        %v4914 = vpack.c.b16 %v4726, %v4722
        %v4915 = vpack.c.b16 %v4727, %v4723
        %v4916 = vpack.c.b16 %v4728, %v4724
        %v4917 = vpack.c.b16 %v4729, %v4725
        %v4918 = vpack.c.b16 %v4734, %v4730
        %v4919 = vpack.c.b16 %v4735, %v4731
        %v4920 = vpack.c.b16 %v4736, %v4732
        %v4921 = vpack.c.b16 %v4737, %v4733
        %v4922 = vpack.c.b16 %v4742, %v4738
        %v4923 = vpack.c.b16 %v4743, %v4739
        %v4924 = vpack.c.b16 %v4744, %v4740
        %v4925 = vpack.c.b16 %v4745, %v4741
        %v4926 = vpack.c.b16 %v4750, %v4746
        %v4927 = vpack.c.b16 %v4751, %v4747
        %v4928 = vpack.c.b16 %v4752, %v4748
        %v4929 = vpack.c.b16 %v4753, %v4749
        %v4930 = vpack.c.b16 %v4758, %v4754
        %v4931 = vpack.c.b16 %v4759, %v4755
        %v4932 = vpack.c.b16 %v4760, %v4756
        %v4933 = vpack.c.b16 %v4761, %v4757
        %v4934 = vpack.c.b16 %v4766, %v4762
        %v4935 = vpack.c.b16 %v4767, %v4763
        %v4936 = vpack.c.b16 %v4768, %v4764
        %v4937 = vpack.c.b16 %v4769, %v4765
        %v4938 = vpack.c.b16 %v4774, %v4770
        %v4939 = vpack.c.b16 %v4775, %v4771
        %v4940 = vpack.c.b16 %v4776, %v4772
        %v4941 = vpack.c.b16 %v4777, %v4773
        %v4942 = vpack.c.b16 %v4782, %v4778
        %v4943 = vpack.c.b16 %v4783, %v4779
        %v4944 = vpack.c.b16 %v4784, %v4780
        %v4945 = vpack.c.b16 %v4785, %v4781
        %v4946 = vpack.c.b16 %v4790, %v4786
        %v4947 = vpack.c.b16 %v4791, %v4787
        %v4948 = vpack.c.b16 %v4792, %v4788
        %v4949 = vpack.c.b16 %v4793, %v4789
        %v4950 = vpack.c.b16 %v4798, %v4794
        %v4951 = vpack.c.b16 %v4799, %v4795
        %v4952 = vpack.c.b16 %v4800, %v4796
        %v4953 = vpack.c.b16 %v4801, %v4797
        %v4954 = vpack.c.b16 %v4806, %v4802
        %v4955 = vpack.c.b16 %v4807, %v4803
        %v4956 = vpack.c.b16 %v4808, %v4804
        %v4957 = vpack.c.b16 %v4809, %v4805
        %v4958 = vpack.c.b16 %v4814, %v4810
        %v4959 = vpack.c.b16 %v4815, %v4811
        %v4960 = vpack.c.b16 %v4816, %v4812
        %v4961 = vpack.c.b16 %v4817, %v4813
        %v4962 = vpack.c.b16 %v4822, %v4818
        %v4963 = vpack.c.b16 %v4823, %v4819
        %v4964 = vpack.c.b16 %v4824, %v4820
        %v4965 = vpack.c.b16 %v4825, %v4821
        %v4966 = vpack.c.b16 %v4830, %v4826
        %v4967 = vpack.c.b16 %v4831, %v4827
        %v4968 = vpack.c.b16 %v4832, %v4828
        %v4969 = vpack.c.b16 %v4833, %v4829
        %v4970 = vpack.c.b16 %v4838, %v4834
        %v4971 = vpack.c.b16 %v4839, %v4835
        %v4972 = vpack.c.b16 %v4840, %v4836
        %v4973 = vpack.c.b16 %v4841, %v4837
        %v4974 = vpack.c.b16 %v4846, %v4842
        %v4975 = vpack.c.b16 %v4847, %v4843
        %v4976 = vpack.c.b16 %v4848, %v4844
        %v4977 = vpack.c.b16 %v4849, %v4845
        %5106 = vmatprep.subr.bf16.mxu0 %v4851
        %5107 = vmatpush1.bf16.msra.mxu0 %v4850
        %5108 = vmatprep.subr.bf16.mxu0 %v4855
        %5109 = vmatpush1.bf16.msra.mxu0 %v4854
        %5110 = vmatprep.subr.bf16.mxu0 %v4859
        %5111 = vmatpush1.bf16.msra.mxu0 %v4858
        %5112 = vmatprep.subr.bf16.mxu0 %v4863
        %5113 = vmatpush1.bf16.msra.mxu0 %v4862
        %5114 = vmatprep.subr.bf16.mxu0 %v4867
        %5115 = vmatpush1.bf16.msra.mxu0 %v4866
        %5116 = vmatprep.subr.bf16.mxu0 %v4871
        %5117 = vmatpush1.bf16.msra.mxu0 %v4870
        %5118 = vmatprep.subr.bf16.mxu0 %v4875
        %5119 = vmatpush1.bf16.msra.mxu0 %v4874
        %5120 = vmatprep.subr.bf16.mxu0 %v4879
        %5121 = vmatpush1.bf16.msra.mxu0 %v4878
        %5122 = vmatprep.subr.bf16.mxu0 %v4883
        %5123 = vmatpush1.bf16.msra.mxu0 %v4882
        %5124 = vmatprep.subr.bf16.mxu0 %v4887
        %5125 = vmatpush1.bf16.msra.mxu0 %v4886
        %5126 = vmatprep.subr.bf16.mxu0 %v4891
        %5127 = vmatpush1.bf16.msra.mxu0 %v4890
        %5128 = vmatprep.subr.bf16.mxu0 %v4895
        %5129 = vmatpush1.bf16.msra.mxu0 %v4894
        %5130 = vmatprep.subr.bf16.mxu0 %v4899
        %5131 = vmatpush1.bf16.msra.mxu0 %v4898
        %5132 = vmatprep.subr.bf16.mxu0 %v4903
        %5133 = vmatpush1.bf16.msra.mxu0 %v4902
        %5134 = vmatprep.subr.bf16.mxu0 %v4907
        %5135 = vmatpush1.bf16.msra.mxu0 %v4906
        %5136 = vmatprep.subr.bf16.mxu0 %v4911
        %5137 = vmatpush1.bf16.msra.mxu0 %v4910
        %5138 = vmatprep.mubr.bf16.mxu0 %v4459
        %5139 = vmatmul.mubr.bf16.gmra.mrb[0].mxu0 %v4458
        %v5140 = vpop.f32.mrb[0].mxu0
        %v5141 = vadd.f32 %v4370, %v5140
        %v5142 = vpop.f32.mrb[0].mxu0
        %v5143 = vadd.f32 %v4372, %v5142
        %v5144 = vpop.f32.mrb[0].mxu0
        %v5145 = vpop.f32.mrb[0].mxu0
        %5146 = vdwg.mxu0
        %5147 = vmatprep.subr.bf16.mxu0 %v4915
        %5148 = vmatpush1.bf16.msra.mxu0 %v4914
        %5149 = vmatprep.subr.bf16.mxu0 %v4919
        %5150 = vmatpush1.bf16.msra.mxu0 %v4918
        %5151 = vmatprep.subr.bf16.mxu0 %v4923
        %5152 = vmatpush1.bf16.msra.mxu0 %v4922
        %5153 = vmatprep.subr.bf16.mxu0 %v4927
        %5154 = vmatpush1.bf16.msra.mxu0 %v4926
        %5155 = vmatprep.subr.bf16.mxu0 %v4931
        %5156 = vmatpush1.bf16.msra.mxu0 %v4930
        %5157 = vmatprep.subr.bf16.mxu0 %v4935
        %5158 = vmatpush1.bf16.msra.mxu0 %v4934
        %5159 = vmatprep.subr.bf16.mxu0 %v4939
        %5160 = vmatpush1.bf16.msra.mxu0 %v4938
        %5161 = vmatprep.subr.bf16.mxu0 %v4943
        %5162 = vmatpush1.bf16.msra.mxu0 %v4942
        %5163 = vmatprep.subr.bf16.mxu0 %v4947
        %5164 = vmatpush1.bf16.msra.mxu0 %v4946
        %5165 = vmatprep.subr.bf16.mxu0 %v4951
        %5166 = vmatpush1.bf16.msra.mxu0 %v4950
        %5167 = vmatprep.subr.bf16.mxu0 %v4955
        %5168 = vmatpush1.bf16.msra.mxu0 %v4954
        %5169 = vmatprep.subr.bf16.mxu0 %v4959
        %5170 = vmatpush1.bf16.msra.mxu0 %v4958
        %5171 = vmatprep.subr.bf16.mxu0 %v4963
        %5172 = vmatpush1.bf16.msra.mxu0 %v4962
        %5173 = vmatprep.subr.bf16.mxu0 %v4967
        %5174 = vmatpush1.bf16.msra.mxu0 %v4966
        %5175 = vmatprep.subr.bf16.mxu0 %v4971
        %5176 = vmatpush1.bf16.msra.mxu0 %v4970
        %5177 = vmatprep.subr.bf16.mxu0 %v4975
        %5178 = vmatpush1.bf16.msra.mxu0 %v4974
        %5179 = vmatprep.mubr.bf16.mxu0 %v4461
        %5180 = vmatmul.mubr.bf16.gmra.mrb[0].mxu0 %v4460
        %v5181 = vpop.f32.mrb[0].mxu0
        %v5182 = vadd.f32 %v5141, %v5181
        %v5183 = vpop.f32.mrb[0].mxu0
        %v5184 = vadd.f32 %v5143, %v5183
        %v5185 = vpop.f32.mrb[0].mxu0
        %v5186 = vpop.f32.mrb[0].mxu0
        %5187 = vdwg.mxu0
        %5188 = vmatprep.subr.bf16.mxu0 %v4853
        %5189 = vmatpush1.bf16.msra.mxu0 %v4852
        %5190 = vmatprep.subr.bf16.mxu0 %v4857
        %5191 = vmatpush1.bf16.msra.mxu0 %v4856
        %5192 = vmatprep.subr.bf16.mxu0 %v4861
        %5193 = vmatpush1.bf16.msra.mxu0 %v4860
        %5194 = vmatprep.subr.bf16.mxu0 %v4865
        %5195 = vmatpush1.bf16.msra.mxu0 %v4864
        %5196 = vmatprep.subr.bf16.mxu0 %v4869
        %5197 = vmatpush1.bf16.msra.mxu0 %v4868
        %5198 = vmatprep.subr.bf16.mxu0 %v4873
        %5199 = vmatpush1.bf16.msra.mxu0 %v4872
        %5200 = vmatprep.subr.bf16.mxu0 %v4877
        %5201 = vmatpush1.bf16.msra.mxu0 %v4876
        %5202 = vmatprep.subr.bf16.mxu0 %v4881
        %5203 = vmatpush1.bf16.msra.mxu0 %v4880
        %5204 = vmatprep.subr.bf16.mxu0 %v4885
        %5205 = vmatpush1.bf16.msra.mxu0 %v4884
        %5206 = vmatprep.subr.bf16.mxu0 %v4889
        %5207 = vmatpush1.bf16.msra.mxu0 %v4888
        %5208 = vmatprep.subr.bf16.mxu0 %v4893
        %5209 = vmatpush1.bf16.msra.mxu0 %v4892
        %5210 = vmatprep.subr.bf16.mxu0 %v4897
        %5211 = vmatpush1.bf16.msra.mxu0 %v4896
        %5212 = vmatprep.subr.bf16.mxu0 %v4901
        %5213 = vmatpush1.bf16.msra.mxu0 %v4900
        %5214 = vmatprep.subr.bf16.mxu0 %v4905
        %5215 = vmatpush1.bf16.msra.mxu0 %v4904
        %5216 = vmatprep.subr.bf16.mxu0 %v4909
        %5217 = vmatpush1.bf16.msra.mxu0 %v4908
        %5218 = vmatprep.subr.bf16.mxu0 %v4913
        %5219 = vmatpush1.bf16.msra.mxu0 %v4912
        %5220 = vmatprep.mubr.bf16.mxu0 %v4459
        %5221 = vmatmul.mubr.bf16.gmra.mrb[0].mxu0 %v4458
        %v5222 = vpop.f32.mrb[0].mxu0
        %v5223 = vadd.f32 %v4452, %v5222
        %v5224 = vpop.f32.mrb[0].mxu0
        %v5225 = vadd.f32 %v4454, %v5224
        %v5226 = vpop.f32.mrb[0].mxu0
        %v5227 = vpop.f32.mrb[0].mxu0
        %5228 = vdwg.mxu0
        %5229 = vmatprep.subr.bf16.mxu0 %v4917
        %5230 = vmatpush1.bf16.msra.mxu0 %v4916
        %5231 = vmatprep.subr.bf16.mxu0 %v4921
        %5232 = vmatpush1.bf16.msra.mxu0 %v4920
        %5233 = vmatprep.subr.bf16.mxu0 %v4925
        %5234 = vmatpush1.bf16.msra.mxu0 %v4924
        %5235 = vmatprep.subr.bf16.mxu0 %v4929
        %5236 = vmatpush1.bf16.msra.mxu0 %v4928
        %5237 = vmatprep.subr.bf16.mxu0 %v4933
        %5238 = vmatpush1.bf16.msra.mxu0 %v4932
        %5239 = vmatprep.subr.bf16.mxu0 %v4937
        %5240 = vmatpush1.bf16.msra.mxu0 %v4936
        %5241 = vmatprep.subr.bf16.mxu0 %v4941
        %5242 = vmatpush1.bf16.msra.mxu0 %v4940
        %5243 = vmatprep.subr.bf16.mxu0 %v4945
        %5244 = vmatpush1.bf16.msra.mxu0 %v4944
        %5245 = vmatprep.subr.bf16.mxu0 %v4949
        %5246 = vmatpush1.bf16.msra.mxu0 %v4948
        %5247 = vmatprep.subr.bf16.mxu0 %v4953
        %5248 = vmatpush1.bf16.msra.mxu0 %v4952
        %5249 = vmatprep.subr.bf16.mxu0 %v4957
        %5250 = vmatpush1.bf16.msra.mxu0 %v4956
        %5251 = vmatprep.subr.bf16.mxu0 %v4961
        %5252 = vmatpush1.bf16.msra.mxu0 %v4960
        %5253 = vmatprep.subr.bf16.mxu0 %v4965
        %5254 = vmatpush1.bf16.msra.mxu0 %v4964
        %5255 = vmatprep.subr.bf16.mxu0 %v4969
        %5256 = vmatpush1.bf16.msra.mxu0 %v4968
        %5257 = vmatprep.subr.bf16.mxu0 %v4973
        %5258 = vmatpush1.bf16.msra.mxu0 %v4972
        %5259 = vmatprep.subr.bf16.mxu0 %v4977
        %5260 = vmatpush1.bf16.msra.mxu0 %v4976
        %5261 = vmatprep.mubr.bf16.mxu0 %v4461
        %5262 = vmatmul.mubr.bf16.gmra.mrb[0].mxu0 %v4460
        %v5263 = vpop.f32.mrb[0].mxu0
        %v5264 = vadd.f32 %v5223, %v5263
        %v5265 = vpop.f32.mrb[0].mxu0
        %v5266 = vadd.f32 %v5225, %v5265
        %v5267 = vpop.f32.mrb[0].mxu0
        %v5268 = vpop.f32.mrb[0].mxu0
        %5269 = vdwg.mxu0
        %v5270 = vld [vmem:[#allocation3] sm:$0xee]
        %v5271 = vld [vmem:[#allocation3 + $0x8] sm:$0xee]
        %s5272 = scalar_lea.vmem [#allocation10], 2048
        %v5273 = vld [vmem:[%s5272] sm:$0xff]
        %v5274 = vld [vmem:[%s5272 + $0x8] sm:$0xff]
        %v5275 = vld [vmem:[%s5272 + $0x10] sm:$0xff]
        %v5276 = vld [vmem:[%s5272 + $0x18] sm:$0xff]
        %v5277 = vld [vmem:[%s5272 + $0x20] sm:$0xff]
        %v5278 = vld [vmem:[%s5272 + $0x28] sm:$0xff]
        %v5279 = vld [vmem:[%s5272 + $0x30] sm:$0xff]
        %v5280 = vld [vmem:[%s5272 + $0x38] sm:$0xff]
        %v5281 = vld [vmem:[%s5272 + $0x40] sm:$0xff]
        %v5282 = vld [vmem:[%s5272 + $0x48] sm:$0xff]
        %v5283 = vld [vmem:[%s5272 + $0x50] sm:$0xff]
        %v5284 = vld [vmem:[%s5272 + $0x58] sm:$0xff]
        %v5285 = vld [vmem:[%s5272 + $0x60] sm:$0xff]
        %v5286 = vld [vmem:[%s5272 + $0x68] sm:$0xff]
        %v5287 = vld [vmem:[%s5272 + $0x70] sm:$0xff]
        %v5288 = vld [vmem:[%s5272 + $0x78] sm:$0xff]
        %v5289 = vld [vmem:[%s5272 + $0x80] sm:$0xff]
        %v5290 = vld [vmem:[%s5272 + $0x88] sm:$0xff]
        %v5291 = vld [vmem:[%s5272 + $0x90] sm:$0xff]
        %v5292 = vld [vmem:[%s5272 + $0x98] sm:$0xff]
        %v5293 = vld [vmem:[%s5272 + $0xa0] sm:$0xff]
        %v5294 = vld [vmem:[%s5272 + $0xa8] sm:$0xff]
        %v5295 = vld [vmem:[%s5272 + $0xb0] sm:$0xff]
        %v5296 = vld [vmem:[%s5272 + $0xb8] sm:$0xff]
        %v5297 = vld [vmem:[%s5272 + $0xc0] sm:$0xff]
        %v5298 = vld [vmem:[%s5272 + $0xc8] sm:$0xff]
        %v5299 = vld [vmem:[%s5272 + $0xd0] sm:$0xff]
        %v5300 = vld [vmem:[%s5272 + $0xd8] sm:$0xff]
        %v5301 = vld [vmem:[%s5272 + $0xe0] sm:$0xff]
        %v5302 = vld [vmem:[%s5272 + $0xe8] sm:$0xff]
        %v5303 = vld [vmem:[%s5272 + $0xf0] sm:$0xff]
        %v5304 = vld [vmem:[%s5272 + $0xf8] sm:$0xff]
        %v5305 = vld [vmem:[%s5272 + $0x100] sm:$0xff]
        %v5306 = vld [vmem:[%s5272 + $0x108] sm:$0xff]
        %v5307 = vld [vmem:[%s5272 + $0x110] sm:$0xff]
        %v5308 = vld [vmem:[%s5272 + $0x118] sm:$0xff]
        %v5309 = vld [vmem:[%s5272 + $0x120] sm:$0xff]
        %v5310 = vld [vmem:[%s5272 + $0x128] sm:$0xff]
        %v5311 = vld [vmem:[%s5272 + $0x130] sm:$0xff]
        %v5312 = vld [vmem:[%s5272 + $0x138] sm:$0xff]
        %v5313 = vld [vmem:[%s5272 + $0x140] sm:$0xff]
        %v5314 = vld [vmem:[%s5272 + $0x148] sm:$0xff]
        %v5315 = vld [vmem:[%s5272 + $0x150] sm:$0xff]
        %v5316 = vld [vmem:[%s5272 + $0x158] sm:$0xff]
        %v5317 = vld [vmem:[%s5272 + $0x160] sm:$0xff]
        %v5318 = vld [vmem:[%s5272 + $0x168] sm:$0xff]
        %v5319 = vld [vmem:[%s5272 + $0x170] sm:$0xff]
        %v5320 = vld [vmem:[%s5272 + $0x178] sm:$0xff]
        %v5321 = vld [vmem:[%s5272 + $0x180] sm:$0xff]
        %v5322 = vld [vmem:[%s5272 + $0x188] sm:$0xff]
        %v5323 = vld [vmem:[%s5272 + $0x190] sm:$0xff]
        %v5324 = vld [vmem:[%s5272 + $0x198] sm:$0xff]
        %v5325 = vld [vmem:[%s5272 + $0x1a0] sm:$0xff]
        %v5326 = vld [vmem:[%s5272 + $0x1a8] sm:$0xff]
        %v5327 = vld [vmem:[%s5272 + $0x1b0] sm:$0xff]
        %v5328 = vld [vmem:[%s5272 + $0x1b8] sm:$0xff]
        %v5329 = vld [vmem:[%s5272 + $0x1c0] sm:$0xff]
        %v5330 = vld [vmem:[%s5272 + $0x1c8] sm:$0xff]
        %v5331 = vld [vmem:[%s5272 + $0x1d0] sm:$0xff]
        %v5332 = vld [vmem:[%s5272 + $0x1d8] sm:$0xff]
        %v5333 = vld [vmem:[%s5272 + $0x1e0] sm:$0xff]
        %v5334 = vld [vmem:[%s5272 + $0x1e8] sm:$0xff]
        %v5335 = vld [vmem:[%s5272 + $0x1f0] sm:$0xff]
        %v5336 = vld [vmem:[%s5272 + $0x1f8] sm:$0xff]
        %v5337 = vld [vmem:[%s5272 + $0x200] sm:$0xff]
        %v5338 = vld [vmem:[%s5272 + $0x208] sm:$0xff]
        %v5339 = vld [vmem:[%s5272 + $0x210] sm:$0xff]
        %v5340 = vld [vmem:[%s5272 + $0x218] sm:$0xff]
        %v5341 = vld [vmem:[%s5272 + $0x220] sm:$0xff]
        %v5342 = vld [vmem:[%s5272 + $0x228] sm:$0xff]
        %v5343 = vld [vmem:[%s5272 + $0x230] sm:$0xff]
        %v5344 = vld [vmem:[%s5272 + $0x238] sm:$0xff]
        %v5345 = vld [vmem:[%s5272 + $0x240] sm:$0xff]
        %v5346 = vld [vmem:[%s5272 + $0x248] sm:$0xff]
        %v5347 = vld [vmem:[%s5272 + $0x250] sm:$0xff]
        %v5348 = vld [vmem:[%s5272 + $0x258] sm:$0xff]
        %v5349 = vld [vmem:[%s5272 + $0x260] sm:$0xff]
        %v5350 = vld [vmem:[%s5272 + $0x268] sm:$0xff]
        %v5351 = vld [vmem:[%s5272 + $0x270] sm:$0xff]
        %v5352 = vld [vmem:[%s5272 + $0x278] sm:$0xff]
        %v5353 = vld [vmem:[%s5272 + $0x280] sm:$0xff]
        %v5354 = vld [vmem:[%s5272 + $0x288] sm:$0xff]
        %v5355 = vld [vmem:[%s5272 + $0x290] sm:$0xff]
        %v5356 = vld [vmem:[%s5272 + $0x298] sm:$0xff]
        %v5357 = vld [vmem:[%s5272 + $0x2a0] sm:$0xff]
        %v5358 = vld [vmem:[%s5272 + $0x2a8] sm:$0xff]
        %v5359 = vld [vmem:[%s5272 + $0x2b0] sm:$0xff]
        %v5360 = vld [vmem:[%s5272 + $0x2b8] sm:$0xff]
        %v5361 = vld [vmem:[%s5272 + $0x2c0] sm:$0xff]
        %v5362 = vld [vmem:[%s5272 + $0x2c8] sm:$0xff]
        %v5363 = vld [vmem:[%s5272 + $0x2d0] sm:$0xff]
        %v5364 = vld [vmem:[%s5272 + $0x2d8] sm:$0xff]
        %v5365 = vld [vmem:[%s5272 + $0x2e0] sm:$0xff]
        %v5366 = vld [vmem:[%s5272 + $0x2e8] sm:$0xff]
        %v5367 = vld [vmem:[%s5272 + $0x2f0] sm:$0xff]
        %v5368 = vld [vmem:[%s5272 + $0x2f8] sm:$0xff]
        %v5369 = vld [vmem:[%s5272 + $0x300] sm:$0xff]
        %v5370 = vld [vmem:[%s5272 + $0x308] sm:$0xff]
        %v5371 = vld [vmem:[%s5272 + $0x310] sm:$0xff]
        %v5372 = vld [vmem:[%s5272 + $0x318] sm:$0xff]
        %v5373 = vld [vmem:[%s5272 + $0x320] sm:$0xff]
        %v5374 = vld [vmem:[%s5272 + $0x328] sm:$0xff]
        %v5375 = vld [vmem:[%s5272 + $0x330] sm:$0xff]
        %v5376 = vld [vmem:[%s5272 + $0x338] sm:$0xff]
        %v5377 = vld [vmem:[%s5272 + $0x340] sm:$0xff]
        %v5378 = vld [vmem:[%s5272 + $0x348] sm:$0xff]
        %v5379 = vld [vmem:[%s5272 + $0x350] sm:$0xff]
        %v5380 = vld [vmem:[%s5272 + $0x358] sm:$0xff]
        %v5381 = vld [vmem:[%s5272 + $0x360] sm:$0xff]
        %v5382 = vld [vmem:[%s5272 + $0x368] sm:$0xff]
        %v5383 = vld [vmem:[%s5272 + $0x370] sm:$0xff]
        %v5384 = vld [vmem:[%s5272 + $0x378] sm:$0xff]
        %v5385 = vld [vmem:[%s5272 + $0x380] sm:$0xff]
        %v5386 = vld [vmem:[%s5272 + $0x388] sm:$0xff]
        %v5387 = vld [vmem:[%s5272 + $0x390] sm:$0xff]
        %v5388 = vld [vmem:[%s5272 + $0x398] sm:$0xff]
        %v5389 = vld [vmem:[%s5272 + $0x3a0] sm:$0xff]
        %v5390 = vld [vmem:[%s5272 + $0x3a8] sm:$0xff]
        %v5391 = vld [vmem:[%s5272 + $0x3b0] sm:$0xff]
        %v5392 = vld [vmem:[%s5272 + $0x3b8] sm:$0xff]
        %v5393 = vld [vmem:[%s5272 + $0x3c0] sm:$0xff]
        %v5394 = vld [vmem:[%s5272 + $0x3c8] sm:$0xff]
        %v5395 = vld [vmem:[%s5272 + $0x3d0] sm:$0xff]
        %v5396 = vld [vmem:[%s5272 + $0x3d8] sm:$0xff]
        %v5397 = vld [vmem:[%s5272 + $0x3e0] sm:$0xff]
        %v5398 = vld [vmem:[%s5272 + $0x3e8] sm:$0xff]
        %v5399 = vld [vmem:[%s5272 + $0x3f0] sm:$0xff]
        %v5400 = vld [vmem:[%s5272 + $0x3f8] sm:$0xff]
        %v5403 = vunpack.c.l.b16 %v5270
        %v5404 = vunpack.c.h.b16 %v5270
        %v5405 = vunpack.c.l.b16 %v5271
        %v5406 = vunpack.c.h.b16 %v5271
        %v5407 = vpack.c.b16 %v3614, %v5403
        %v5408 = vpack.c.b16 %v3615, %v5404
        %v5409 = vpack.c.b16 %v3616, %v5405
        %v5410 = vpack.c.b16 %v3617, %v5406
        %v5411 = vrot.slane %v5407, 1
        %v5412 = vrot.slane %v5408, 1
        %v5413 = vrot.slane %v5409, 1
        %v5414 = vrot.slane %v5410, 1
        %v5547 = vunpack.c.l.b16 %v5273
        %v5548 = vunpack.c.h.b16 %v5273
        %v5549 = vunpack.c.l.b16 %v5274
        %v5550 = vunpack.c.h.b16 %v5274
        %v5551 = vunpack.c.l.b16 %v5275
        %v5552 = vunpack.c.h.b16 %v5275
        %v5553 = vunpack.c.l.b16 %v5276
        %v5554 = vunpack.c.h.b16 %v5276
        %v5555 = vunpack.c.l.b16 %v5277
        %v5556 = vunpack.c.h.b16 %v5277
        %v5557 = vunpack.c.l.b16 %v5278
        %v5558 = vunpack.c.h.b16 %v5278
        %v5559 = vunpack.c.l.b16 %v5279
        %v5560 = vunpack.c.h.b16 %v5279
        %v5561 = vunpack.c.l.b16 %v5280
        %v5562 = vunpack.c.h.b16 %v5280
        %v5563 = vunpack.c.l.b16 %v5281
        %v5564 = vunpack.c.h.b16 %v5281
        %v5565 = vunpack.c.l.b16 %v5282
        %v5566 = vunpack.c.h.b16 %v5282
        %v5567 = vunpack.c.l.b16 %v5283
        %v5568 = vunpack.c.h.b16 %v5283
        %v5569 = vunpack.c.l.b16 %v5284
        %v5570 = vunpack.c.h.b16 %v5284
        %v5571 = vunpack.c.l.b16 %v5285
        %v5572 = vunpack.c.h.b16 %v5285
        %v5573 = vunpack.c.l.b16 %v5286
        %v5574 = vunpack.c.h.b16 %v5286
        %v5575 = vunpack.c.l.b16 %v5287
        %v5576 = vunpack.c.h.b16 %v5287
        %v5577 = vunpack.c.l.b16 %v5288
        %v5578 = vunpack.c.h.b16 %v5288
        %v5579 = vunpack.c.l.b16 %v5289
        %v5580 = vunpack.c.h.b16 %v5289
        %v5581 = vunpack.c.l.b16 %v5290
        %v5582 = vunpack.c.h.b16 %v5290
        %v5583 = vunpack.c.l.b16 %v5291
        %v5584 = vunpack.c.h.b16 %v5291
        %v5585 = vunpack.c.l.b16 %v5292
        %v5586 = vunpack.c.h.b16 %v5292
        %v5587 = vunpack.c.l.b16 %v5293
        %v5588 = vunpack.c.h.b16 %v5293
        %v5589 = vunpack.c.l.b16 %v5294
        %v5590 = vunpack.c.h.b16 %v5294
        %v5591 = vunpack.c.l.b16 %v5295
        %v5592 = vunpack.c.h.b16 %v5295
        %v5593 = vunpack.c.l.b16 %v5296
        %v5594 = vunpack.c.h.b16 %v5296
        %v5595 = vunpack.c.l.b16 %v5297
        %v5596 = vunpack.c.h.b16 %v5297
        %v5597 = vunpack.c.l.b16 %v5298
        %v5598 = vunpack.c.h.b16 %v5298
        %v5599 = vunpack.c.l.b16 %v5299
        %v5600 = vunpack.c.h.b16 %v5299
        %v5601 = vunpack.c.l.b16 %v5300
        %v5602 = vunpack.c.h.b16 %v5300
        %v5603 = vunpack.c.l.b16 %v5301
        %v5604 = vunpack.c.h.b16 %v5301
        %v5605 = vunpack.c.l.b16 %v5302
        %v5606 = vunpack.c.h.b16 %v5302
        %v5607 = vunpack.c.l.b16 %v5303
        %v5608 = vunpack.c.h.b16 %v5303
        %v5609 = vunpack.c.l.b16 %v5304
        %v5610 = vunpack.c.h.b16 %v5304
        %v5611 = vunpack.c.l.b16 %v5305
        %v5612 = vunpack.c.h.b16 %v5305
        %v5613 = vunpack.c.l.b16 %v5306
        %v5614 = vunpack.c.h.b16 %v5306
        %v5615 = vunpack.c.l.b16 %v5307
        %v5616 = vunpack.c.h.b16 %v5307
        %v5617 = vunpack.c.l.b16 %v5308
        %v5618 = vunpack.c.h.b16 %v5308
        %v5619 = vunpack.c.l.b16 %v5309
        %v5620 = vunpack.c.h.b16 %v5309
        %v5621 = vunpack.c.l.b16 %v5310
        %v5622 = vunpack.c.h.b16 %v5310
        %v5623 = vunpack.c.l.b16 %v5311
        %v5624 = vunpack.c.h.b16 %v5311
        %v5625 = vunpack.c.l.b16 %v5312
        %v5626 = vunpack.c.h.b16 %v5312
        %v5627 = vunpack.c.l.b16 %v5313
        %v5628 = vunpack.c.h.b16 %v5313
        %v5629 = vunpack.c.l.b16 %v5314
        %v5630 = vunpack.c.h.b16 %v5314
        %v5631 = vunpack.c.l.b16 %v5315
        %v5632 = vunpack.c.h.b16 %v5315
        %v5633 = vunpack.c.l.b16 %v5316
        %v5634 = vunpack.c.h.b16 %v5316
        %v5635 = vunpack.c.l.b16 %v5317
        %v5636 = vunpack.c.h.b16 %v5317
        %v5637 = vunpack.c.l.b16 %v5318
        %v5638 = vunpack.c.h.b16 %v5318
        %v5639 = vunpack.c.l.b16 %v5319
        %v5640 = vunpack.c.h.b16 %v5319
        %v5641 = vunpack.c.l.b16 %v5320
        %v5642 = vunpack.c.h.b16 %v5320
        %v5643 = vunpack.c.l.b16 %v5321
        %v5644 = vunpack.c.h.b16 %v5321
        %v5645 = vunpack.c.l.b16 %v5322
        %v5646 = vunpack.c.h.b16 %v5322
        %v5647 = vunpack.c.l.b16 %v5323
        %v5648 = vunpack.c.h.b16 %v5323
        %v5649 = vunpack.c.l.b16 %v5324
        %v5650 = vunpack.c.h.b16 %v5324
        %v5651 = vunpack.c.l.b16 %v5325
        %v5652 = vunpack.c.h.b16 %v5325
        %v5653 = vunpack.c.l.b16 %v5326
        %v5654 = vunpack.c.h.b16 %v5326
        %v5655 = vunpack.c.l.b16 %v5327
        %v5656 = vunpack.c.h.b16 %v5327
        %v5657 = vunpack.c.l.b16 %v5328
        %v5658 = vunpack.c.h.b16 %v5328
        %v5659 = vunpack.c.l.b16 %v5329
        %v5660 = vunpack.c.h.b16 %v5329
        %v5661 = vunpack.c.l.b16 %v5330
        %v5662 = vunpack.c.h.b16 %v5330
        %v5663 = vunpack.c.l.b16 %v5331
        %v5664 = vunpack.c.h.b16 %v5331
        %v5665 = vunpack.c.l.b16 %v5332
        %v5666 = vunpack.c.h.b16 %v5332
        %v5667 = vunpack.c.l.b16 %v5333
        %v5668 = vunpack.c.h.b16 %v5333
        %v5669 = vunpack.c.l.b16 %v5334
        %v5670 = vunpack.c.h.b16 %v5334
        %v5671 = vunpack.c.l.b16 %v5335
        %v5672 = vunpack.c.h.b16 %v5335
        %v5673 = vunpack.c.l.b16 %v5336
        %v5674 = vunpack.c.h.b16 %v5336
        %v5675 = vunpack.c.l.b16 %v5337
        %v5676 = vunpack.c.h.b16 %v5337
        %v5677 = vunpack.c.l.b16 %v5338
        %v5678 = vunpack.c.h.b16 %v5338
        %v5679 = vunpack.c.l.b16 %v5339
        %v5680 = vunpack.c.h.b16 %v5339
        %v5681 = vunpack.c.l.b16 %v5340
        %v5682 = vunpack.c.h.b16 %v5340
        %v5683 = vunpack.c.l.b16 %v5341
        %v5684 = vunpack.c.h.b16 %v5341
        %v5685 = vunpack.c.l.b16 %v5342
        %v5686 = vunpack.c.h.b16 %v5342
        %v5687 = vunpack.c.l.b16 %v5343
        %v5688 = vunpack.c.h.b16 %v5343
        %v5689 = vunpack.c.l.b16 %v5344
        %v5690 = vunpack.c.h.b16 %v5344
        %v5691 = vunpack.c.l.b16 %v5345
        %v5692 = vunpack.c.h.b16 %v5345
        %v5693 = vunpack.c.l.b16 %v5346
        %v5694 = vunpack.c.h.b16 %v5346
        %v5695 = vunpack.c.l.b16 %v5347
        %v5696 = vunpack.c.h.b16 %v5347
        %v5697 = vunpack.c.l.b16 %v5348
        %v5698 = vunpack.c.h.b16 %v5348
        %v5699 = vunpack.c.l.b16 %v5349
        %v5700 = vunpack.c.h.b16 %v5349
        %v5701 = vunpack.c.l.b16 %v5350
        %v5702 = vunpack.c.h.b16 %v5350
        %v5703 = vunpack.c.l.b16 %v5351
        %v5704 = vunpack.c.h.b16 %v5351
        %v5705 = vunpack.c.l.b16 %v5352
        %v5706 = vunpack.c.h.b16 %v5352
        %v5707 = vunpack.c.l.b16 %v5353
        %v5708 = vunpack.c.h.b16 %v5353
        %v5709 = vunpack.c.l.b16 %v5354
        %v5710 = vunpack.c.h.b16 %v5354
        %v5711 = vunpack.c.l.b16 %v5355
        %v5712 = vunpack.c.h.b16 %v5355
        %v5713 = vunpack.c.l.b16 %v5356
        %v5714 = vunpack.c.h.b16 %v5356
        %v5715 = vunpack.c.l.b16 %v5357
        %v5716 = vunpack.c.h.b16 %v5357
        %v5717 = vunpack.c.l.b16 %v5358
        %v5718 = vunpack.c.h.b16 %v5358
        %v5719 = vunpack.c.l.b16 %v5359
        %v5720 = vunpack.c.h.b16 %v5359
        %v5721 = vunpack.c.l.b16 %v5360
        %v5722 = vunpack.c.h.b16 %v5360
        %v5723 = vunpack.c.l.b16 %v5361
        %v5724 = vunpack.c.h.b16 %v5361
        %v5725 = vunpack.c.l.b16 %v5362
        %v5726 = vunpack.c.h.b16 %v5362
        %v5727 = vunpack.c.l.b16 %v5363
        %v5728 = vunpack.c.h.b16 %v5363
        %v5729 = vunpack.c.l.b16 %v5364
        %v5730 = vunpack.c.h.b16 %v5364
        %v5731 = vunpack.c.l.b16 %v5365
        %v5732 = vunpack.c.h.b16 %v5365
        %v5733 = vunpack.c.l.b16 %v5366
        %v5734 = vunpack.c.h.b16 %v5366
        %v5735 = vunpack.c.l.b16 %v5367
        %v5736 = vunpack.c.h.b16 %v5367
        %v5737 = vunpack.c.l.b16 %v5368
        %v5738 = vunpack.c.h.b16 %v5368
        %v5739 = vunpack.c.l.b16 %v5369
        %v5740 = vunpack.c.h.b16 %v5369
        %v5741 = vunpack.c.l.b16 %v5370
        %v5742 = vunpack.c.h.b16 %v5370
        %v5743 = vunpack.c.l.b16 %v5371
        %v5744 = vunpack.c.h.b16 %v5371
        %v5745 = vunpack.c.l.b16 %v5372
        %v5746 = vunpack.c.h.b16 %v5372
        %v5747 = vunpack.c.l.b16 %v5373
        %v5748 = vunpack.c.h.b16 %v5373
        %v5749 = vunpack.c.l.b16 %v5374
        %v5750 = vunpack.c.h.b16 %v5374
        %v5751 = vunpack.c.l.b16 %v5375
        %v5752 = vunpack.c.h.b16 %v5375
        %v5753 = vunpack.c.l.b16 %v5376
        %v5754 = vunpack.c.h.b16 %v5376
        %v5755 = vunpack.c.l.b16 %v5377
        %v5756 = vunpack.c.h.b16 %v5377
        %v5757 = vunpack.c.l.b16 %v5378
        %v5758 = vunpack.c.h.b16 %v5378
        %v5759 = vunpack.c.l.b16 %v5379
        %v5760 = vunpack.c.h.b16 %v5379
        %v5761 = vunpack.c.l.b16 %v5380
        %v5762 = vunpack.c.h.b16 %v5380
        %v5763 = vunpack.c.l.b16 %v5381
        %v5764 = vunpack.c.h.b16 %v5381
        %v5765 = vunpack.c.l.b16 %v5382
        %v5766 = vunpack.c.h.b16 %v5382
        %v5767 = vunpack.c.l.b16 %v5383
        %v5768 = vunpack.c.h.b16 %v5383
        %v5769 = vunpack.c.l.b16 %v5384
        %v5770 = vunpack.c.h.b16 %v5384
        %v5771 = vunpack.c.l.b16 %v5385
        %v5772 = vunpack.c.h.b16 %v5385
        %v5773 = vunpack.c.l.b16 %v5386
        %v5774 = vunpack.c.h.b16 %v5386
        %v5775 = vunpack.c.l.b16 %v5387
        %v5776 = vunpack.c.h.b16 %v5387
        %v5777 = vunpack.c.l.b16 %v5388
        %v5778 = vunpack.c.h.b16 %v5388
        %v5779 = vunpack.c.l.b16 %v5389
        %v5780 = vunpack.c.h.b16 %v5389
        %v5781 = vunpack.c.l.b16 %v5390
        %v5782 = vunpack.c.h.b16 %v5390
        %v5783 = vunpack.c.l.b16 %v5391
        %v5784 = vunpack.c.h.b16 %v5391
        %v5785 = vunpack.c.l.b16 %v5392
        %v5786 = vunpack.c.h.b16 %v5392
        %v5787 = vunpack.c.l.b16 %v5393
        %v5788 = vunpack.c.h.b16 %v5393
        %v5789 = vunpack.c.l.b16 %v5394
        %v5790 = vunpack.c.h.b16 %v5394
        %v5791 = vunpack.c.l.b16 %v5395
        %v5792 = vunpack.c.h.b16 %v5395
        %v5793 = vunpack.c.l.b16 %v5396
        %v5794 = vunpack.c.h.b16 %v5396
        %v5795 = vunpack.c.l.b16 %v5397
        %v5796 = vunpack.c.h.b16 %v5397
        %v5797 = vunpack.c.l.b16 %v5398
        %v5798 = vunpack.c.h.b16 %v5398
        %v5799 = vunpack.c.l.b16 %v5399
        %v5800 = vunpack.c.h.b16 %v5399
        %v5801 = vunpack.c.l.b16 %v5400
        %v5802 = vunpack.c.h.b16 %v5400
        %v5803 = vpack.c.b16 %v5551, %v5547
        %v5804 = vpack.c.b16 %v5552, %v5548
        %v5805 = vpack.c.b16 %v5553, %v5549
        %v5806 = vpack.c.b16 %v5554, %v5550
        %v5807 = vpack.c.b16 %v5559, %v5555
        %v5808 = vpack.c.b16 %v5560, %v5556
        %v5809 = vpack.c.b16 %v5561, %v5557
        %v5810 = vpack.c.b16 %v5562, %v5558
        %v5811 = vpack.c.b16 %v5567, %v5563
        %v5812 = vpack.c.b16 %v5568, %v5564
        %v5813 = vpack.c.b16 %v5569, %v5565
        %v5814 = vpack.c.b16 %v5570, %v5566
        %v5815 = vpack.c.b16 %v5575, %v5571
        %v5816 = vpack.c.b16 %v5576, %v5572
        %v5817 = vpack.c.b16 %v5577, %v5573
        %v5818 = vpack.c.b16 %v5578, %v5574
        %v5819 = vpack.c.b16 %v5583, %v5579
        %v5820 = vpack.c.b16 %v5584, %v5580
        %v5821 = vpack.c.b16 %v5585, %v5581
        %v5822 = vpack.c.b16 %v5586, %v5582
        %v5823 = vpack.c.b16 %v5591, %v5587
        %v5824 = vpack.c.b16 %v5592, %v5588
        %v5825 = vpack.c.b16 %v5593, %v5589
        %v5826 = vpack.c.b16 %v5594, %v5590
        %v5827 = vpack.c.b16 %v5599, %v5595
        %v5828 = vpack.c.b16 %v5600, %v5596
        %v5829 = vpack.c.b16 %v5601, %v5597
        %v5830 = vpack.c.b16 %v5602, %v5598
        %v5831 = vpack.c.b16 %v5607, %v5603
        %v5832 = vpack.c.b16 %v5608, %v5604
        %v5833 = vpack.c.b16 %v5609, %v5605
        %v5834 = vpack.c.b16 %v5610, %v5606
        %v5835 = vpack.c.b16 %v5615, %v5611
        %v5836 = vpack.c.b16 %v5616, %v5612
        %v5837 = vpack.c.b16 %v5617, %v5613
        %v5838 = vpack.c.b16 %v5618, %v5614
        %v5839 = vpack.c.b16 %v5623, %v5619
        %v5840 = vpack.c.b16 %v5624, %v5620
        %v5841 = vpack.c.b16 %v5625, %v5621
        %v5842 = vpack.c.b16 %v5626, %v5622
        %v5843 = vpack.c.b16 %v5631, %v5627
        %v5844 = vpack.c.b16 %v5632, %v5628
        %v5845 = vpack.c.b16 %v5633, %v5629
        %v5846 = vpack.c.b16 %v5634, %v5630
        %v5847 = vpack.c.b16 %v5639, %v5635
        %v5848 = vpack.c.b16 %v5640, %v5636
        %v5849 = vpack.c.b16 %v5641, %v5637
        %v5850 = vpack.c.b16 %v5642, %v5638
        %v5851 = vpack.c.b16 %v5647, %v5643
        %v5852 = vpack.c.b16 %v5648, %v5644
        %v5853 = vpack.c.b16 %v5649, %v5645
        %v5854 = vpack.c.b16 %v5650, %v5646
        %v5855 = vpack.c.b16 %v5655, %v5651
        %v5856 = vpack.c.b16 %v5656, %v5652
        %v5857 = vpack.c.b16 %v5657, %v5653
        %v5858 = vpack.c.b16 %v5658, %v5654
        %v5859 = vpack.c.b16 %v5663, %v5659
        %v5860 = vpack.c.b16 %v5664, %v5660
        %v5861 = vpack.c.b16 %v5665, %v5661
        %v5862 = vpack.c.b16 %v5666, %v5662
        %v5863 = vpack.c.b16 %v5671, %v5667
        %v5864 = vpack.c.b16 %v5672, %v5668
        %v5865 = vpack.c.b16 %v5673, %v5669
        %v5866 = vpack.c.b16 %v5674, %v5670
        %v5867 = vpack.c.b16 %v5679, %v5675
        %v5868 = vpack.c.b16 %v5680, %v5676
        %v5869 = vpack.c.b16 %v5681, %v5677
        %v5870 = vpack.c.b16 %v5682, %v5678
        %v5871 = vpack.c.b16 %v5687, %v5683
        %v5872 = vpack.c.b16 %v5688, %v5684
        %v5873 = vpack.c.b16 %v5689, %v5685
        %v5874 = vpack.c.b16 %v5690, %v5686
        %v5875 = vpack.c.b16 %v5695, %v5691
        %v5876 = vpack.c.b16 %v5696, %v5692
        %v5877 = vpack.c.b16 %v5697, %v5693
        %v5878 = vpack.c.b16 %v5698, %v5694
        %v5879 = vpack.c.b16 %v5703, %v5699
        %v5880 = vpack.c.b16 %v5704, %v5700
        %v5881 = vpack.c.b16 %v5705, %v5701
        %v5882 = vpack.c.b16 %v5706, %v5702
        %v5883 = vpack.c.b16 %v5711, %v5707
        %v5884 = vpack.c.b16 %v5712, %v5708
        %v5885 = vpack.c.b16 %v5713, %v5709
        %v5886 = vpack.c.b16 %v5714, %v5710
        %v5887 = vpack.c.b16 %v5719, %v5715
        %v5888 = vpack.c.b16 %v5720, %v5716
        %v5889 = vpack.c.b16 %v5721, %v5717
        %v5890 = vpack.c.b16 %v5722, %v5718
        %v5891 = vpack.c.b16 %v5727, %v5723
        %v5892 = vpack.c.b16 %v5728, %v5724
        %v5893 = vpack.c.b16 %v5729, %v5725
        %v5894 = vpack.c.b16 %v5730, %v5726
        %v5895 = vpack.c.b16 %v5735, %v5731
        %v5896 = vpack.c.b16 %v5736, %v5732
        %v5897 = vpack.c.b16 %v5737, %v5733
        %v5898 = vpack.c.b16 %v5738, %v5734
        %v5899 = vpack.c.b16 %v5743, %v5739
        %v5900 = vpack.c.b16 %v5744, %v5740
        %v5901 = vpack.c.b16 %v5745, %v5741
        %v5902 = vpack.c.b16 %v5746, %v5742
        %v5903 = vpack.c.b16 %v5751, %v5747
        %v5904 = vpack.c.b16 %v5752, %v5748
        %v5905 = vpack.c.b16 %v5753, %v5749
        %v5906 = vpack.c.b16 %v5754, %v5750
        %v5907 = vpack.c.b16 %v5759, %v5755
        %v5908 = vpack.c.b16 %v5760, %v5756
        %v5909 = vpack.c.b16 %v5761, %v5757
        %v5910 = vpack.c.b16 %v5762, %v5758
        %v5911 = vpack.c.b16 %v5767, %v5763
        %v5912 = vpack.c.b16 %v5768, %v5764
        %v5913 = vpack.c.b16 %v5769, %v5765
        %v5914 = vpack.c.b16 %v5770, %v5766
        %v5915 = vpack.c.b16 %v5775, %v5771
        %v5916 = vpack.c.b16 %v5776, %v5772
        %v5917 = vpack.c.b16 %v5777, %v5773
        %v5918 = vpack.c.b16 %v5778, %v5774
        %v5919 = vpack.c.b16 %v5783, %v5779
        %v5920 = vpack.c.b16 %v5784, %v5780
        %v5921 = vpack.c.b16 %v5785, %v5781
        %v5922 = vpack.c.b16 %v5786, %v5782
        %v5923 = vpack.c.b16 %v5791, %v5787
        %v5924 = vpack.c.b16 %v5792, %v5788
        %v5925 = vpack.c.b16 %v5793, %v5789
        %v5926 = vpack.c.b16 %v5794, %v5790
        %v5927 = vpack.c.b16 %v5799, %v5795
        %v5928 = vpack.c.b16 %v5800, %v5796
        %v5929 = vpack.c.b16 %v5801, %v5797
        %v5930 = vpack.c.b16 %v5802, %v5798
        %6059 = vmatprep.subr.bf16.mxu0 %v5804
        %6060 = vmatpush1.bf16.msra.mxu0 %v5803
        %6061 = vmatprep.subr.bf16.mxu0 %v5808
        %6062 = vmatpush1.bf16.msra.mxu0 %v5807
        %6063 = vmatprep.subr.bf16.mxu0 %v5812
        %6064 = vmatpush1.bf16.msra.mxu0 %v5811
        %6065 = vmatprep.subr.bf16.mxu0 %v5816
        %6066 = vmatpush1.bf16.msra.mxu0 %v5815
        %6067 = vmatprep.subr.bf16.mxu0 %v5820
        %6068 = vmatpush1.bf16.msra.mxu0 %v5819
        %6069 = vmatprep.subr.bf16.mxu0 %v5824
        %6070 = vmatpush1.bf16.msra.mxu0 %v5823
        %6071 = vmatprep.subr.bf16.mxu0 %v5828
        %6072 = vmatpush1.bf16.msra.mxu0 %v5827
        %6073 = vmatprep.subr.bf16.mxu0 %v5832
        %6074 = vmatpush1.bf16.msra.mxu0 %v5831
        %6075 = vmatprep.subr.bf16.mxu0 %v5836
        %6076 = vmatpush1.bf16.msra.mxu0 %v5835
        %6077 = vmatprep.subr.bf16.mxu0 %v5840
        %6078 = vmatpush1.bf16.msra.mxu0 %v5839
        %6079 = vmatprep.subr.bf16.mxu0 %v5844
        %6080 = vmatpush1.bf16.msra.mxu0 %v5843
        %6081 = vmatprep.subr.bf16.mxu0 %v5848
        %6082 = vmatpush1.bf16.msra.mxu0 %v5847
        %6083 = vmatprep.subr.bf16.mxu0 %v5852
        %6084 = vmatpush1.bf16.msra.mxu0 %v5851
        %6085 = vmatprep.subr.bf16.mxu0 %v5856
        %6086 = vmatpush1.bf16.msra.mxu0 %v5855
        %6087 = vmatprep.subr.bf16.mxu0 %v5860
        %6088 = vmatpush1.bf16.msra.mxu0 %v5859
        %6089 = vmatprep.subr.bf16.mxu0 %v5864
        %6090 = vmatpush1.bf16.msra.mxu0 %v5863
        %6091 = vmatprep.mubr.bf16.mxu0 %v5412
        %6092 = vmatmul.mubr.bf16.gmra.mrb[0].mxu0 %v5411
        %v6093 = vpop.f32.mrb[0].mxu0
        %v6094 = vadd.f32 0.0, %v6093
        %v6095 = vpop.f32.mrb[0].mxu0
        %v6096 = vadd.f32 0.0, %v6095
        %v6097 = vpop.f32.mrb[0].mxu0
        %v6098 = vpop.f32.mrb[0].mxu0
        %6099 = vdwg.mxu0
        %6100 = vmatprep.subr.bf16.mxu0 %v5868
        %6101 = vmatpush1.bf16.msra.mxu0 %v5867
        %6102 = vmatprep.subr.bf16.mxu0 %v5872
        %6103 = vmatpush1.bf16.msra.mxu0 %v5871
        %6104 = vmatprep.subr.bf16.mxu0 %v5876
        %6105 = vmatpush1.bf16.msra.mxu0 %v5875
        %6106 = vmatprep.subr.bf16.mxu0 %v5880
        %6107 = vmatpush1.bf16.msra.mxu0 %v5879
        %6108 = vmatprep.subr.bf16.mxu0 %v5884
        %6109 = vmatpush1.bf16.msra.mxu0 %v5883
        %6110 = vmatprep.subr.bf16.mxu0 %v5888
        %6111 = vmatpush1.bf16.msra.mxu0 %v5887
        %6112 = vmatprep.subr.bf16.mxu0 %v5892
        %6113 = vmatpush1.bf16.msra.mxu0 %v5891
        %6114 = vmatprep.subr.bf16.mxu0 %v5896
        %6115 = vmatpush1.bf16.msra.mxu0 %v5895
        %6116 = vmatprep.subr.bf16.mxu0 %v5900
        %6117 = vmatpush1.bf16.msra.mxu0 %v5899
        %6118 = vmatprep.subr.bf16.mxu0 %v5904
        %6119 = vmatpush1.bf16.msra.mxu0 %v5903
        %6120 = vmatprep.subr.bf16.mxu0 %v5908
        %6121 = vmatpush1.bf16.msra.mxu0 %v5907
        %6122 = vmatprep.subr.bf16.mxu0 %v5912
        %6123 = vmatpush1.bf16.msra.mxu0 %v5911
        %6124 = vmatprep.subr.bf16.mxu0 %v5916
        %6125 = vmatpush1.bf16.msra.mxu0 %v5915
        %6126 = vmatprep.subr.bf16.mxu0 %v5920
        %6127 = vmatpush1.bf16.msra.mxu0 %v5919
        %6128 = vmatprep.subr.bf16.mxu0 %v5924
        %6129 = vmatpush1.bf16.msra.mxu0 %v5923
        %6130 = vmatprep.subr.bf16.mxu0 %v5928
        %6131 = vmatpush1.bf16.msra.mxu0 %v5927
        %6132 = vmatprep.mubr.bf16.mxu0 %v5414
        %6133 = vmatmul.mubr.bf16.gmra.mrb[0].mxu0 %v5413
        %v6134 = vpop.f32.mrb[0].mxu0
        %v6135 = vadd.f32 %v6094, %v6134
        %v6136 = vpop.f32.mrb[0].mxu0
        %v6137 = vadd.f32 %v6096, %v6136
        %v6138 = vpop.f32.mrb[0].mxu0
        %v6139 = vpop.f32.mrb[0].mxu0
        %6140 = vdwg.mxu0
        %6141 = vmatprep.subr.bf16.mxu0 %v5806
        %6142 = vmatpush1.bf16.msra.mxu0 %v5805
        %6143 = vmatprep.subr.bf16.mxu0 %v5810
        %6144 = vmatpush1.bf16.msra.mxu0 %v5809
        %6145 = vmatprep.subr.bf16.mxu0 %v5814
        %6146 = vmatpush1.bf16.msra.mxu0 %v5813
        %6147 = vmatprep.subr.bf16.mxu0 %v5818
        %6148 = vmatpush1.bf16.msra.mxu0 %v5817
        %6149 = vmatprep.subr.bf16.mxu0 %v5822
        %6150 = vmatpush1.bf16.msra.mxu0 %v5821
        %6151 = vmatprep.subr.bf16.mxu0 %v5826
        %6152 = vmatpush1.bf16.msra.mxu0 %v5825
        %6153 = vmatprep.subr.bf16.mxu0 %v5830
        %6154 = vmatpush1.bf16.msra.mxu0 %v5829
        %6155 = vmatprep.subr.bf16.mxu0 %v5834
        %6156 = vmatpush1.bf16.msra.mxu0 %v5833
        %6157 = vmatprep.subr.bf16.mxu0 %v5838
        %6158 = vmatpush1.bf16.msra.mxu0 %v5837
        %6159 = vmatprep.subr.bf16.mxu0 %v5842
        %6160 = vmatpush1.bf16.msra.mxu0 %v5841
        %6161 = vmatprep.subr.bf16.mxu0 %v5846
        %6162 = vmatpush1.bf16.msra.mxu0 %v5845
        %6163 = vmatprep.subr.bf16.mxu0 %v5850
        %6164 = vmatpush1.bf16.msra.mxu0 %v5849
        %6165 = vmatprep.subr.bf16.mxu0 %v5854
        %6166 = vmatpush1.bf16.msra.mxu0 %v5853
        %6167 = vmatprep.subr.bf16.mxu0 %v5858
        %6168 = vmatpush1.bf16.msra.mxu0 %v5857
        %6169 = vmatprep.subr.bf16.mxu0 %v5862
        %6170 = vmatpush1.bf16.msra.mxu0 %v5861
        %6171 = vmatprep.subr.bf16.mxu0 %v5866
        %6172 = vmatpush1.bf16.msra.mxu0 %v5865
        %6173 = vmatprep.mubr.bf16.mxu0 %v5412
        %6174 = vmatmul.mubr.bf16.gmra.mrb[0].mxu0 %v5411
        %v6175 = vpop.f32.mrb[0].mxu0
        %v6176 = vadd.f32 0.0, %v6175
        %v6177 = vpop.f32.mrb[0].mxu0
        %v6178 = vadd.f32 0.0, %v6177
        %v6179 = vpop.f32.mrb[0].mxu0
        %v6180 = vpop.f32.mrb[0].mxu0
        %6181 = vdwg.mxu0
        %6182 = vmatprep.subr.bf16.mxu0 %v5870
        %6183 = vmatpush1.bf16.msra.mxu0 %v5869
        %6184 = vmatprep.subr.bf16.mxu0 %v5874
        %6185 = vmatpush1.bf16.msra.mxu0 %v5873
        %6186 = vmatprep.subr.bf16.mxu0 %v5878
        %6187 = vmatpush1.bf16.msra.mxu0 %v5877
        %6188 = vmatprep.subr.bf16.mxu0 %v5882
        %6189 = vmatpush1.bf16.msra.mxu0 %v5881
        %6190 = vmatprep.subr.bf16.mxu0 %v5886
        %6191 = vmatpush1.bf16.msra.mxu0 %v5885
        %6192 = vmatprep.subr.bf16.mxu0 %v5890
        %6193 = vmatpush1.bf16.msra.mxu0 %v5889
        %6194 = vmatprep.subr.bf16.mxu0 %v5894
        %6195 = vmatpush1.bf16.msra.mxu0 %v5893
        %6196 = vmatprep.subr.bf16.mxu0 %v5898
        %6197 = vmatpush1.bf16.msra.mxu0 %v5897
        %6198 = vmatprep.subr.bf16.mxu0 %v5902
        %6199 = vmatpush1.bf16.msra.mxu0 %v5901
        %6200 = vmatprep.subr.bf16.mxu0 %v5906
        %6201 = vmatpush1.bf16.msra.mxu0 %v5905
        %6202 = vmatprep.subr.bf16.mxu0 %v5910
        %6203 = vmatpush1.bf16.msra.mxu0 %v5909
        %6204 = vmatprep.subr.bf16.mxu0 %v5914
        %6205 = vmatpush1.bf16.msra.mxu0 %v5913
        %6206 = vmatprep.subr.bf16.mxu0 %v5918
        %6207 = vmatpush1.bf16.msra.mxu0 %v5917
        %6208 = vmatprep.subr.bf16.mxu0 %v5922
        %6209 = vmatpush1.bf16.msra.mxu0 %v5921
        %6210 = vmatprep.subr.bf16.mxu0 %v5926
        %6211 = vmatpush1.bf16.msra.mxu0 %v5925
        %6212 = vmatprep.subr.bf16.mxu0 %v5930
        %6213 = vmatpush1.bf16.msra.mxu0 %v5929
        %6214 = vmatprep.mubr.bf16.mxu0 %v5414
        %6215 = vmatmul.mubr.bf16.gmra.mrb[0].mxu0 %v5413
        %v6216 = vpop.f32.mrb[0].mxu0
        %v6217 = vadd.f32 %v6176, %v6216
        %v6218 = vpop.f32.mrb[0].mxu0
        %v6219 = vadd.f32 %v6178, %v6218
        %v6220 = vpop.f32.mrb[0].mxu0
        %v6221 = vpop.f32.mrb[0].mxu0
        %6222 = vdwg.mxu0
        %v6223 = vadd.f32 %v5182, %v6135
        %v6224 = vadd.f32 %v5184, %v6137
        %v6225 = vadd.f32 %v5264, %v6217
        %v6226 = vadd.f32 %v5266, %v6219
        %v6227 = vld [vmem:[#allocation12] sm:$0xf]
        %v6229 = vlaneseq
        %v6230 = vshrl.u32 %v6229, 7
        %v6231 = vsub.s32 0, %v6230
        %v6232 = vrot.slane %v6227, %v6231
        %v6233 = vlaneseq
        %v6234 = vshrl.u32 %v6233, 7
        %v6235 = vsub.s32 1, %v6234
        %v6236 = vrot.slane %v6227, %v6235
        %v6237 = vlaneseq
        %v6238 = vshrl.u32 %v6237, 7
        %v6239 = vsub.s32 2, %v6238
        %v6240 = vrot.slane %v6227, %v6239
        %v6241 = vlaneseq
        %v6242 = vshrl.u32 %v6241, 7
        %v6243 = vsub.s32 3, %v6242
        %v6244 = vrot.slane %v6227, %v6243
        %v6249 = vadd.f32 %v6223, %v6232
        %v6250 = vadd.f32 %v6224, %v6236
        %v6251 = vadd.f32 %v6225, %v6240
        %v6252 = vadd.f32 %v6226, %v6244
        %v6253 = vadd.f32 %v6249, %v332
        %v6254 = vadd.f32 %v6250, %v333
        %v6255 = vadd.f32 %v6251, %v334
        %v6256 = vadd.f32 %v6252, %v335
        %v6257 = vmax.f32 %v6253, 0.0
        %v6258 = vmax.f32 %v6254, 0.0
        %v6259 = vmax.f32 %v6255, 0.0
        %v6260 = vmax.f32 %v6256, 0.0
        %6261 = vst [vmem:[%s294] sm:$0xff] %v6257
        %6262 = vst [vmem:[%s294 + $0x8] sm:$0xff] %v6258
        %6263 = vst [vmem:[%s294 + $0x10] sm:$0xff] %v6259
        %6264 = vst [vmem:[%s294 + $0x18] sm:$0xff] %v6260
        %s6265 = sand.u32 %s142, 1
        %s6266 = scalar_lea.sflag [#allocation6], %s6265
        %s6267 = sand.u32 %s142, 1
        %s6268 = smul.addr %s6267, 32
        %s6269 = scalar_lea.vmem [#allocation13], %s6268
        // Predicated region
        $region61: #{tpu_custom_call.1} parent=39 // pred_check
          %p6270 = pneg %p152
        $region62: #{tpu_custom_call.1} parent=39 // pred_check_branch
          %6272 = sbr.rel (%p6270) target = $region64
        $region63: #{tpu_custom_call.1} parent=39 // pred_region
          %s6274 = ssub.s32 512, 512
          %6275 = vsyncadd %s6266, %s6274
          %s6276 = smul.addr %s24, 4
          %s6277 = smul.addr %s6276, 128
          %s6278 = scalar_lea.hbm %s5, %s6277
          %s6280 = sshll.u32 %s6269, 4
          %s6281 = int_to_ptr.vmem [resolvable:$true] %s6280
          %6283 = dma.vmem_to_hbm [thread:$0]  %s6281, 512, %s6278, %s6266
        $region64: #{tpu_custom_call.1} parent=39 // pred_fallthru
          _
      $region40: #{tpu_custom_call.1} parent=5 // pred_fallthru
        _
      %p6284 = scmp.le.s32.totalorder 2, %s19
      // Predicated region
      $region65: #{tpu_custom_call.1} parent=5 // pred_check
        %p6285 = pneg %p6284
      $region66: #{tpu_custom_call.1} parent=5 // pred_check_branch
        %6287 = sbr.rel (%p6285) target = $region68
      $region67: #{tpu_custom_call.1} parent=5 // pred_region
        %s6288 = ssub.s32 %s19, 2
        // Predicated region
        $region69: #{tpu_custom_call.1} parent=67 // pred_check
          %p6289 = pneg %p158
        $region70: #{tpu_custom_call.1} parent=67 // pred_check_branch
          %6291 = sbr.rel (%p6289) target = $region72
        $region71: #{tpu_custom_call.1} parent=67 // pred_region
          %s6292 = sand.u32 %s143, 1
          %s6293 = scalar_lea.sflag [#allocation6], %s6292
          %s6294 = sand.u32 %s143, 1
          %s6295 = smul.addr %s6294, 32
          %s6296 = scalar_lea.vmem [#allocation13], %s6295
          %6297 = dma.done %s6293, 512
        $region72: #{tpu_custom_call.1} parent=67 // pred_fallthru
          _
      $region68: #{tpu_custom_call.1} parent=5 // pred_fallthru
        _
    $region6: #{tpu_custom_call.1} parent=1 // loop_footer
      %s23 = sadd.s32 1, %s19
    $region7: #{tpu_custom_call.1} parent=1 // loop_footer_branch
      %18 = sbr.rel target = $region3
    $region8: #{tpu_custom_call.1} parent=1 // loop_exit
      _
    %6298 = vsyncpa [#allocation5], 1
    %s6299 = scalar_lea.sflag [#allocation5], 1
    %6300 = vsyncpa %s6299, 1
    %6301 = vsyncpa [#allocation8], 1
    %6302 = vsyncpa [#allocation11], 1
    %6303 = vsyncpa [#allocation6], 1
    %s6304 = scalar_lea.sflag [#allocation6], 1
    %6305 = vsyncpa %s6304, 1

</llo_original>
